<compile_context>
chip_gen: v5e
topology: v5e:2x2
jax: 0.10.0
libtpu: 0.0.40
codegen_flags: <defaults>
</compile_context>

<pallas_src>
import math
import functools

import jax
import jax.numpy as jnp
from jax.experimental import pallas as pl
from jax.experimental.pallas import tpu as pltpu


# TODO(synk): `squash` is not defined in the provided PyTorch snippet; the
# canonical capsule-network squash with eps=1e-8 is assumed here.
def _support_routing_kernel(x_ref, caps_ref, mask_ref,
                            w1x_ref, w1c_ref, b1_ref, w2_ref,
                            e_ref, et_ref, g_ref, gt_ref,
                            out_c_ref, out_vb_ref,
                            *, C, D, R, Bt, n_iter):
    f32 = jnp.float32
    CD = C * D
    N = Bt * R
    exact = jax.lax.Precision.HIGHEST  # constant 0/1 matmuls must be exact

    # ---- fused MLP projection: u[n, c*D + d] = dense_out(concat(x_n, cap_c))_d
    px = jnp.dot(x_ref[...], w1x_ref[...], preferred_element_type=f32)     # (N, CD)
    pc = jnp.dot(caps_ref[...], w1c_ref[...], preferred_element_type=f32)  # (N, CD)
    h = jnp.maximum(px + pc + b1_ref[...], 0.0)                            # (N, CD)
    u = jnp.dot(h, w2_ref[...], preferred_element_type=f32)                # (N, CD)

    E = e_ref[...]    # (C, CD)  capsule      -> capsule*D lane-block expansion
    Et = et_ref[...]  # (CD, C)  capsule*D    -> capsule   lane-block reduction
    G = g_ref[...]    # (N, Bt)  batch        -> rows      group broadcast
    Gt = gt_ref[...]  # (Bt, N)  rows         -> batch     group reduction

    # hoisted mask broadcast, reused by every routing iteration
    fm = jnp.broadcast_to(mask_ref[...], (N, C))                           # (N, C)

    b_log = jnp.zeros((N, C), dtype=f32)
    v = jnp.zeros((N, C), dtype=f32)
    c_vec = jnp.zeros((Bt, CD), dtype=f32)
    for _ in range(n_iter):
        # masked softmax over the capsule axis, vectorised over all (b, r) rows
        ex = jnp.exp(b_log - jnp.max(b_log, axis=1, keepdims=True))
        v = (ex / jnp.sum(ex, axis=1, keepdims=True)) * fm                 # (N, C)

        # c_hat[b, c*D+d] = sum_r u[b*R+r, c*D+d] * v[b*R+r, c]
        vexp = jnp.dot(v, E, precision=exact,
                       preferred_element_type=f32)                         # (N, CD)
        c_hat = jnp.dot(Gt, u * vexp, precision=exact,
                        preferred_element_type=f32)                        # (Bt, CD)

        # squash per capsule block (rsqrt on the EUP; segment sums via MXU)
        nsq = jnp.dot(c_hat * c_hat, Et, precision=exact,
                      preferred_element_type=f32)                          # (Bt, C)
        scale = nsq * jax.lax.rsqrt(nsq + 1e-8) / (1.0 + nsq)              # (Bt, C)
        c_vec = c_hat * jnp.dot(scale, E, precision=exact,
                                preferred_element_type=f32)                # (Bt, CD)

        # b[n, c] += sum_d c_vec[batch(n), c*D+d] * u[n, c*D+d]
        c_rows = jnp.dot(G, c_vec, precision=exact,
                         preferred_element_type=f32)                       # (N, CD)
        b_log = b_log + jnp.dot(u * c_rows, Et, precision=exact,
                                preferred_element_type=f32)                # (N, C)

    out_c_ref[...] = c_vec               # single lane-dense (Bt, C*D) store
    out_vb_ref[:, 0:C] = v               # packed (v | b) output, split in wrapper
    out_vb_ref[:, C:2 * C] = b_log


def support_routing(inputs, caps, w1, b1, w2, mask=None, *, n_iter=2,
                    block_b=None):
    """inputs: (B, R, in); caps: (B, C, in); w1: (D, 2*in); b1: (D,); w2: (D, D)."""
    B, R, in_dim = inputs.shape
    C = caps.shape[1]
    D = w1.shape[0]
    assert w1.shape == (D, 2 * in_dim) and w2.shape == (D, D) and b1.shape == (D,)
    CD = C * D
    f32 = jnp.float32

    if mask is None:
        mask = jnp.ones((B, R), dtype=f32)

    # batch tile: Bt == B, or a multiple of 8 dividing B (output sublane rule)
    if block_b is None:
        block_b = min(B, 32) if (B % 8 == 0 and B > 8) else B
    if B % block_b != 0 or (block_b != B and block_b % 8 != 0):
        block_b = B
    grid_b = B // block_b
    Nt = block_b * R

    # --- wrapper-side (XLA) layout plumbing: flatten rows, pack weights so the
    #     capsule axis lives on the lane axis inside the kernel.
    x2 = inputs.astype(f32).reshape(B * R, in_dim)                       # (B*R, in)
    caps_flat = caps.astype(f32).reshape(B, C * in_dim)                  # (B, C*in)
    caps_rep = jnp.repeat(caps_flat, R, axis=0)                          # (B*R, C*in)
    mask_col = mask.astype(f32).reshape(B * R, 1)                        # (B*R, 1)

    w1 = w1.astype(f32); w2 = w2.astype(f32); b1 = b1.astype(f32)
    w1x = w1[:, :in_dim].T                                               # (in, D)
    w1c = w1[:, in_dim:].T                                               # (in, D)
    eye_c = jnp.eye(C, dtype=f32)
    w1x_rep = jnp.tile(w1x, (1, C))                                      # (in, C*D)
    w1c_big = jnp.kron(eye_c, w1c)                                       # (C*in, C*D)
    b1_rep = jnp.tile(b1.reshape(1, D), (1, C))                          # (1, C*D)
    w2_big = jnp.kron(eye_c, w2.T)                                       # (C*D, C*D)
    e_mat = jnp.repeat(eye_c, D, axis=1)                                 # (C, C*D)
    et_mat = e_mat.T                                                     # (C*D, C)
    g_mat = jnp.kron(jnp.eye(block_b, dtype=f32), jnp.ones((R, 1), f32)) # (Nt, Bt)
    gt_mat = g_mat.T                                                     # (Bt, Nt)

    kernel = functools.partial(_support_routing_kernel, C=C, D=D, R=R,
                               Bt=block_b, n_iter=n_iter)
    out_shapes = (
        jax.ShapeDtypeStruct((B, CD), f32),          # lane-dense out_c slab
        jax.ShapeDtypeStruct((B * R, 2 * C), f32),   # packed (v | b)
    )
    out_c_flat, vb = pl.pallas_call(
        kernel,
        out_shape=out_shapes,
        grid=(grid_b,),
        in_specs=[
            pl.BlockSpec((Nt, in_dim), lambda i: (i, 0)),
            pl.BlockSpec((Nt, C * in_dim), lambda i: (i, 0)),
            pl.BlockSpec((Nt, 1), lambda i: (i, 0)),
            pl.BlockSpec((in_dim, CD), lambda i: (0, 0)),
            pl.BlockSpec((C * in_dim, CD), lambda i: (0, 0)),
            pl.BlockSpec((1, CD), lambda i: (0, 0)),
            pl.BlockSpec((CD, CD), lambda i: (0, 0)),
            pl.BlockSpec((C, CD), lambda i: (0, 0)),
            pl.BlockSpec((CD, C), lambda i: (0, 0)),
            pl.BlockSpec((Nt, block_b), lambda i: (0, 0)),
            pl.BlockSpec((block_b, Nt), lambda i: (0, 0)),
        ],
        out_specs=(
            pl.BlockSpec((block_b, CD), lambda i: (i, 0)),
            pl.BlockSpec((Nt, 2 * C), lambda i: (i, 0)),
        ),
        compiler_params=pltpu.CompilerParams(
            dimension_semantics=("parallel",)),
    )(x2, caps_rep, mask_col, w1x_rep, w1c_big, b1_rep, w2_big,
      e_mat, et_mat, g_mat, gt_mat)

    out_c = out_c_flat.reshape(B, C, D)
    out_v = vb[:, :C].reshape(B, R, C)
    out_b = vb[:, C:].reshape(B, R, C)
    return out_c, out_v, out_b


def _reference(x, caps, w1, b1, w2, mask, n_iter):
    """Pure-JAX transcription of the PyTorch forward."""
    B, R, in_dim = x.shape
    C = caps.shape[1]
    xi = x[None, :, :, None, :]                                   # (1,B,R,1,in)
    cp = jnp.swapaxes(caps[None, :, :, None, :], 0, 2)            # (C,B,1,1,in)
    shape = (C, B, R, 1, in_dim)
    xi = jnp.broadcast_to(xi, shape)
    cp = jnp.broadcast_to(cp, shape)
    u = jnp.concatenate([xi, cp], axis=-1)                        # (C,B,R,1,2in)
    u = jnp.maximum(u @ w1.T + b1, 0.0) @ w2.T                    # (C,B,R,1,D)
    fm = mask[None, :, :, None, None]
    b = jnp.zeros((C, B, R, 1, 1), dtype=jnp.float32)
    for _ in range(n_iter):
        v = jax.nn.softmax(b, axis=0) * fm
        c_hat = jnp.sum(u * v, axis=2, keepdims=True)
        nsq = jnp.sum(c_hat ** 2, axis=-1, keepdims=True)
        c = c_hat * nsq / (1.0 + nsq) / jnp.sqrt(nsq + 1e-8)
        b = b + jnp.sum(c * u, axis=-1, keepdims=True)
    out_c = jnp.transpose(c[:, :, 0, 0, :], (1, 0, 2))
    out_v = jnp.transpose(v[:, :, :, 0, 0], (1, 2, 0))
    out_b = jnp.transpose(b[:, :, :, 0, 0], (1, 2, 0))
    return out_c, out_v, out_b


if __name__ == "__main__":
    B, R, input_dim, hidden_dim, C, n_iter = 2, 8, 32, 32, 4, 2

    key = jax.random.PRNGKey(0)
    kx, kc, kw1, kb1, kw2, km = jax.random.split(key, 6)
    x = jax.random.normal(kx, (B, R, input_dim), dtype=jnp.float32)
    caps = jax.random.normal(kc, (B, C, input_dim), dtype=jnp.float32)
    bound1 = math.sqrt(6.0 / (2 * input_dim + hidden_dim))
    w1 = jax.random.uniform(kw1, (hidden_dim, 2 * input_dim),
                            minval=-bound1, maxval=bound1, dtype=jnp.float32)
    b1 = jax.random.uniform(kb1, (hidden_dim,), minval=-0.1, maxval=0.1,
                            dtype=jnp.float32)
    bound2 = math.sqrt(6.0 / (2 * hidden_dim))
    w2 = jax.random.uniform(kw2, (hidden_dim, hidden_dim),
                            minval=-bound2, maxval=bound2, dtype=jnp.float32)
    mask = (jax.random.uniform(km, (B, R)) > 0.2).astype(jnp.float32)

    out_c, out_v, out_b = support_routing(x, caps, w1, b1, w2, mask,
                                          n_iter=n_iter)
    jax.block_until_ready((out_c, out_v, out_b))

    assert out_c.shape == (B, C, hidden_dim)
    assert out_v.shape == (B, R, C)
    assert out_b.shape == (B, R, C)

    ref_c, ref_v, ref_b = _reference(x, caps, w1, b1, w2, mask, n_iter)
    assert jnp.allclose(out_c, ref_c, atol=2e-4, rtol=2e-4), \
        float(jnp.max(jnp.abs(out_c - ref_c)))
    assert jnp.allclose(out_v, ref_v, atol=2e-4, rtol=2e-4), \
        float(jnp.max(jnp.abs(out_v - ref_v)))
    assert jnp.allclose(out_b, ref_b, atol=2e-4, rtol=2e-4), \
        float(jnp.max(jnp.abs(out_b - ref_b)))

    print("KERNEL_OK")
</pallas_src>

<mosaic_0001>
module attributes {stable_mosaic.version = 11 : i64} {
  func.func @_support_routing_kernel(%arg0: i32, %arg1: memref<16x32xf32, #tpu.memory_space<vmem>>, %arg2: memref<16x128xf32, #tpu.memory_space<vmem>>, %arg3: memref<16x1xf32, #tpu.memory_space<vmem>>, %arg4: memref<32x128xf32, #tpu.memory_space<vmem>>, %arg5: memref<128x128xf32, #tpu.memory_space<vmem>>, %arg6: memref<1x128xf32, #tpu.memory_space<vmem>>, %arg7: memref<128x128xf32, #tpu.memory_space<vmem>>, %arg8: memref<4x128xf32, #tpu.memory_space<vmem>>, %arg9: memref<128x4xf32, #tpu.memory_space<vmem>>, %arg10: memref<16x2xf32, #tpu.memory_space<vmem>>, %arg11: memref<2x16xf32, #tpu.memory_space<vmem>>, %arg12: memref<2x128xf32, #tpu.memory_space<vmem>>, %arg13: memref<16x8xf32, #tpu.memory_space<vmem>>) attributes {dimension_semantics = [#tpu.dimension_semantics<parallel>], iteration_bounds = array<i64: 1>, scalar_prefetch = 0 : i64, scratch_operands = 0 : i64, tpu.core_type = #tpu.core_type<tc>, window_params = [{transform_indices = @transform_0, window_bounds = array<i64: 16, 32>}, {transform_indices = @transform_1, window_bounds = array<i64: 16, 128>}, {transform_indices = @transform_2, window_bounds = array<i64: 16, 1>}, {pipeline_mode = #tpu.pipeline_mode<synchronous>, transform_indices = @transform_3, window_bounds = array<i64: 32, 128>}, {pipeline_mode = #tpu.pipeline_mode<synchronous>, transform_indices = @transform_4, window_bounds = array<i64: 128, 128>}, {pipeline_mode = #tpu.pipeline_mode<synchronous>, transform_indices = @transform_5, window_bounds = array<i64: 1, 128>}, {pipeline_mode = #tpu.pipeline_mode<synchronous>, transform_indices = @transform_6, window_bounds = array<i64: 128, 128>}, {pipeline_mode = #tpu.pipeline_mode<synchronous>, transform_indices = @transform_7, window_bounds = array<i64: 4, 128>}, {pipeline_mode = #tpu.pipeline_mode<synchronous>, transform_indices = @transform_8, window_bounds = array<i64: 128, 4>}, {pipeline_mode = #tpu.pipeline_mode<synchronous>, transform_indices = @transform_9, window_bounds = array<i64: 16, 2>}, {pipeline_mode = #tpu.pipeline_mode<synchronous>, transform_indices = @transform_10, window_bounds = array<i64: 2, 16>}, {transform_indices = @transform_11, window_bounds = array<i64: 2, 128>}, {transform_indices = @transform_12, window_bounds = array<i64: 16, 8>}]} {
    %c0 = arith.constant 0 : index
    %c0_0 = arith.constant 0 : index
    %0 = vector.load %arg1[%c0, %c0_0] : memref<16x32xf32, #tpu.memory_space<vmem>>, vector<16x32xf32>
    %c0_1 = arith.constant 0 : index
    %c0_2 = arith.constant 0 : index
    %1 = vector.load %arg4[%c0_1, %c0_2] : memref<32x128xf32, #tpu.memory_space<vmem>>, vector<32x128xf32>
    %cst = arith.constant dense<0.000000e+00> : vector<16x128xf32>
    %2 = tpu.matmul %0, %1, %cst {dimension_numbers = #tpu.dot_dimension_numbers<[1], [0], [0], [1], [0, 0, 1, 1], [], []>} : vector<16x32xf32>, vector<32x128xf32>, vector<16x128xf32> -> vector<16x128xf32>
    %c0_3 = arith.constant 0 : index
    %c0_4 = arith.constant 0 : index
    %3 = vector.load %arg2[%c0_3, %c0_4] : memref<16x128xf32, #tpu.memory_space<vmem>>, vector<16x128xf32>
    %c0_5 = arith.constant 0 : index
    %c0_6 = arith.constant 0 : index
    %4 = vector.load %arg5[%c0_5, %c0_6] : memref<128x128xf32, #tpu.memory_space<vmem>>, vector<128x128xf32>
    %cst_7 = arith.constant dense<0.000000e+00> : vector<16x128xf32>
    %5 = tpu.matmul %3, %4, %cst_7 {dimension_numbers = #tpu.dot_dimension_numbers<[1], [0], [0], [1], [0, 0, 1, 1], [], []>} : vector<16x128xf32>, vector<128x128xf32>, vector<16x128xf32> -> vector<16x128xf32>
    %6 = arith.addf %2, %5 : vector<16x128xf32>
    %c0_8 = arith.constant 0 : index
    %c0_9 = arith.constant 0 : index
    %7 = vector.load %arg6[%c0_8, %c0_9] : memref<1x128xf32, #tpu.memory_space<vmem>>, vector<1x128xf32>
    %8 = vector.broadcast %7 : vector<1x128xf32> to vector<16x128xf32>
    %9 = arith.addf %6, %8 : vector<16x128xf32>
    %cst_10 = arith.constant 0.000000e+00 : f32
    %10 = vector.broadcast %cst_10 : f32 to vector<16x128xf32>
    %11 = arith.maximumf %9, %10 : vector<16x128xf32>
    %c0_11 = arith.constant 0 : index
    %c0_12 = arith.constant 0 : index
    %12 = vector.load %arg7[%c0_11, %c0_12] : memref<128x128xf32, #tpu.memory_space<vmem>>, vector<128x128xf32>
    %cst_13 = arith.constant dense<0.000000e+00> : vector<16x128xf32>
    %13 = tpu.matmul %11, %12, %cst_13 {dimension_numbers = #tpu.dot_dimension_numbers<[1], [0], [0], [1], [0, 0, 1, 1], [], []>} : vector<16x128xf32>, vector<128x128xf32>, vector<16x128xf32> -> vector<16x128xf32>
    %c0_14 = arith.constant 0 : index
    %c0_15 = arith.constant 0 : index
    %14 = vector.load %arg8[%c0_14, %c0_15] : memref<4x128xf32, #tpu.memory_space<vmem>>, vector<4x128xf32>
    %c0_16 = arith.constant 0 : index
    %c0_17 = arith.constant 0 : index
    %15 = vector.load %arg9[%c0_16, %c0_17] : memref<128x4xf32, #tpu.memory_space<vmem>>, vector<128x4xf32>
    %c0_18 = arith.constant 0 : index
    %c0_19 = arith.constant 0 : index
    %16 = vector.load %arg10[%c0_18, %c0_19] : memref<16x2xf32, #tpu.memory_space<vmem>>, vector<16x2xf32>
    %c0_20 = arith.constant 0 : index
    %c0_21 = arith.constant 0 : index
    %17 = vector.load %arg11[%c0_20, %c0_21] : memref<2x16xf32, #tpu.memory_space<vmem>>, vector<2x16xf32>
    %c0_22 = arith.constant 0 : index
    %c0_23 = arith.constant 0 : index
    %18 = vector.load %arg3[%c0_22, %c0_23] : memref<16x1xf32, #tpu.memory_space<vmem>>, vector<16x1xf32>
    %19 = vector.shape_cast %18 : vector<16x1xf32> to vector<16x1xf32>
    %20 = vector.broadcast %19 : vector<16x1xf32> to vector<16x4xf32>
    %cst_24 = arith.constant 0.000000e+00 : f32
    %21 = vector.broadcast %cst_24 : f32 to vector<16x4xf32>
    %cst_25 = arith.constant dense<0xFF800000> : vector<16xf32>
    %22 = vector.multi_reduction <maximumf>, %21, %cst_25 [1] : vector<16x4xf32> to vector<16xf32>
    %23 = vector.shape_cast %22 : vector<16xf32> to vector<16x1xf32>
    %24 = vector.broadcast %23 : vector<16x1xf32> to vector<16x4xf32>
    %25 = arith.subf %21, %24 : vector<16x4xf32>
    %26 = math.exp %25 : vector<16x4xf32>
    %cst_26 = arith.constant dense<0.000000e+00> : vector<16xf32>
    %27 = vector.multi_reduction <add>, %26, %cst_26 [1] : vector<16x4xf32> to vector<16xf32>
    %28 = vector.shape_cast %27 : vector<16xf32> to vector<16x1xf32>
    %29 = vector.broadcast %28 : vector<16x1xf32> to vector<16x4xf32>
    %30 = arith.divf %26, %29 : vector<16x4xf32>
    %31 = arith.mulf %30, %20 : vector<16x4xf32>
    %cst_27 = arith.constant dense<0.000000e+00> : vector<16x128xf32>
    %32 = tpu.matmul %31, %14, %cst_27 {dimension_numbers = #tpu.dot_dimension_numbers<[1], [0], [0], [1], [0, 0, 1, 1], [], []>, precision = #tpu.contract_precision<fp32>} : vector<16x4xf32>, vector<4x128xf32>, vector<16x128xf32> -> vector<16x128xf32>
    %33 = arith.mulf %13, %32 : vector<16x128xf32>
    %cst_28 = arith.constant dense<0.000000e+00> : vector<2x128xf32>
    %34 = tpu.matmul %17, %33, %cst_28 {dimension_numbers = #tpu.dot_dimension_numbers<[1], [0], [0], [1], [0, 0, 1, 1], [], []>, precision = #tpu.contract_precision<fp32>} : vector<2x16xf32>, vector<16x128xf32>, vector<2x128xf32> -> vector<2x128xf32>
    %35 = arith.mulf %34, %34 : vector<2x128xf32>
    %cst_29 = arith.constant dense<0.000000e+00> : vector<2x4xf32>
    %36 = tpu.matmul %35, %15, %cst_29 {dimension_numbers = #tpu.dot_dimension_numbers<[1], [0], [0], [1], [0, 0, 1, 1], [], []>, precision = #tpu.contract_precision<fp32>} : vector<2x128xf32>, vector<128x4xf32>, vector<2x4xf32> -> vector<2x4xf32>
    %cst_30 = arith.constant 9.99999993E-9 : f32
    %37 = vector.broadcast %cst_30 : f32 to vector<2x4xf32>
    %38 = arith.addf %36, %37 : vector<2x4xf32>
    %39 = math.rsqrt %38 : vector<2x4xf32>
    %40 = arith.mulf %36, %39 : vector<2x4xf32>
    %cst_31 = arith.constant 1.000000e+00 : f32
    %41 = vector.broadcast %cst_31 : f32 to vector<2x4xf32>
    %42 = arith.addf %41, %36 : vector<2x4xf32>
    %43 = arith.divf %40, %42 : vector<2x4xf32>
    %cst_32 = arith.constant dense<0.000000e+00> : vector<2x128xf32>
    %44 = tpu.matmul %43, %14, %cst_32 {dimension_numbers = #tpu.dot_dimension_numbers<[1], [0], [0], [1], [0, 0, 1, 1], [], []>, precision = #tpu.contract_precision<fp32>} : vector<2x4xf32>, vector<4x128xf32>, vector<2x128xf32> -> vector<2x128xf32>
    %45 = arith.mulf %34, %44 : vector<2x128xf32>
    %cst_33 = arith.constant dense<0.000000e+00> : vector<16x128xf32>
    %46 = tpu.matmul %16, %45, %cst_33 {dimension_numbers = #tpu.dot_dimension_numbers<[1], [0], [0], [1], [0, 0, 1, 1], [], []>, precision = #tpu.contract_precision<fp32>} : vector<16x2xf32>, vector<2x128xf32>, vector<16x128xf32> -> vector<16x128xf32>
    %47 = arith.mulf %13, %46 : vector<16x128xf32>
    %cst_34 = arith.constant dense<0.000000e+00> : vector<16x4xf32>
    %48 = tpu.matmul %47, %15, %cst_34 {dimension_numbers = #tpu.dot_dimension_numbers<[1], [0], [0], [1], [0, 0, 1, 1], [], []>, precision = #tpu.contract_precision<fp32>} : vector<16x128xf32>, vector<128x4xf32>, vector<16x4xf32> -> vector<16x4xf32>
    %49 = arith.addf %21, %48 : vector<16x4xf32>
    %cst_35 = arith.constant dense<0xFF800000> : vector<16xf32>
    %50 = vector.multi_reduction <maximumf>, %49, %cst_35 [1] : vector<16x4xf32> to vector<16xf32>
    %51 = vector.shape_cast %50 : vector<16xf32> to vector<16x1xf32>
    %52 = vector.broadcast %51 : vector<16x1xf32> to vector<16x4xf32>
    %53 = arith.subf %49, %52 : vector<16x4xf32>
    %54 = math.exp %53 : vector<16x4xf32>
    %cst_36 = arith.constant dense<0.000000e+00> : vector<16xf32>
    %55 = vector.multi_reduction <add>, %54, %cst_36 [1] : vector<16x4xf32> to vector<16xf32>
    %56 = vector.shape_cast %55 : vector<16xf32> to vector<16x1xf32>
    %57 = vector.broadcast %56 : vector<16x1xf32> to vector<16x4xf32>
    %58 = arith.divf %54, %57 : vector<16x4xf32>
    %59 = arith.mulf %58, %20 : vector<16x4xf32>
    %cst_37 = arith.constant dense<0.000000e+00> : vector<16x128xf32>
    %60 = tpu.matmul %59, %14, %cst_37 {dimension_numbers = #tpu.dot_dimension_numbers<[1], [0], [0], [1], [0, 0, 1, 1], [], []>, precision = #tpu.contract_precision<fp32>} : vector<16x4xf32>, vector<4x128xf32>, vector<16x128xf32> -> vector<16x128xf32>
    %61 = arith.mulf %13, %60 : vector<16x128xf32>
    %cst_38 = arith.constant dense<0.000000e+00> : vector<2x128xf32>
    %62 = tpu.matmul %17, %61, %cst_38 {dimension_numbers = #tpu.dot_dimension_numbers<[1], [0], [0], [1], [0, 0, 1, 1], [], []>, precision = #tpu.contract_precision<fp32>} : vector<2x16xf32>, vector<16x128xf32>, vector<2x128xf32> -> vector<2x128xf32>
    %63 = arith.mulf %62, %62 : vector<2x128xf32>
    %cst_39 = arith.constant dense<0.000000e+00> : vector<2x4xf32>
    %64 = tpu.matmul %63, %15, %cst_39 {dimension_numbers = #tpu.dot_dimension_numbers<[1], [0], [0], [1], [0, 0, 1, 1], [], []>, precision = #tpu.contract_precision<fp32>} : vector<2x128xf32>, vector<128x4xf32>, vector<2x4xf32> -> vector<2x4xf32>
    %cst_40 = arith.constant 9.99999993E-9 : f32
    %65 = vector.broadcast %cst_40 : f32 to vector<2x4xf32>
    %66 = arith.addf %64, %65 : vector<2x4xf32>
    %67 = math.rsqrt %66 : vector<2x4xf32>
    %68 = arith.mulf %64, %67 : vector<2x4xf32>
    %cst_41 = arith.constant 1.000000e+00 : f32
    %69 = vector.broadcast %cst_41 : f32 to vector<2x4xf32>
    %70 = arith.addf %69, %64 : vector<2x4xf32>
    %71 = arith.divf %68, %70 : vector<2x4xf32>
    %cst_42 = arith.constant dense<0.000000e+00> : vector<2x128xf32>
    %72 = tpu.matmul %71, %14, %cst_42 {dimension_numbers = #tpu.dot_dimension_numbers<[1], [0], [0], [1], [0, 0, 1, 1], [], []>, precision = #tpu.contract_precision<fp32>} : vector<2x4xf32>, vector<4x128xf32>, vector<2x128xf32> -> vector<2x128xf32>
    %73 = arith.mulf %62, %72 : vector<2x128xf32>
    %cst_43 = arith.constant dense<0.000000e+00> : vector<16x128xf32>
    %74 = tpu.matmul %16, %73, %cst_43 {dimension_numbers = #tpu.dot_dimension_numbers<[1], [0], [0], [1], [0, 0, 1, 1], [], []>, precision = #tpu.contract_precision<fp32>} : vector<16x2xf32>, vector<2x128xf32>, vector<16x128xf32> -> vector<16x128xf32>
    %75 = arith.mulf %13, %74 : vector<16x128xf32>
    %cst_44 = arith.constant dense<0.000000e+00> : vector<16x4xf32>
    %76 = tpu.matmul %75, %15, %cst_44 {dimension_numbers = #tpu.dot_dimension_numbers<[1], [0], [0], [1], [0, 0, 1, 1], [], []>, precision = #tpu.contract_precision<fp32>} : vector<16x128xf32>, vector<128x4xf32>, vector<16x4xf32> -> vector<16x4xf32>
    %77 = arith.addf %49, %76 : vector<16x4xf32>
    %c0_45 = arith.constant 0 : index
    %c0_46 = arith.constant 0 : index
    %78 = vector.load %arg12[%c0_45, %c0_46] : memref<2x128xf32, #tpu.memory_space<vmem>>, vector<2x128xf32>
    tpu.vector_store %arg12[%c0_45, %c0_46], %73 {strides = array<i32>} : memref<2x128xf32, #tpu.memory_space<vmem>>, vector<2x128xf32>,
    %c0_47 = arith.constant 0 : index
    %c0_48 = arith.constant 0 : index
    %79 = vector.load %arg13[%c0_47, %c0_48] : memref<16x8xf32, #tpu.memory_space<vmem>>, vector<16x4xf32>
    tpu.vector_store %arg13[%c0_47, %c0_48], %59 {strides = array<i32>} : memref<16x8xf32, #tpu.memory_space<vmem>>, vector<16x4xf32>,
    %c0_49 = arith.constant 0 : index
    %c4 = arith.constant 4 : index
    %80 = vector.load %arg13[%c0_49, %c4] : memref<16x8xf32, #tpu.memory_space<vmem>>, vector<16x4xf32>
    tpu.vector_store %arg13[%c0_49, %c4], %77 {strides = array<i32>} : memref<16x8xf32, #tpu.memory_space<vmem>>, vector<16x4xf32>,
    return
  }
  func.func @transform_0(%arg0: i32) -> (i32, i32) {
    %c0_i32 = arith.constant 0 : i32
    %c0_i32_0 = arith.constant 0 : i32
    return %arg0, %c0_i32 : i32, i32
  }
  func.func @transform_1(%arg0: i32) -> (i32, i32) {
    %c0_i32 = arith.constant 0 : i32
    %c0_i32_0 = arith.constant 0 : i32
    return %arg0, %c0_i32 : i32, i32
  }
  func.func @transform_2(%arg0: i32) -> (i32, i32) {
    %c0_i32 = arith.constant 0 : i32
    %c0_i32_0 = arith.constant 0 : i32
    return %arg0, %c0_i32 : i32, i32
  }
  func.func @transform_3(%arg0: i32) -> (i32, i32) {
    %c0_i32 = arith.constant 0 : i32
    %c0_i32_0 = arith.constant 0 : i32
    %c0_i32_1 = arith.constant 0 : i32
    return %c0_i32, %c0_i32_0 : i32, i32
  }
  func.func @transform_4(%arg0: i32) -> (i32, i32) {
    %c0_i32 = arith.constant 0 : i32
    %c0_i32_0 = arith.constant 0 : i32
    %c0_i32_1 = arith.constant 0 : i32
    return %c0_i32, %c0_i32_0 : i32, i32
  }
  func.func @transform_5(%arg0: i32) -> (i32, i32) {
    %c0_i32 = arith.constant 0 : i32
    %c0_i32_0 = arith.constant 0 : i32
    %c0_i32_1 = arith.constant 0 : i32
    return %c0_i32, %c0_i32_0 : i32, i32
  }
  func.func @transform_6(%arg0: i32) -> (i32, i32) {
    %c0_i32 = arith.constant 0 : i32
    %c0_i32_0 = arith.constant 0 : i32
    %c0_i32_1 = arith.constant 0 : i32
    return %c0_i32, %c0_i32_0 : i32, i32
  }
  func.func @transform_7(%arg0: i32) -> (i32, i32) {
    %c0_i32 = arith.constant 0 : i32
    %c0_i32_0 = arith.constant 0 : i32
    %c0_i32_1 = arith.constant 0 : i32
    return %c0_i32, %c0_i32_0 : i32, i32
  }
  func.func @transform_8(%arg0: i32) -> (i32, i32) {
    %c0_i32 = arith.constant 0 : i32
    %c0_i32_0 = arith.constant 0 : i32
    %c0_i32_1 = arith.constant 0 : i32
    return %c0_i32, %c0_i32_0 : i32, i32
  }
  func.func @transform_9(%arg0: i32) -> (i32, i32) {
    %c0_i32 = arith.constant 0 : i32
    %c0_i32_0 = arith.constant 0 : i32
    %c0_i32_1 = arith.constant 0 : i32
    return %c0_i32, %c0_i32_0 : i32, i32
  }
  func.func @transform_10(%arg0: i32) -> (i32, i32) {
    %c0_i32 = arith.constant 0 : i32
    %c0_i32_0 = arith.constant 0 : i32
    %c0_i32_1 = arith.constant 0 : i32
    return %c0_i32, %c0_i32_0 : i32, i32
  }
  func.func @transform_11(%arg0: i32) -> (i32, i32) {
    %c0_i32 = arith.constant 0 : i32
    %c0_i32_0 = arith.constant 0 : i32
    return %arg0, %c0_i32 : i32, i32
  }
  func.func @transform_12(%arg0: i32) -> (i32, i32) {
    %c0_i32 = arith.constant 0 : i32
    %c0_i32_0 = arith.constant 0 : i32
    return %arg0, %c0_i32 : i32, i32
  }
}

</mosaic_0001>

<llo_original>
// kernel: tpu_custom_call.1
$region0: #{tpu_custom_call.1}
  #allocation0 [shape = 'u32[]', space=smem, size = 0x4, offset = 0x4, fixed_abs, tag = 'smem constant byte address 0x4 - core index']
  #allocation1 [shape = 'u32[72,128]{1,0:T(1,128)}', space=vmem, size = 0x9000, scoped, tag = 'internal scratch']
  %s0 = inlined_call_operand.vmem [shape: f32[16,32], index: 0, kind: input, shape index: {}]
  %s1 = inlined_call_operand.vmem [shape: f32[16,128], index: 1, kind: input, shape index: {}]
  %s2 = inlined_call_operand.vmem [shape: f32[16,1], index: 2, kind: input, shape index: {}]
  %s3 = inlined_call_operand.hbm [shape: f32[32,128], index: 3, kind: input, shape index: {}]
  %s4 = inlined_call_operand.vmem [shape: f32[128,128], index: 4, kind: input, shape index: {}]
  %s5 = inlined_call_operand.vmem [shape: f32[1,128], index: 5, kind: input, shape index: {}]
  %s6 = inlined_call_operand.hbm [shape: f32[128,128], index: 6, kind: input, shape index: {}]
  %s7 = inlined_call_operand.vmem [shape: f32[4,128], index: 7, kind: input, shape index: {}]
  %s8 = inlined_call_operand.vmem [shape: f32[128,4], index: 8, kind: input, shape index: {}]
  %s9 = inlined_call_operand.vmem [shape: f32[16,2], index: 9, kind: input, shape index: {}]
  %s10 = inlined_call_operand.vmem [shape: f32[2,16], index: 10, kind: input, shape index: {}]
  %s11 = inlined_call_operand.hbm [shape: f32[2,128], index: 11, kind: output, shape index: {0}]
  %s12 = inlined_call_operand.vmem [shape: f32[16,8], index: 12, kind: output, shape index: {1}]
  %13 = xla_tuple %s11, %s12
  %s14 = sld [smem:[#allocation0]]
  $region70: #{tpu_custom_call.1} parent=0
    _
  %s16 = ssub.s32 1, %s14
  %s17 = scalar_select 0, %s16, %s14
  $region1: #{tpu_custom_call.1} parent=0
    #allocation2 [shape = 'u8[16384]{0}', space=vmem, size = 0x4000, scoped, tag = 'input window, operand 3, single buffered']
    #allocation3 [shape = 's32[1]{0}', space=sflag, size = 0x4, scoped, tag = 'scoped memory for tpu_custom_call.1']
    #allocation4 [shape = 's32[1]{0}', space=sflag, size = 0x4, scoped, tag = 'scoped memory for tpu_custom_call.1']
    #allocation5 [shape = 'u8[65536]{0}', space=vmem, size = 0x10000, scoped, tag = 'input window, operand 6, single buffered']
    #allocation6 [shape = 's32[1]{0}', space=sflag, size = 0x4, scoped, tag = 'scoped memory for tpu_custom_call.1']
    #allocation7 [shape = 'u8[1024]{0}', space=vmem, size = 0x400, scoped, tag = 'output window, operand 0, single buffered']
    %18 = vsyncpa [#allocation3], 0
    %19 = vsyncpa [#allocation6], 0
    %20 = vsyncpa [#allocation4], 0
    // Predicated region
    $region2: #{tpu_custom_call.1} parent=1 // pred_check
      _
    $region3: #{tpu_custom_call.1} parent=1 // pred_check_branch
      %22 = sbr.rel (0) target = $region5
    $region4: #{tpu_custom_call.1} parent=1 // pred_region
      _
    $region5: #{tpu_custom_call.1} parent=1 // pred_fallthru
      _
    // Predicated region
    $region6: #{tpu_custom_call.1} parent=1 // pred_check
      _
    $region7: #{tpu_custom_call.1} parent=1 // pred_check_branch
      %24 = sbr.rel (0) target = $region9
    $region8: #{tpu_custom_call.1} parent=1 // pred_region
      _
    $region9: #{tpu_custom_call.1} parent=1 // pred_fallthru
      _
    // Predicated region
    $region10: #{tpu_custom_call.1} parent=1 // pred_check
      _
    $region11: #{tpu_custom_call.1} parent=1 // pred_check_branch
      %26 = sbr.rel (0) target = $region13
    $region12: #{tpu_custom_call.1} parent=1 // pred_region
      _
    $region13: #{tpu_custom_call.1} parent=1 // pred_fallthru
      _
    // Predicated region
    $region14: #{tpu_custom_call.1} parent=1 // pred_check
      _
    $region15: #{tpu_custom_call.1} parent=1 // pred_check_branch
      %28 = sbr.rel (0) target = $region17
    $region16: #{tpu_custom_call.1} parent=1 // pred_region
      %30 = vsyncadd [#allocation3], 0
      %s31 = sshll.u32 %s3, 4
      %s32 = int_to_ptr.hbm [resolvable:$true] %s31
      %s33 = sshll.u32 [#allocation2], 4
      %s34 = int_to_ptr.vmem [resolvable:$true] %s33
      %39 = dma.hbm_to_vmem [thread:$0]  %s32, 512, %s34, [#allocation3], 128, 128, 8
    $region17: #{tpu_custom_call.1} parent=1 // pred_fallthru
      _
    // Predicated region
    $region18: #{tpu_custom_call.1} parent=1 // pred_check
      _
    $region19: #{tpu_custom_call.1} parent=1 // pred_check_branch
      %41 = sbr.rel (0) target = $region21
    $region20: #{tpu_custom_call.1} parent=1 // pred_region
      _
    $region21: #{tpu_custom_call.1} parent=1 // pred_fallthru
      _
    // Predicated region
    $region22: #{tpu_custom_call.1} parent=1 // pred_check
      _
    $region23: #{tpu_custom_call.1} parent=1 // pred_check_branch
      %43 = sbr.rel (0) target = $region25
    $region24: #{tpu_custom_call.1} parent=1 // pred_region
      _
    $region25: #{tpu_custom_call.1} parent=1 // pred_fallthru
      _
    // Predicated region
    $region26: #{tpu_custom_call.1} parent=1 // pred_check
      _
    $region27: #{tpu_custom_call.1} parent=1 // pred_check_branch
      %45 = sbr.rel (0) target = $region29
    $region28: #{tpu_custom_call.1} parent=1 // pred_region
      %47 = vsyncadd [#allocation6], 0
      %s48 = sshll.u32 %s6, 4
      %s49 = int_to_ptr.hbm [resolvable:$true] %s48
      %s50 = sshll.u32 [#allocation5], 4
      %s51 = int_to_ptr.vmem [resolvable:$true] %s50
      %56 = dma.hbm_to_vmem [thread:$0]  %s49, 2048, %s51, [#allocation6], 128, 128, 8
    $region29: #{tpu_custom_call.1} parent=1 // pred_fallthru
      _
    // Predicated region
    $region30: #{tpu_custom_call.1} parent=1 // pred_check
      _
    $region31: #{tpu_custom_call.1} parent=1 // pred_check_branch
      %58 = sbr.rel (0) target = $region33
    $region32: #{tpu_custom_call.1} parent=1 // pred_region
      _
    $region33: #{tpu_custom_call.1} parent=1 // pred_fallthru
      _
    // Predicated region
    $region34: #{tpu_custom_call.1} parent=1 // pred_check
      _
    $region35: #{tpu_custom_call.1} parent=1 // pred_check_branch
      %60 = sbr.rel (0) target = $region37
    $region36: #{tpu_custom_call.1} parent=1 // pred_region
      _
    $region37: #{tpu_custom_call.1} parent=1 // pred_fallthru
      _
    // Predicated region
    $region38: #{tpu_custom_call.1} parent=1 // pred_check
      _
    $region39: #{tpu_custom_call.1} parent=1 // pred_check_branch
      %62 = sbr.rel (0) target = $region41
    $region40: #{tpu_custom_call.1} parent=1 // pred_region
      _
    $region41: #{tpu_custom_call.1} parent=1 // pred_fallthru
      _
    // Predicated region
    $region42: #{tpu_custom_call.1} parent=1 // pred_check
      _
    $region43: #{tpu_custom_call.1} parent=1 // pred_check_branch
      %64 = sbr.rel (0) target = $region45
    $region44: #{tpu_custom_call.1} parent=1 // pred_region
      _
    $region45: #{tpu_custom_call.1} parent=1 // pred_fallthru
      _
    // Predicated region
    $region46: #{tpu_custom_call.1} parent=1 // pred_check
      _
    $region47: #{tpu_custom_call.1} parent=1 // pred_check_branch
      %66 = sbr.rel (0) target = $region49
    $region48: #{tpu_custom_call.1} parent=1 // pred_region
      %68 = dma.done [#allocation3], 512
    $region49: #{tpu_custom_call.1} parent=1 // pred_fallthru
      _
    // Predicated region
    $region50: #{tpu_custom_call.1} parent=1 // pred_check
      _
    $region51: #{tpu_custom_call.1} parent=1 // pred_check_branch
      %70 = sbr.rel (0) target = $region53
    $region52: #{tpu_custom_call.1} parent=1 // pred_region
      %72 = dma.done [#allocation6], 2048
    $region53: #{tpu_custom_call.1} parent=1 // pred_fallthru
      _
    %v73 = vld [vmem:[%s0] sm:$0xff]
    %v74 = vld [vmem:[%s0 + $0x8] sm:$0xff]
    %v75 = vld [vmem:[#allocation2] sm:$0xff]
    %v76 = vld [vmem:[#allocation2 + $0x8] sm:$0xff]
    %v77 = vld [vmem:[#allocation2 + $0x10] sm:$0xff]
    %v78 = vld [vmem:[#allocation2 + $0x18] sm:$0xff]
    %v79 = vld [vmem:[%s1] sm:$0xff]
    %v80 = vld [vmem:[%s1 + $0x8] sm:$0xff]
    %v81 = vld [vmem:[%s4] sm:$0xff]
    %v82 = vld [vmem:[%s4 + $0x8] sm:$0xff]
    %v83 = vld [vmem:[%s4 + $0x10] sm:$0xff]
    %v84 = vld [vmem:[%s4 + $0x18] sm:$0xff]
    %v85 = vld [vmem:[%s4 + $0x20] sm:$0xff]
    %v86 = vld [vmem:[%s4 + $0x28] sm:$0xff]
    %v87 = vld [vmem:[%s4 + $0x30] sm:$0xff]
    %v88 = vld [vmem:[%s4 + $0x38] sm:$0xff]
    %v89 = vld [vmem:[%s4 + $0x40] sm:$0xff]
    %v90 = vld [vmem:[%s4 + $0x48] sm:$0xff]
    %v91 = vld [vmem:[%s4 + $0x50] sm:$0xff]
    %v92 = vld [vmem:[%s4 + $0x58] sm:$0xff]
    %v93 = vld [vmem:[%s4 + $0x60] sm:$0xff]
    %v94 = vld [vmem:[%s4 + $0x68] sm:$0xff]
    %v95 = vld [vmem:[%s4 + $0x70] sm:$0xff]
    %v96 = vld [vmem:[%s4 + $0x78] sm:$0xff]
    %97 = vmatpush.msra.mxu0 %v96
    %98 = vmatpush.msra.mxu0 %v95
    %99 = vmatpush.msra.mxu0 %v94
    %100 = vmatpush.msra.mxu0 %v93
    %101 = vmatpush.msra.mxu0 %v92
    %102 = vmatpush.msra.mxu0 %v91
    %103 = vmatpush.msra.mxu0 %v90
    %104 = vmatpush.msra.mxu0 %v89
    %105 = vmatpush.msra.mxu0 %v88
    %106 = vmatpush.msra.mxu0 %v87
    %107 = vmatpush.msra.mxu0 %v86
    %108 = vmatpush.msra.mxu0 %v85
    %109 = vmatpush.msra.mxu0 %v84
    %110 = vmatpush.msra.mxu0 %v83
    %111 = vmatpush.msra.mxu0 %v82
    %112 = vmatpush.msra.mxu0 %v81
    %113 = vmatmul.f32.gmra.mxu0 %v79
    %v114 = vpop.f32.mrf.mxu0
    %v115 = vadd.f32 0.0, %v114
    %116 = vmatmul.f32.gmra.mxu0 %v80
    %v117 = vpop.f32.mrf.mxu0
    %v118 = vadd.f32 0.0, %v117
    %119 = vdwg.mxu0
    %vm120 = vcmask 261120
    %v122 = vsel %vm120, %v73, 0
    %v125 = vsel %vm120, %v74, 0
    %127 = vmatpush.msra.mxu0 0.0
    %128 = vmatpush.msra.mxu0 0.0
    %129 = vmatpush.msra.mxu0 0.0
    %130 = vmatpush.msra.mxu0 0.0
    %131 = vmatpush.msra.mxu0 0.0
    %132 = vmatpush.msra.mxu0 0.0
    %133 = vmatpush.msra.mxu0 0.0
    %134 = vmatpush.msra.mxu0 0.0
    %135 = vmatpush.msra.mxu0 0.0
    %136 = vmatpush.msra.mxu0 0.0
    %137 = vmatpush.msra.mxu0 0.0
    %138 = vmatpush.msra.mxu0 0.0
    %139 = vmatpush.msra.mxu0 %v78
    %140 = vmatpush.msra.mxu0 %v77
    %141 = vmatpush.msra.mxu0 %v76
    %142 = vmatpush.msra.mxu0 %v75
    %143 = vmatmul.f32.gmra.mxu0 %v122
    %v144 = vpop.f32.mrf.mxu0
    %v145 = vadd.f32 %v115, %v144
    %146 = vmatmul.f32.gmra.mxu0 %v125
    %v147 = vpop.f32.mrf.mxu0
    %v148 = vadd.f32 %v118, %v147
    %149 = vdwg.mxu0
    %v150 = vld [vmem:[%s5] sm:$0x1]
    %v152 = vperm.slane %v150, 0
    %v154 = vadd.f32 %v145, %v152
    %v155 = vadd.f32 %v148, %v152
    %v156 = vmax.f32 %v154, 0.0
    %v157 = vmax.f32 %v155, 0.0
    %v158 = vld [vmem:[#allocation5] sm:$0xff]
    %v159 = vld [vmem:[#allocation5 + $0x8] sm:$0xff]
    %v160 = vld [vmem:[#allocation5 + $0x10] sm:$0xff]
    %v161 = vld [vmem:[#allocation5 + $0x18] sm:$0xff]
    %v162 = vld [vmem:[#allocation5 + $0x20] sm:$0xff]
    %v163 = vld [vmem:[#allocation5 + $0x28] sm:$0xff]
    %v164 = vld [vmem:[#allocation5 + $0x30] sm:$0xff]
    %v165 = vld [vmem:[#allocation5 + $0x38] sm:$0xff]
    %v166 = vld [vmem:[#allocation5 + $0x40] sm:$0xff]
    %v167 = vld [vmem:[#allocation5 + $0x48] sm:$0xff]
    %v168 = vld [vmem:[#allocation5 + $0x50] sm:$0xff]
    %v169 = vld [vmem:[#allocation5 + $0x58] sm:$0xff]
    %v170 = vld [vmem:[#allocation5 + $0x60] sm:$0xff]
    %v171 = vld [vmem:[#allocation5 + $0x68] sm:$0xff]
    %v172 = vld [vmem:[#allocation5 + $0x70] sm:$0xff]
    %v173 = vld [vmem:[#allocation5 + $0x78] sm:$0xff]
    %174 = vmatpush.msra.mxu0 %v173
    %175 = vmatpush.msra.mxu0 %v172
    %176 = vmatpush.msra.mxu0 %v171
    %177 = vmatpush.msra.mxu0 %v170
    %178 = vmatpush.msra.mxu0 %v169
    %179 = vmatpush.msra.mxu0 %v168
    %180 = vmatpush.msra.mxu0 %v167
    %181 = vmatpush.msra.mxu0 %v166
    %182 = vmatpush.msra.mxu0 %v165
    %183 = vmatpush.msra.mxu0 %v164
    %184 = vmatpush.msra.mxu0 %v163
    %185 = vmatpush.msra.mxu0 %v162
    %186 = vmatpush.msra.mxu0 %v161
    %187 = vmatpush.msra.mxu0 %v160
    %188 = vmatpush.msra.mxu0 %v159
    %189 = vmatpush.msra.mxu0 %v158
    %190 = vmatmul.f32.gmra.mxu0 %v156
    %v191 = vpop.f32.mrf.mxu0
    %v192 = vadd.f32 0.0, %v191
    %193 = vmatmul.f32.gmra.mxu0 %v157
    %v194 = vpop.f32.mrf.mxu0
    %v195 = vadd.f32 0.0, %v194
    %196 = vdwg.mxu0
    %v197 = vld [vmem:[%s7] sm:$0xf]
    %v198 = vld [vmem:[%s8] sm:$0xff]
    %v199 = vld [vmem:[%s8 + $0x8] sm:$0xff]
    %v200 = vld [vmem:[%s8 + $0x10] sm:$0xff]
    %v201 = vld [vmem:[%s8 + $0x18] sm:$0xff]
    %v202 = vld [vmem:[%s8 + $0x20] sm:$0xff]
    %v203 = vld [vmem:[%s8 + $0x28] sm:$0xff]
    %v204 = vld [vmem:[%s8 + $0x30] sm:$0xff]
    %v205 = vld [vmem:[%s8 + $0x38] sm:$0xff]
    %v206 = vld [vmem:[%s8 + $0x40] sm:$0xff]
    %v207 = vld [vmem:[%s8 + $0x48] sm:$0xff]
    %v208 = vld [vmem:[%s8 + $0x50] sm:$0xff]
    %v209 = vld [vmem:[%s8 + $0x58] sm:$0xff]
    %v210 = vld [vmem:[%s8 + $0x60] sm:$0xff]
    %v211 = vld [vmem:[%s8 + $0x68] sm:$0xff]
    %v212 = vld [vmem:[%s8 + $0x70] sm:$0xff]
    %v213 = vld [vmem:[%s8 + $0x78] sm:$0xff]
    %v214 = vld [vmem:[%s9] sm:$0xff]
    %v215 = vld [vmem:[%s9 + $0x8] sm:$0xff]
    %v216 = vld [vmem:[%s10] sm:$0x3]
    %v217 = vld [vmem:[%s2] sm:$0xff]
    %v218 = vld [vmem:[%s2 + $0x8] sm:$0xff]
    %220 = vset.pattern.permute.xlu0 0
    %221 = vperm.xlu0 %220, %v217
    %v222 = vpop.permute.xlu0 %221
    %225 = vset.pattern.permute.xlu0 0
    %226 = vperm.xlu0 %225, %v218
    %v227 = vpop.permute.xlu0 %226
    %vm229 = vcmask 31744
    %v230 = vsel %vm229, 1.0, 0.0
    %231 = vadd.xlane.f32.xlu0 %v230
    %v232 = vpop.xlane.xlu0 %231
    %v233 = vrcp.pop %v232
    %v234 = vmul.f32 %v232, %v233
    %v235 = vsub.f32 1.0, %v234
    %v236 = vmul.f32 %v233, %v235
    %v237 = vadd.f32 %v233, %v236
    %vm238 = vweird.f32 %v232
    %vm239 = vweird.f32 %v233
    %vm240 = vmor %vm238, %vm239
    %v241 = vsel %vm240, %v233, %v237
    %v242 = vand.u32 2147483647, %v232
    %vm243 = vcmp.eq.f32.partialorder %v242, 8.507059e+37
    %v244 = vand.u32 %v232, 2147483648
    %v245 = vor.u32 1.1754944e-38, %v244
    %v246 = vsel %vm243, %v245, %v241
    %v247 = vmul.f32 1.0, %v246
    %v248 = vmul.f32 %v247, %v222
    %v249 = vmul.f32 %v247, %v227
    %v251 = vsel %vm229, %v248, 0
    %v254 = vsel %vm229, %v249, 0
    %vm256 = vcmask 1043456
    %v258 = vsel %vm256, %v197, 0
    %260 = vmatpush.msra.mxu0 0.0
    %261 = vmatpush.msra.mxu0 0.0
    %262 = vmatpush.msra.mxu0 0.0
    %263 = vmatpush.msra.mxu0 0.0
    %264 = vmatpush.msra.mxu0 0.0
    %265 = vmatpush.msra.mxu0 0.0
    %266 = vmatpush.msra.mxu0 0.0
    %267 = vmatpush.msra.mxu0 0.0
    %268 = vmatpush.msra.mxu0 0.0
    %269 = vmatpush.msra.mxu0 0.0
    %270 = vmatpush.msra.mxu0 0.0
    %271 = vmatpush.msra.mxu0 0.0
    %272 = vmatpush.msra.mxu0 0.0
    %273 = vmatpush.msra.mxu0 0.0
    %274 = vmatpush.msra.mxu0 0.0
    %v275 = vand.u32 %v258, 4294901760
    %276 = vmatpush.msra.mxu0 %v275
    %v277 = vand.u32 %v251, 4294901760
    %v278 = vsub.f32 %v251, %v277
    %v279 = vand.u32 %v278, 4294901760
    %v280 = vsub.f32 %v278, %v279
    %v281 = vand.u32 %v280, 4294901760
    %282 = vmatmul.f32.gmra.mxu0 %v281
    %v283 = vpop.f32.mrf.mxu0
    %v284 = vadd.f32 0.0, %v283
    %v285 = vand.u32 %v254, 4294901760
    %v286 = vsub.f32 %v254, %v285
    %v287 = vand.u32 %v286, 4294901760
    %v288 = vsub.f32 %v286, %v287
    %v289 = vand.u32 %v288, 4294901760
    %290 = vmatmul.f32.gmra.mxu0 %v289
    %v291 = vpop.f32.mrf.mxu0
    %v292 = vadd.f32 0.0, %v291
    %293 = vdwg.mxu0
    %294 = vmatpush.msra.mxu0 0.0
    %295 = vmatpush.msra.mxu0 0.0
    %296 = vmatpush.msra.mxu0 0.0
    %297 = vmatpush.msra.mxu0 0.0
    %298 = vmatpush.msra.mxu0 0.0
    %299 = vmatpush.msra.mxu0 0.0
    %300 = vmatpush.msra.mxu0 0.0
    %301 = vmatpush.msra.mxu0 0.0
    %302 = vmatpush.msra.mxu0 0.0
    %303 = vmatpush.msra.mxu0 0.0
    %304 = vmatpush.msra.mxu0 0.0
    %305 = vmatpush.msra.mxu0 0.0
    %306 = vmatpush.msra.mxu0 0.0
    %307 = vmatpush.msra.mxu0 0.0
    %308 = vmatpush.msra.mxu0 0.0
    %v309 = vand.u32 %v258, 4294901760
    %v310 = vsub.f32 %v258, %v309
    %v311 = vand.u32 %v310, 4294901760
    %v312 = vsub.f32 %v310, %v311
    %v313 = vand.u32 %v312, 4294901760
    %314 = vmatpush.msra.mxu0 %v313
    %v315 = vand.u32 %v251, 4294901760
    %316 = vmatmul.f32.gmra.mxu0 %v315
    %v317 = vpop.f32.mrf.mxu0
    %v318 = vadd.f32 %v284, %v317
    %v319 = vand.u32 %v254, 4294901760
    %320 = vmatmul.f32.gmra.mxu0 %v319
    %v321 = vpop.f32.mrf.mxu0
    %v322 = vadd.f32 %v292, %v321
    %323 = vdwg.mxu0
    %324 = vmatpush.msra.mxu0 0.0
    %325 = vmatpush.msra.mxu0 0.0
    %326 = vmatpush.msra.mxu0 0.0
    %327 = vmatpush.msra.mxu0 0.0
    %328 = vmatpush.msra.mxu0 0.0
    %329 = vmatpush.msra.mxu0 0.0
    %330 = vmatpush.msra.mxu0 0.0
    %331 = vmatpush.msra.mxu0 0.0
    %332 = vmatpush.msra.mxu0 0.0
    %333 = vmatpush.msra.mxu0 0.0
    %334 = vmatpush.msra.mxu0 0.0
    %335 = vmatpush.msra.mxu0 0.0
    %336 = vmatpush.msra.mxu0 0.0
    %337 = vmatpush.msra.mxu0 0.0
    %338 = vmatpush.msra.mxu0 0.0
    %v339 = vand.u32 %v258, 4294901760
    %v340 = vsub.f32 %v258, %v339
    %341 = vmatpush.msra.mxu0 %v340
    %v342 = vand.u32 %v251, 4294901760
    %v343 = vsub.f32 %v251, %v342
    %344 = vmatmul.f32.gmra.mxu0 %v343
    %v345 = vpop.f32.mrf.mxu0
    %v346 = vadd.f32 %v318, %v345
    %v347 = vand.u32 %v254, 4294901760
    %v348 = vsub.f32 %v254, %v347
    %349 = vmatmul.f32.gmra.mxu0 %v348
    %v350 = vpop.f32.mrf.mxu0
    %v351 = vadd.f32 %v322, %v350
    %352 = vdwg.mxu0
    %353 = vmatpush.msra.mxu0 0.0
    %354 = vmatpush.msra.mxu0 0.0
    %355 = vmatpush.msra.mxu0 0.0
    %356 = vmatpush.msra.mxu0 0.0
    %357 = vmatpush.msra.mxu0 0.0
    %358 = vmatpush.msra.mxu0 0.0
    %359 = vmatpush.msra.mxu0 0.0
    %360 = vmatpush.msra.mxu0 0.0
    %361 = vmatpush.msra.mxu0 0.0
    %362 = vmatpush.msra.mxu0 0.0
    %363 = vmatpush.msra.mxu0 0.0
    %364 = vmatpush.msra.mxu0 0.0
    %365 = vmatpush.msra.mxu0 0.0
    %366 = vmatpush.msra.mxu0 0.0
    %367 = vmatpush.msra.mxu0 0.0
    %v368 = vand.u32 %v258, 4294901760
    %369 = vmatpush.msra.mxu0 %v368
    %v370 = vand.u32 %v251, 4294901760
    %v371 = vsub.f32 %v251, %v370
    %v372 = vand.u32 %v371, 4294901760
    %373 = vmatmul.f32.gmra.mxu0 %v372
    %v374 = vpop.f32.mrf.mxu0
    %v375 = vadd.f32 %v346, %v374
    %v376 = vand.u32 %v254, 4294901760
    %v377 = vsub.f32 %v254, %v376
    %v378 = vand.u32 %v377, 4294901760
    %379 = vmatmul.f32.gmra.mxu0 %v378
    %v380 = vpop.f32.mrf.mxu0
    %v381 = vadd.f32 %v351, %v380
    %382 = vdwg.mxu0
    %383 = vmatpush.msra.mxu0 0.0
    %384 = vmatpush.msra.mxu0 0.0
    %385 = vmatpush.msra.mxu0 0.0
    %386 = vmatpush.msra.mxu0 0.0
    %387 = vmatpush.msra.mxu0 0.0
    %388 = vmatpush.msra.mxu0 0.0
    %389 = vmatpush.msra.mxu0 0.0
    %390 = vmatpush.msra.mxu0 0.0
    %391 = vmatpush.msra.mxu0 0.0
    %392 = vmatpush.msra.mxu0 0.0
    %393 = vmatpush.msra.mxu0 0.0
    %394 = vmatpush.msra.mxu0 0.0
    %395 = vmatpush.msra.mxu0 0.0
    %396 = vmatpush.msra.mxu0 0.0
    %397 = vmatpush.msra.mxu0 0.0
    %v398 = vand.u32 %v258, 4294901760
    %v399 = vsub.f32 %v258, %v398
    %v400 = vand.u32 %v399, 4294901760
    %401 = vmatpush.msra.mxu0 %v400
    %v402 = vand.u32 %v251, 4294901760
    %403 = vmatmul.f32.gmra.mxu0 %v402
    %v404 = vpop.f32.mrf.mxu0
    %v405 = vadd.f32 %v375, %v404
    %v406 = vand.u32 %v254, 4294901760
    %407 = vmatmul.f32.gmra.mxu0 %v406
    %v408 = vpop.f32.mrf.mxu0
    %v409 = vadd.f32 %v381, %v408
    %410 = vdwg.mxu0
    %411 = vmatpush.msra.mxu0 0.0
    %412 = vmatpush.msra.mxu0 0.0
    %413 = vmatpush.msra.mxu0 0.0
    %414 = vmatpush.msra.mxu0 0.0
    %415 = vmatpush.msra.mxu0 0.0
    %416 = vmatpush.msra.mxu0 0.0
    %417 = vmatpush.msra.mxu0 0.0
    %418 = vmatpush.msra.mxu0 0.0
    %419 = vmatpush.msra.mxu0 0.0
    %420 = vmatpush.msra.mxu0 0.0
    %421 = vmatpush.msra.mxu0 0.0
    %422 = vmatpush.msra.mxu0 0.0
    %423 = vmatpush.msra.mxu0 0.0
    %424 = vmatpush.msra.mxu0 0.0
    %425 = vmatpush.msra.mxu0 0.0
    %v426 = vand.u32 %v258, 4294901760
    %427 = vmatpush.msra.mxu0 %v426
    %v428 = vand.u32 %v251, 4294901760
    %429 = vmatmul.f32.gmra.mxu0 %v428
    %v430 = vpop.f32.mrf.mxu0
    %v431 = vadd.f32 %v405, %v430
    %v432 = vand.u32 %v254, 4294901760
    %433 = vmatmul.f32.gmra.mxu0 %v432
    %v434 = vpop.f32.mrf.mxu0
    %v435 = vadd.f32 %v409, %v434
    %436 = vdwg.mxu0
    %v437 = vmul.f32 %v192, %v431
    %v438 = vmul.f32 %v195, %v435
    %vm439 = vcmask 130048
    %v441 = vsel %vm439, %v216, 0
    %443 = vmatpush.msra.mxu0 0.0
    %444 = vmatpush.msra.mxu0 0.0
    %445 = vmatpush.msra.mxu0 0.0
    %446 = vmatpush.msra.mxu0 0.0
    %447 = vmatpush.msra.mxu0 0.0
    %448 = vmatpush.msra.mxu0 0.0
    %449 = vmatpush.msra.mxu0 0.0
    %450 = vmatpush.msra.mxu0 0.0
    %451 = vmatpush.msra.mxu0 0.0
    %452 = vmatpush.msra.mxu0 0.0
    %453 = vmatpush.msra.mxu0 0.0
    %454 = vmatpush.msra.mxu0 0.0
    %455 = vmatpush.msra.mxu0 0.0
    %456 = vmatpush.msra.mxu0 0.0
    %v457 = vand.u32 %v438, 4294901760
    %458 = vmatpush.msra.mxu0 %v457
    %v459 = vand.u32 %v437, 4294901760
    %460 = vmatpush.msra.mxu0 %v459
    %v461 = vand.u32 %v441, 4294901760
    %v462 = vsub.f32 %v441, %v461
    %v463 = vand.u32 %v462, 4294901760
    %v464 = vsub.f32 %v462, %v463
    %v465 = vand.u32 %v464, 4294901760
    %466 = vmatmul.f32.gmra.mxu0 %v465
    %v467 = vpop.f32.mrf.mxu0
    %v468 = vadd.f32 0.0, %v467
    %469 = vdwg.mxu0
    %470 = vmatpush.msra.mxu0 0.0
    %471 = vmatpush.msra.mxu0 0.0
    %472 = vmatpush.msra.mxu0 0.0
    %473 = vmatpush.msra.mxu0 0.0
    %474 = vmatpush.msra.mxu0 0.0
    %475 = vmatpush.msra.mxu0 0.0
    %476 = vmatpush.msra.mxu0 0.0
    %477 = vmatpush.msra.mxu0 0.0
    %478 = vmatpush.msra.mxu0 0.0
    %479 = vmatpush.msra.mxu0 0.0
    %480 = vmatpush.msra.mxu0 0.0
    %481 = vmatpush.msra.mxu0 0.0
    %482 = vmatpush.msra.mxu0 0.0
    %483 = vmatpush.msra.mxu0 0.0
    %v484 = vand.u32 %v438, 4294901760
    %v485 = vsub.f32 %v438, %v484
    %v486 = vand.u32 %v485, 4294901760
    %v487 = vsub.f32 %v485, %v486
    %v488 = vand.u32 %v487, 4294901760
    %489 = vmatpush.msra.mxu0 %v488
    %v490 = vand.u32 %v437, 4294901760
    %v491 = vsub.f32 %v437, %v490
    %v492 = vand.u32 %v491, 4294901760
    %v493 = vsub.f32 %v491, %v492
    %v494 = vand.u32 %v493, 4294901760
    %495 = vmatpush.msra.mxu0 %v494
    %v496 = vand.u32 %v441, 4294901760
    %497 = vmatmul.f32.gmra.mxu0 %v496
    %v498 = vpop.f32.mrf.mxu0
    %v499 = vadd.f32 %v468, %v498
    %500 = vdwg.mxu0
    %501 = vmatpush.msra.mxu0 0.0
    %502 = vmatpush.msra.mxu0 0.0
    %503 = vmatpush.msra.mxu0 0.0
    %504 = vmatpush.msra.mxu0 0.0
    %505 = vmatpush.msra.mxu0 0.0
    %506 = vmatpush.msra.mxu0 0.0
    %507 = vmatpush.msra.mxu0 0.0
    %508 = vmatpush.msra.mxu0 0.0
    %509 = vmatpush.msra.mxu0 0.0
    %510 = vmatpush.msra.mxu0 0.0
    %511 = vmatpush.msra.mxu0 0.0
    %512 = vmatpush.msra.mxu0 0.0
    %513 = vmatpush.msra.mxu0 0.0
    %514 = vmatpush.msra.mxu0 0.0
    %v515 = vand.u32 %v438, 4294901760
    %v516 = vsub.f32 %v438, %v515
    %517 = vmatpush.msra.mxu0 %v516
    %v518 = vand.u32 %v437, 4294901760
    %v519 = vsub.f32 %v437, %v518
    %520 = vmatpush.msra.mxu0 %v519
    %v521 = vand.u32 %v441, 4294901760
    %v522 = vsub.f32 %v441, %v521
    %523 = vmatmul.f32.gmra.mxu0 %v522
    %v524 = vpop.f32.mrf.mxu0
    %v525 = vadd.f32 %v499, %v524
    %526 = vdwg.mxu0
    %527 = vmatpush.msra.mxu0 0.0
    %528 = vmatpush.msra.mxu0 0.0
    %529 = vmatpush.msra.mxu0 0.0
    %530 = vmatpush.msra.mxu0 0.0
    %531 = vmatpush.msra.mxu0 0.0
    %532 = vmatpush.msra.mxu0 0.0
    %533 = vmatpush.msra.mxu0 0.0
    %534 = vmatpush.msra.mxu0 0.0
    %535 = vmatpush.msra.mxu0 0.0
    %536 = vmatpush.msra.mxu0 0.0
    %537 = vmatpush.msra.mxu0 0.0
    %538 = vmatpush.msra.mxu0 0.0
    %539 = vmatpush.msra.mxu0 0.0
    %540 = vmatpush.msra.mxu0 0.0
    %v541 = vand.u32 %v438, 4294901760
    %542 = vmatpush.msra.mxu0 %v541
    %v543 = vand.u32 %v437, 4294901760
    %544 = vmatpush.msra.mxu0 %v543
    %v545 = vand.u32 %v441, 4294901760
    %v546 = vsub.f32 %v441, %v545
    %v547 = vand.u32 %v546, 4294901760
    %548 = vmatmul.f32.gmra.mxu0 %v547
    %v549 = vpop.f32.mrf.mxu0
    %v550 = vadd.f32 %v525, %v549
    %551 = vdwg.mxu0
    %552 = vmatpush.msra.mxu0 0.0
    %553 = vmatpush.msra.mxu0 0.0
    %554 = vmatpush.msra.mxu0 0.0
    %555 = vmatpush.msra.mxu0 0.0
    %556 = vmatpush.msra.mxu0 0.0
    %557 = vmatpush.msra.mxu0 0.0
    %558 = vmatpush.msra.mxu0 0.0
    %559 = vmatpush.msra.mxu0 0.0
    %560 = vmatpush.msra.mxu0 0.0
    %561 = vmatpush.msra.mxu0 0.0
    %562 = vmatpush.msra.mxu0 0.0
    %563 = vmatpush.msra.mxu0 0.0
    %564 = vmatpush.msra.mxu0 0.0
    %565 = vmatpush.msra.mxu0 0.0
    %v566 = vand.u32 %v438, 4294901760
    %v567 = vsub.f32 %v438, %v566
    %v568 = vand.u32 %v567, 4294901760
    %569 = vmatpush.msra.mxu0 %v568
    %v570 = vand.u32 %v437, 4294901760
    %v571 = vsub.f32 %v437, %v570
    %v572 = vand.u32 %v571, 4294901760
    %573 = vmatpush.msra.mxu0 %v572
    %v574 = vand.u32 %v441, 4294901760
    %575 = vmatmul.f32.gmra.mxu0 %v574
    %v576 = vpop.f32.mrf.mxu0
    %v577 = vadd.f32 %v550, %v576
    %578 = vdwg.mxu0
    %579 = vmatpush.msra.mxu0 0.0
    %580 = vmatpush.msra.mxu0 0.0
    %581 = vmatpush.msra.mxu0 0.0
    %582 = vmatpush.msra.mxu0 0.0
    %583 = vmatpush.msra.mxu0 0.0
    %584 = vmatpush.msra.mxu0 0.0
    %585 = vmatpush.msra.mxu0 0.0
    %586 = vmatpush.msra.mxu0 0.0
    %587 = vmatpush.msra.mxu0 0.0
    %588 = vmatpush.msra.mxu0 0.0
    %589 = vmatpush.msra.mxu0 0.0
    %590 = vmatpush.msra.mxu0 0.0
    %591 = vmatpush.msra.mxu0 0.0
    %592 = vmatpush.msra.mxu0 0.0
    %v593 = vand.u32 %v438, 4294901760
    %594 = vmatpush.msra.mxu0 %v593
    %v595 = vand.u32 %v437, 4294901760
    %596 = vmatpush.msra.mxu0 %v595
    %v597 = vand.u32 %v441, 4294901760
    %598 = vmatmul.f32.gmra.mxu0 %v597
    %v599 = vpop.f32.mrf.mxu0
    %v600 = vadd.f32 %v577, %v599
    %601 = vdwg.mxu0
    %v602 = vmul.f32 %v600, %v600
    %v603 = vand.u32 %v213, 4294901760
    %604 = vmatpush.msra.mxu0 %v603
    %v605 = vand.u32 %v212, 4294901760
    %606 = vmatpush.msra.mxu0 %v605
    %v607 = vand.u32 %v211, 4294901760
    %608 = vmatpush.msra.mxu0 %v607
    %v609 = vand.u32 %v210, 4294901760
    %610 = vmatpush.msra.mxu0 %v609
    %v611 = vand.u32 %v209, 4294901760
    %612 = vmatpush.msra.mxu0 %v611
    %v613 = vand.u32 %v208, 4294901760
    %614 = vmatpush.msra.mxu0 %v613
    %v615 = vand.u32 %v207, 4294901760
    %616 = vmatpush.msra.mxu0 %v615
    %v617 = vand.u32 %v206, 4294901760
    %618 = vmatpush.msra.mxu0 %v617
    %v619 = vand.u32 %v205, 4294901760
    %620 = vmatpush.msra.mxu0 %v619
    %v621 = vand.u32 %v204, 4294901760
    %622 = vmatpush.msra.mxu0 %v621
    %v623 = vand.u32 %v203, 4294901760
    %624 = vmatpush.msra.mxu0 %v623
    %v625 = vand.u32 %v202, 4294901760
    %626 = vmatpush.msra.mxu0 %v625
    %v627 = vand.u32 %v201, 4294901760
    %628 = vmatpush.msra.mxu0 %v627
    %v629 = vand.u32 %v200, 4294901760
    %630 = vmatpush.msra.mxu0 %v629
    %v631 = vand.u32 %v199, 4294901760
    %632 = vmatpush.msra.mxu0 %v631
    %v633 = vand.u32 %v198, 4294901760
    %634 = vmatpush.msra.mxu0 %v633
    %v635 = vand.u32 %v602, 4294901760
    %v636 = vsub.f32 %v602, %v635
    %v637 = vand.u32 %v636, 4294901760
    %v638 = vsub.f32 %v636, %v637
    %v639 = vand.u32 %v638, 4294901760
    %640 = vmatmul.f32.gmra.mxu0 %v639
    %v641 = vpop.f32.mrf.mxu0
    %v642 = vadd.f32 0.0, %v641
    %643 = vdwg.mxu0
    %v644 = vand.u32 %v213, 4294901760
    %v645 = vsub.f32 %v213, %v644
    %v646 = vand.u32 %v645, 4294901760
    %v647 = vsub.f32 %v645, %v646
    %v648 = vand.u32 %v647, 4294901760
    %649 = vmatpush.msra.mxu0 %v648
    %v650 = vand.u32 %v212, 4294901760
    %v651 = vsub.f32 %v212, %v650
    %v652 = vand.u32 %v651, 4294901760
    %v653 = vsub.f32 %v651, %v652
    %v654 = vand.u32 %v653, 4294901760
    %655 = vmatpush.msra.mxu0 %v654
    %v656 = vand.u32 %v211, 4294901760
    %v657 = vsub.f32 %v211, %v656
    %v658 = vand.u32 %v657, 4294901760
    %v659 = vsub.f32 %v657, %v658
    %v660 = vand.u32 %v659, 4294901760
    %661 = vmatpush.msra.mxu0 %v660
    %v662 = vand.u32 %v210, 4294901760
    %v663 = vsub.f32 %v210, %v662
    %v664 = vand.u32 %v663, 4294901760
    %v665 = vsub.f32 %v663, %v664
    %v666 = vand.u32 %v665, 4294901760
    %667 = vmatpush.msra.mxu0 %v666
    %v668 = vand.u32 %v209, 4294901760
    %v669 = vsub.f32 %v209, %v668
    %v670 = vand.u32 %v669, 4294901760
    %v671 = vsub.f32 %v669, %v670
    %v672 = vand.u32 %v671, 4294901760
    %673 = vmatpush.msra.mxu0 %v672
    %v674 = vand.u32 %v208, 4294901760
    %v675 = vsub.f32 %v208, %v674
    %v676 = vand.u32 %v675, 4294901760
    %v677 = vsub.f32 %v675, %v676
    %v678 = vand.u32 %v677, 4294901760
    %679 = vmatpush.msra.mxu0 %v678
    %v680 = vand.u32 %v207, 4294901760
    %v681 = vsub.f32 %v207, %v680
    %v682 = vand.u32 %v681, 4294901760
    %v683 = vsub.f32 %v681, %v682
    %v684 = vand.u32 %v683, 4294901760
    %685 = vmatpush.msra.mxu0 %v684
    %v686 = vand.u32 %v206, 4294901760
    %v687 = vsub.f32 %v206, %v686
    %v688 = vand.u32 %v687, 4294901760
    %v689 = vsub.f32 %v687, %v688
    %v690 = vand.u32 %v689, 4294901760
    %691 = vmatpush.msra.mxu0 %v690
    %v692 = vand.u32 %v205, 4294901760
    %v693 = vsub.f32 %v205, %v692
    %v694 = vand.u32 %v693, 4294901760
    %v695 = vsub.f32 %v693, %v694
    %v696 = vand.u32 %v695, 4294901760
    %697 = vmatpush.msra.mxu0 %v696
    %v698 = vand.u32 %v204, 4294901760
    %v699 = vsub.f32 %v204, %v698
    %v700 = vand.u32 %v699, 4294901760
    %v701 = vsub.f32 %v699, %v700
    %v702 = vand.u32 %v701, 4294901760
    %703 = vmatpush.msra.mxu0 %v702
    %v704 = vand.u32 %v203, 4294901760
    %v705 = vsub.f32 %v203, %v704
    %v706 = vand.u32 %v705, 4294901760
    %v707 = vsub.f32 %v705, %v706
    %v708 = vand.u32 %v707, 4294901760
    %709 = vmatpush.msra.mxu0 %v708
    %v710 = vand.u32 %v202, 4294901760
    %v711 = vsub.f32 %v202, %v710
    %v712 = vand.u32 %v711, 4294901760
    %v713 = vsub.f32 %v711, %v712
    %v714 = vand.u32 %v713, 4294901760
    %715 = vmatpush.msra.mxu0 %v714
    %v716 = vand.u32 %v201, 4294901760
    %v717 = vsub.f32 %v201, %v716
    %v718 = vand.u32 %v717, 4294901760
    %v719 = vsub.f32 %v717, %v718
    %v720 = vand.u32 %v719, 4294901760
    %721 = vmatpush.msra.mxu0 %v720
    %v722 = vand.u32 %v200, 4294901760
    %v723 = vsub.f32 %v200, %v722
    %v724 = vand.u32 %v723, 4294901760
    %v725 = vsub.f32 %v723, %v724
    %v726 = vand.u32 %v725, 4294901760
    %727 = vmatpush.msra.mxu0 %v726
    %v728 = vand.u32 %v199, 4294901760
    %v729 = vsub.f32 %v199, %v728
    %v730 = vand.u32 %v729, 4294901760
    %v731 = vsub.f32 %v729, %v730
    %v732 = vand.u32 %v731, 4294901760
    %733 = vmatpush.msra.mxu0 %v732
    %v734 = vand.u32 %v198, 4294901760
    %v735 = vsub.f32 %v198, %v734
    %v736 = vand.u32 %v735, 4294901760
    %v737 = vsub.f32 %v735, %v736
    %v738 = vand.u32 %v737, 4294901760
    %739 = vmatpush.msra.mxu0 %v738
    %v740 = vand.u32 %v602, 4294901760
    %741 = vmatmul.f32.gmra.mxu0 %v740
    %v742 = vpop.f32.mrf.mxu0
    %v743 = vadd.f32 %v642, %v742
    %744 = vdwg.mxu0
    %v745 = vand.u32 %v213, 4294901760
    %v746 = vsub.f32 %v213, %v745
    %747 = vmatpush.msra.mxu0 %v746
    %v748 = vand.u32 %v212, 4294901760
    %v749 = vsub.f32 %v212, %v748
    %750 = vmatpush.msra.mxu0 %v749
    %v751 = vand.u32 %v211, 4294901760
    %v752 = vsub.f32 %v211, %v751
    %753 = vmatpush.msra.mxu0 %v752
    %v754 = vand.u32 %v210, 4294901760
    %v755 = vsub.f32 %v210, %v754
    %756 = vmatpush.msra.mxu0 %v755
    %v757 = vand.u32 %v209, 4294901760
    %v758 = vsub.f32 %v209, %v757
    %759 = vmatpush.msra.mxu0 %v758
    %v760 = vand.u32 %v208, 4294901760
    %v761 = vsub.f32 %v208, %v760
    %762 = vmatpush.msra.mxu0 %v761
    %v763 = vand.u32 %v207, 4294901760
    %v764 = vsub.f32 %v207, %v763
    %765 = vmatpush.msra.mxu0 %v764
    %v766 = vand.u32 %v206, 4294901760
    %v767 = vsub.f32 %v206, %v766
    %768 = vmatpush.msra.mxu0 %v767
    %v769 = vand.u32 %v205, 4294901760
    %v770 = vsub.f32 %v205, %v769
    %771 = vmatpush.msra.mxu0 %v770
    %v772 = vand.u32 %v204, 4294901760
    %v773 = vsub.f32 %v204, %v772
    %774 = vmatpush.msra.mxu0 %v773
    %v775 = vand.u32 %v203, 4294901760
    %v776 = vsub.f32 %v203, %v775
    %777 = vmatpush.msra.mxu0 %v776
    %v778 = vand.u32 %v202, 4294901760
    %v779 = vsub.f32 %v202, %v778
    %780 = vmatpush.msra.mxu0 %v779
    %v781 = vand.u32 %v201, 4294901760
    %v782 = vsub.f32 %v201, %v781
    %783 = vmatpush.msra.mxu0 %v782
    %v784 = vand.u32 %v200, 4294901760
    %v785 = vsub.f32 %v200, %v784
    %786 = vmatpush.msra.mxu0 %v785
    %v787 = vand.u32 %v199, 4294901760
    %v788 = vsub.f32 %v199, %v787
    %789 = vmatpush.msra.mxu0 %v788
    %v790 = vand.u32 %v198, 4294901760
    %v791 = vsub.f32 %v198, %v790
    %792 = vmatpush.msra.mxu0 %v791
    %v793 = vand.u32 %v602, 4294901760
    %v794 = vsub.f32 %v602, %v793
    %795 = vmatmul.f32.gmra.mxu0 %v794
    %v796 = vpop.f32.mrf.mxu0
    %v797 = vadd.f32 %v743, %v796
    %798 = vdwg.mxu0
    %v799 = vand.u32 %v213, 4294901760
    %800 = vmatpush.msra.mxu0 %v799
    %v801 = vand.u32 %v212, 4294901760
    %802 = vmatpush.msra.mxu0 %v801
    %v803 = vand.u32 %v211, 4294901760
    %804 = vmatpush.msra.mxu0 %v803
    %v805 = vand.u32 %v210, 4294901760
    %806 = vmatpush.msra.mxu0 %v805
    %v807 = vand.u32 %v209, 4294901760
    %808 = vmatpush.msra.mxu0 %v807
    %v809 = vand.u32 %v208, 4294901760
    %810 = vmatpush.msra.mxu0 %v809
    %v811 = vand.u32 %v207, 4294901760
    %812 = vmatpush.msra.mxu0 %v811
    %v813 = vand.u32 %v206, 4294901760
    %814 = vmatpush.msra.mxu0 %v813
    %v815 = vand.u32 %v205, 4294901760
    %816 = vmatpush.msra.mxu0 %v815
    %v817 = vand.u32 %v204, 4294901760
    %818 = vmatpush.msra.mxu0 %v817
    %v819 = vand.u32 %v203, 4294901760
    %820 = vmatpush.msra.mxu0 %v819
    %v821 = vand.u32 %v202, 4294901760
    %822 = vmatpush.msra.mxu0 %v821
    %v823 = vand.u32 %v201, 4294901760
    %824 = vmatpush.msra.mxu0 %v823
    %v825 = vand.u32 %v200, 4294901760
    %826 = vmatpush.msra.mxu0 %v825
    %v827 = vand.u32 %v199, 4294901760
    %828 = vmatpush.msra.mxu0 %v827
    %v829 = vand.u32 %v198, 4294901760
    %830 = vmatpush.msra.mxu0 %v829
    %v831 = vand.u32 %v602, 4294901760
    %v832 = vsub.f32 %v602, %v831
    %v833 = vand.u32 %v832, 4294901760
    %834 = vmatmul.f32.gmra.mxu0 %v833
    %v835 = vpop.f32.mrf.mxu0
    %v836 = vadd.f32 %v797, %v835
    %837 = vdwg.mxu0
    %v838 = vand.u32 %v213, 4294901760
    %v839 = vsub.f32 %v213, %v838
    %v840 = vand.u32 %v839, 4294901760
    %841 = vmatpush.msra.mxu0 %v840
    %v842 = vand.u32 %v212, 4294901760
    %v843 = vsub.f32 %v212, %v842
    %v844 = vand.u32 %v843, 4294901760
    %845 = vmatpush.msra.mxu0 %v844
    %v846 = vand.u32 %v211, 4294901760
    %v847 = vsub.f32 %v211, %v846
    %v848 = vand.u32 %v847, 4294901760
    %849 = vmatpush.msra.mxu0 %v848
    %v850 = vand.u32 %v210, 4294901760
    %v851 = vsub.f32 %v210, %v850
    %v852 = vand.u32 %v851, 4294901760
    %853 = vmatpush.msra.mxu0 %v852
    %v854 = vand.u32 %v209, 4294901760
    %v855 = vsub.f32 %v209, %v854
    %v856 = vand.u32 %v855, 4294901760
    %857 = vmatpush.msra.mxu0 %v856
    %v858 = vand.u32 %v208, 4294901760
    %v859 = vsub.f32 %v208, %v858
    %v860 = vand.u32 %v859, 4294901760
    %861 = vmatpush.msra.mxu0 %v860
    %v862 = vand.u32 %v207, 4294901760
    %v863 = vsub.f32 %v207, %v862
    %v864 = vand.u32 %v863, 4294901760
    %865 = vmatpush.msra.mxu0 %v864
    %v866 = vand.u32 %v206, 4294901760
    %v867 = vsub.f32 %v206, %v866
    %v868 = vand.u32 %v867, 4294901760
    %869 = vmatpush.msra.mxu0 %v868
    %v870 = vand.u32 %v205, 4294901760
    %v871 = vsub.f32 %v205, %v870
    %v872 = vand.u32 %v871, 4294901760
    %873 = vmatpush.msra.mxu0 %v872
    %v874 = vand.u32 %v204, 4294901760
    %v875 = vsub.f32 %v204, %v874
    %v876 = vand.u32 %v875, 4294901760
    %877 = vmatpush.msra.mxu0 %v876
    %v878 = vand.u32 %v203, 4294901760
    %v879 = vsub.f32 %v203, %v878
    %v880 = vand.u32 %v879, 4294901760
    %881 = vmatpush.msra.mxu0 %v880
    %v882 = vand.u32 %v202, 4294901760
    %v883 = vsub.f32 %v202, %v882
    %v884 = vand.u32 %v883, 4294901760
    %885 = vmatpush.msra.mxu0 %v884
    %v886 = vand.u32 %v201, 4294901760
    %v887 = vsub.f32 %v201, %v886
    %v888 = vand.u32 %v887, 4294901760
    %889 = vmatpush.msra.mxu0 %v888
    %v890 = vand.u32 %v200, 4294901760
    %v891 = vsub.f32 %v200, %v890
    %v892 = vand.u32 %v891, 4294901760
    %893 = vmatpush.msra.mxu0 %v892
    %v894 = vand.u32 %v199, 4294901760
    %v895 = vsub.f32 %v199, %v894
    %v896 = vand.u32 %v895, 4294901760
    %897 = vmatpush.msra.mxu0 %v896
    %v898 = vand.u32 %v198, 4294901760
    %v899 = vsub.f32 %v198, %v898
    %v900 = vand.u32 %v899, 4294901760
    %901 = vmatpush.msra.mxu0 %v900
    %v902 = vand.u32 %v602, 4294901760
    %903 = vmatmul.f32.gmra.mxu0 %v902
    %v904 = vpop.f32.mrf.mxu0
    %v905 = vadd.f32 %v836, %v904
    %906 = vdwg.mxu0
    %v907 = vand.u32 %v213, 4294901760
    %908 = vmatpush.msra.mxu0 %v907
    %v909 = vand.u32 %v212, 4294901760
    %910 = vmatpush.msra.mxu0 %v909
    %v911 = vand.u32 %v211, 4294901760
    %912 = vmatpush.msra.mxu0 %v911
    %v913 = vand.u32 %v210, 4294901760
    %914 = vmatpush.msra.mxu0 %v913
    %v915 = vand.u32 %v209, 4294901760
    %916 = vmatpush.msra.mxu0 %v915
    %v917 = vand.u32 %v208, 4294901760
    %918 = vmatpush.msra.mxu0 %v917
    %v919 = vand.u32 %v207, 4294901760
    %920 = vmatpush.msra.mxu0 %v919
    %v921 = vand.u32 %v206, 4294901760
    %922 = vmatpush.msra.mxu0 %v921
    %v923 = vand.u32 %v205, 4294901760
    %924 = vmatpush.msra.mxu0 %v923
    %v925 = vand.u32 %v204, 4294901760
    %926 = vmatpush.msra.mxu0 %v925
    %v927 = vand.u32 %v203, 4294901760
    %928 = vmatpush.msra.mxu0 %v927
    %v929 = vand.u32 %v202, 4294901760
    %930 = vmatpush.msra.mxu0 %v929
    %v931 = vand.u32 %v201, 4294901760
    %932 = vmatpush.msra.mxu0 %v931
    %v933 = vand.u32 %v200, 4294901760
    %934 = vmatpush.msra.mxu0 %v933
    %v935 = vand.u32 %v199, 4294901760
    %936 = vmatpush.msra.mxu0 %v935
    %v937 = vand.u32 %v198, 4294901760
    %938 = vmatpush.msra.mxu0 %v937
    %v939 = vand.u32 %v602, 4294901760
    %940 = vmatmul.f32.gmra.mxu0 %v939
    %v941 = vpop.f32.mrf.mxu0
    %v942 = vadd.f32 %v905, %v941
    %943 = vdwg.mxu0
    %v944 = vadd.f32 %v942, 1e-08
    %v945 = vrsqrt.pop %v944
    %v946 = vmul.f32 %v945, %v944
    %v947 = vmul.f32 %v946, %v945
    %v948 = vmul.f32 0.5, %v947
    %v949 = vsub.f32 1.5, %v948
    %v950 = vmul.f32 %v945, %v949
    %vm951 = vweird.f32 %v944
    %vm952 = vweird.f32 %v945
    %vm953 = vmor %vm951, %vm952
    %v954 = vsel %vm953, %v945, %v950
    %v955 = vmul.f32 %v942, %v954
    %v956 = vadd.f32 %v942, 1.0
    %v957 = vrcp.pop %v956
    %v958 = vmul.f32 %v956, %v957
    %v959 = vsub.f32 1.0, %v958
    %v960 = vmul.f32 %v957, %v959
    %v961 = vadd.f32 %v957, %v960
    %vm962 = vweird.f32 %v956
    %vm963 = vweird.f32 %v957
    %vm964 = vmor %vm962, %vm963
    %v965 = vsel %vm964, %v957, %v961
    %v966 = vand.u32 2147483647, %v956
    %vm967 = vcmp.eq.f32.partialorder %v966, 8.507059e+37
    %v968 = vand.u32 %v956, 2147483648
    %v969 = vor.u32 1.1754944e-38, %v968
    %v970 = vsel %vm967, %v969, %v965
    %v971 = vmul.f32 %v955, %v970
    %v973 = vsel %vm229, %v971, 0
    %975 = vmatpush.msra.mxu0 0.0
    %976 = vmatpush.msra.mxu0 0.0
    %977 = vmatpush.msra.mxu0 0.0
    %978 = vmatpush.msra.mxu0 0.0
    %979 = vmatpush.msra.mxu0 0.0
    %980 = vmatpush.msra.mxu0 0.0
    %981 = vmatpush.msra.mxu0 0.0
    %982 = vmatpush.msra.mxu0 0.0
    %983 = vmatpush.msra.mxu0 0.0
    %984 = vmatpush.msra.mxu0 0.0
    %985 = vmatpush.msra.mxu0 0.0
    %986 = vmatpush.msra.mxu0 0.0
    %987 = vmatpush.msra.mxu0 0.0
    %988 = vmatpush.msra.mxu0 0.0
    %989 = vmatpush.msra.mxu0 0.0
    %v990 = vand.u32 %v258, 4294901760
    %991 = vmatpush.msra.mxu0 %v990
    %v992 = vand.u32 %v973, 4294901760
    %v993 = vsub.f32 %v973, %v992
    %v994 = vand.u32 %v993, 4294901760
    %v995 = vsub.f32 %v993, %v994
    %v996 = vand.u32 %v995, 4294901760
    %997 = vmatmul.f32.gmra.mxu0 %v996
    %v998 = vpop.f32.mrf.mxu0
    %v999 = vadd.f32 0.0, %v998
    %1000 = vdwg.mxu0
    %1001 = vmatpush.msra.mxu0 0.0
    %1002 = vmatpush.msra.mxu0 0.0
    %1003 = vmatpush.msra.mxu0 0.0
    %1004 = vmatpush.msra.mxu0 0.0
    %1005 = vmatpush.msra.mxu0 0.0
    %1006 = vmatpush.msra.mxu0 0.0
    %1007 = vmatpush.msra.mxu0 0.0
    %1008 = vmatpush.msra.mxu0 0.0
    %1009 = vmatpush.msra.mxu0 0.0
    %1010 = vmatpush.msra.mxu0 0.0
    %1011 = vmatpush.msra.mxu0 0.0
    %1012 = vmatpush.msra.mxu0 0.0
    %1013 = vmatpush.msra.mxu0 0.0
    %1014 = vmatpush.msra.mxu0 0.0
    %1015 = vmatpush.msra.mxu0 0.0
    %v1016 = vand.u32 %v258, 4294901760
    %v1017 = vsub.f32 %v258, %v1016
    %v1018 = vand.u32 %v1017, 4294901760
    %v1019 = vsub.f32 %v1017, %v1018
    %v1020 = vand.u32 %v1019, 4294901760
    %1021 = vmatpush.msra.mxu0 %v1020
    %v1022 = vand.u32 %v973, 4294901760
    %1023 = vmatmul.f32.gmra.mxu0 %v1022
    %v1024 = vpop.f32.mrf.mxu0
    %v1025 = vadd.f32 %v999, %v1024
    %1026 = vdwg.mxu0
    %1027 = vmatpush.msra.mxu0 0.0
    %1028 = vmatpush.msra.mxu0 0.0
    %1029 = vmatpush.msra.mxu0 0.0
    %1030 = vmatpush.msra.mxu0 0.0
    %1031 = vmatpush.msra.mxu0 0.0
    %1032 = vmatpush.msra.mxu0 0.0
    %1033 = vmatpush.msra.mxu0 0.0
    %1034 = vmatpush.msra.mxu0 0.0
    %1035 = vmatpush.msra.mxu0 0.0
    %1036 = vmatpush.msra.mxu0 0.0
    %1037 = vmatpush.msra.mxu0 0.0
    %1038 = vmatpush.msra.mxu0 0.0
    %1039 = vmatpush.msra.mxu0 0.0
    %1040 = vmatpush.msra.mxu0 0.0
    %1041 = vmatpush.msra.mxu0 0.0
    %v1042 = vand.u32 %v258, 4294901760
    %v1043 = vsub.f32 %v258, %v1042
    %1044 = vmatpush.msra.mxu0 %v1043
    %v1045 = vand.u32 %v973, 4294901760
    %v1046 = vsub.f32 %v973, %v1045
    %1047 = vmatmul.f32.gmra.mxu0 %v1046
    %v1048 = vpop.f32.mrf.mxu0
    %v1049 = vadd.f32 %v1025, %v1048
    %1050 = vdwg.mxu0
    %1051 = vmatpush.msra.mxu0 0.0
    %1052 = vmatpush.msra.mxu0 0.0
    %1053 = vmatpush.msra.mxu0 0.0
    %1054 = vmatpush.msra.mxu0 0.0
    %1055 = vmatpush.msra.mxu0 0.0
    %1056 = vmatpush.msra.mxu0 0.0
    %1057 = vmatpush.msra.mxu0 0.0
    %1058 = vmatpush.msra.mxu0 0.0
    %1059 = vmatpush.msra.mxu0 0.0
    %1060 = vmatpush.msra.mxu0 0.0
    %1061 = vmatpush.msra.mxu0 0.0
    %1062 = vmatpush.msra.mxu0 0.0
    %1063 = vmatpush.msra.mxu0 0.0
    %1064 = vmatpush.msra.mxu0 0.0
    %1065 = vmatpush.msra.mxu0 0.0
    %v1066 = vand.u32 %v258, 4294901760
    %1067 = vmatpush.msra.mxu0 %v1066
    %v1068 = vand.u32 %v973, 4294901760
    %v1069 = vsub.f32 %v973, %v1068
    %v1070 = vand.u32 %v1069, 4294901760
    %1071 = vmatmul.f32.gmra.mxu0 %v1070
    %v1072 = vpop.f32.mrf.mxu0
    %v1073 = vadd.f32 %v1049, %v1072
    %1074 = vdwg.mxu0
    %1075 = vmatpush.msra.mxu0 0.0
    %1076 = vmatpush.msra.mxu0 0.0
    %1077 = vmatpush.msra.mxu0 0.0
    %1078 = vmatpush.msra.mxu0 0.0
    %1079 = vmatpush.msra.mxu0 0.0
    %1080 = vmatpush.msra.mxu0 0.0
    %1081 = vmatpush.msra.mxu0 0.0
    %1082 = vmatpush.msra.mxu0 0.0
    %1083 = vmatpush.msra.mxu0 0.0
    %1084 = vmatpush.msra.mxu0 0.0
    %1085 = vmatpush.msra.mxu0 0.0
    %1086 = vmatpush.msra.mxu0 0.0
    %1087 = vmatpush.msra.mxu0 0.0
    %1088 = vmatpush.msra.mxu0 0.0
    %1089 = vmatpush.msra.mxu0 0.0
    %v1090 = vand.u32 %v258, 4294901760
    %v1091 = vsub.f32 %v258, %v1090
    %v1092 = vand.u32 %v1091, 4294901760
    %1093 = vmatpush.msra.mxu0 %v1092
    %v1094 = vand.u32 %v973, 4294901760
    %1095 = vmatmul.f32.gmra.mxu0 %v1094
    %v1096 = vpop.f32.mrf.mxu0
    %v1097 = vadd.f32 %v1073, %v1096
    %1098 = vdwg.mxu0
    %1099 = vmatpush.msra.mxu0 0.0
    %1100 = vmatpush.msra.mxu0 0.0
    %1101 = vmatpush.msra.mxu0 0.0
    %1102 = vmatpush.msra.mxu0 0.0
    %1103 = vmatpush.msra.mxu0 0.0
    %1104 = vmatpush.msra.mxu0 0.0
    %1105 = vmatpush.msra.mxu0 0.0
    %1106 = vmatpush.msra.mxu0 0.0
    %1107 = vmatpush.msra.mxu0 0.0
    %1108 = vmatpush.msra.mxu0 0.0
    %1109 = vmatpush.msra.mxu0 0.0
    %1110 = vmatpush.msra.mxu0 0.0
    %1111 = vmatpush.msra.mxu0 0.0
    %1112 = vmatpush.msra.mxu0 0.0
    %1113 = vmatpush.msra.mxu0 0.0
    %v1114 = vand.u32 %v258, 4294901760
    %1115 = vmatpush.msra.mxu0 %v1114
    %v1116 = vand.u32 %v973, 4294901760
    %1117 = vmatmul.f32.gmra.mxu0 %v1116
    %v1118 = vpop.f32.mrf.mxu0
    %v1119 = vadd.f32 %v1097, %v1118
    %1120 = vdwg.mxu0
    %v1121 = vmul.f32 %v600, %v1119
    %vm1122 = vcmask 15360
    %v1124 = vsel %vm1122, %v214, 0
    %v1127 = vsel %vm1122, %v215, 0
    %vm1129 = vcmask 1041408
    %v1131 = vsel %vm1129, %v1121, 0
    %1133 = vmatpush.msra.mxu0 0.0
    %1134 = vmatpush.msra.mxu0 0.0
    %1135 = vmatpush.msra.mxu0 0.0
    %1136 = vmatpush.msra.mxu0 0.0
    %1137 = vmatpush.msra.mxu0 0.0
    %1138 = vmatpush.msra.mxu0 0.0
    %1139 = vmatpush.msra.mxu0 0.0
    %1140 = vmatpush.msra.mxu0 0.0
    %1141 = vmatpush.msra.mxu0 0.0
    %1142 = vmatpush.msra.mxu0 0.0
    %1143 = vmatpush.msra.mxu0 0.0
    %1144 = vmatpush.msra.mxu0 0.0
    %1145 = vmatpush.msra.mxu0 0.0
    %1146 = vmatpush.msra.mxu0 0.0
    %1147 = vmatpush.msra.mxu0 0.0
    %v1148 = vand.u32 %v1131, 4294901760
    %1149 = vmatpush.msra.mxu0 %v1148
    %v1150 = vand.u32 %v1124, 4294901760
    %v1151 = vsub.f32 %v1124, %v1150
    %v1152 = vand.u32 %v1151, 4294901760
    %v1153 = vsub.f32 %v1151, %v1152
    %v1154 = vand.u32 %v1153, 4294901760
    %1155 = vmatmul.f32.gmra.mxu0 %v1154
    %v1156 = vpop.f32.mrf.mxu0
    %v1157 = vadd.f32 0.0, %v1156
    %v1158 = vand.u32 %v1127, 4294901760
    %v1159 = vsub.f32 %v1127, %v1158
    %v1160 = vand.u32 %v1159, 4294901760
    %v1161 = vsub.f32 %v1159, %v1160
    %v1162 = vand.u32 %v1161, 4294901760
    %1163 = vmatmul.f32.gmra.mxu0 %v1162
    %v1164 = vpop.f32.mrf.mxu0
    %v1165 = vadd.f32 0.0, %v1164
    %1166 = vdwg.mxu0
    %1167 = vmatpush.msra.mxu0 0.0
    %1168 = vmatpush.msra.mxu0 0.0
    %1169 = vmatpush.msra.mxu0 0.0
    %1170 = vmatpush.msra.mxu0 0.0
    %1171 = vmatpush.msra.mxu0 0.0
    %1172 = vmatpush.msra.mxu0 0.0
    %1173 = vmatpush.msra.mxu0 0.0
    %1174 = vmatpush.msra.mxu0 0.0
    %1175 = vmatpush.msra.mxu0 0.0
    %1176 = vmatpush.msra.mxu0 0.0
    %1177 = vmatpush.msra.mxu0 0.0
    %1178 = vmatpush.msra.mxu0 0.0
    %1179 = vmatpush.msra.mxu0 0.0
    %1180 = vmatpush.msra.mxu0 0.0
    %1181 = vmatpush.msra.mxu0 0.0
    %v1182 = vand.u32 %v1131, 4294901760
    %v1183 = vsub.f32 %v1131, %v1182
    %v1184 = vand.u32 %v1183, 4294901760
    %v1185 = vsub.f32 %v1183, %v1184
    %v1186 = vand.u32 %v1185, 4294901760
    %1187 = vmatpush.msra.mxu0 %v1186
    %v1188 = vand.u32 %v1124, 4294901760
    %1189 = vmatmul.f32.gmra.mxu0 %v1188
    %v1190 = vpop.f32.mrf.mxu0
    %v1191 = vadd.f32 %v1157, %v1190
    %v1192 = vand.u32 %v1127, 4294901760
    %1193 = vmatmul.f32.gmra.mxu0 %v1192
    %v1194 = vpop.f32.mrf.mxu0
    %v1195 = vadd.f32 %v1165, %v1194
    %1196 = vdwg.mxu0
    %1197 = vmatpush.msra.mxu0 0.0
    %1198 = vmatpush.msra.mxu0 0.0
    %1199 = vmatpush.msra.mxu0 0.0
    %1200 = vmatpush.msra.mxu0 0.0
    %1201 = vmatpush.msra.mxu0 0.0
    %1202 = vmatpush.msra.mxu0 0.0
    %1203 = vmatpush.msra.mxu0 0.0
    %1204 = vmatpush.msra.mxu0 0.0
    %1205 = vmatpush.msra.mxu0 0.0
    %1206 = vmatpush.msra.mxu0 0.0
    %1207 = vmatpush.msra.mxu0 0.0
    %1208 = vmatpush.msra.mxu0 0.0
    %1209 = vmatpush.msra.mxu0 0.0
    %1210 = vmatpush.msra.mxu0 0.0
    %1211 = vmatpush.msra.mxu0 0.0
    %v1212 = vand.u32 %v1131, 4294901760
    %v1213 = vsub.f32 %v1131, %v1212
    %1214 = vmatpush.msra.mxu0 %v1213
    %v1215 = vand.u32 %v1124, 4294901760
    %v1216 = vsub.f32 %v1124, %v1215
    %1217 = vmatmul.f32.gmra.mxu0 %v1216
    %v1218 = vpop.f32.mrf.mxu0
    %v1219 = vadd.f32 %v1191, %v1218
    %v1220 = vand.u32 %v1127, 4294901760
    %v1221 = vsub.f32 %v1127, %v1220
    %1222 = vmatmul.f32.gmra.mxu0 %v1221
    %v1223 = vpop.f32.mrf.mxu0
    %v1224 = vadd.f32 %v1195, %v1223
    %1225 = vdwg.mxu0
    %1226 = vmatpush.msra.mxu0 0.0
    %1227 = vmatpush.msra.mxu0 0.0
    %1228 = vmatpush.msra.mxu0 0.0
    %1229 = vmatpush.msra.mxu0 0.0
    %1230 = vmatpush.msra.mxu0 0.0
    %1231 = vmatpush.msra.mxu0 0.0
    %1232 = vmatpush.msra.mxu0 0.0
    %1233 = vmatpush.msra.mxu0 0.0
    %1234 = vmatpush.msra.mxu0 0.0
    %1235 = vmatpush.msra.mxu0 0.0
    %1236 = vmatpush.msra.mxu0 0.0
    %1237 = vmatpush.msra.mxu0 0.0
    %1238 = vmatpush.msra.mxu0 0.0
    %1239 = vmatpush.msra.mxu0 0.0
    %1240 = vmatpush.msra.mxu0 0.0
    %v1241 = vand.u32 %v1131, 4294901760
    %1242 = vmatpush.msra.mxu0 %v1241
    %v1243 = vand.u32 %v1124, 4294901760
    %v1244 = vsub.f32 %v1124, %v1243
    %v1245 = vand.u32 %v1244, 4294901760
    %1246 = vmatmul.f32.gmra.mxu0 %v1245
    %v1247 = vpop.f32.mrf.mxu0
    %v1248 = vadd.f32 %v1219, %v1247
    %v1249 = vand.u32 %v1127, 4294901760
    %v1250 = vsub.f32 %v1127, %v1249
    %v1251 = vand.u32 %v1250, 4294901760
    %1252 = vmatmul.f32.gmra.mxu0 %v1251
    %v1253 = vpop.f32.mrf.mxu0
    %v1254 = vadd.f32 %v1224, %v1253
    %1255 = vdwg.mxu0
    %1256 = vmatpush.msra.mxu0 0.0
    %1257 = vmatpush.msra.mxu0 0.0
    %1258 = vmatpush.msra.mxu0 0.0
    %1259 = vmatpush.msra.mxu0 0.0
    %1260 = vmatpush.msra.mxu0 0.0
    %1261 = vmatpush.msra.mxu0 0.0
    %1262 = vmatpush.msra.mxu0 0.0
    %1263 = vmatpush.msra.mxu0 0.0
    %1264 = vmatpush.msra.mxu0 0.0
    %1265 = vmatpush.msra.mxu0 0.0
    %1266 = vmatpush.msra.mxu0 0.0
    %1267 = vmatpush.msra.mxu0 0.0
    %1268 = vmatpush.msra.mxu0 0.0
    %1269 = vmatpush.msra.mxu0 0.0
    %1270 = vmatpush.msra.mxu0 0.0
    %v1271 = vand.u32 %v1131, 4294901760
    %v1272 = vsub.f32 %v1131, %v1271
    %v1273 = vand.u32 %v1272, 4294901760
    %1274 = vmatpush.msra.mxu0 %v1273
    %v1275 = vand.u32 %v1124, 4294901760
    %1276 = vmatmul.f32.gmra.mxu0 %v1275
    %v1277 = vpop.f32.mrf.mxu0
    %v1278 = vadd.f32 %v1248, %v1277
    %v1279 = vand.u32 %v1127, 4294901760
    %1280 = vmatmul.f32.gmra.mxu0 %v1279
    %v1281 = vpop.f32.mrf.mxu0
    %v1282 = vadd.f32 %v1254, %v1281
    %1283 = vdwg.mxu0
    %1284 = vmatpush.msra.mxu0 0.0
    %1285 = vmatpush.msra.mxu0 0.0
    %1286 = vmatpush.msra.mxu0 0.0
    %1287 = vmatpush.msra.mxu0 0.0
    %1288 = vmatpush.msra.mxu0 0.0
    %1289 = vmatpush.msra.mxu0 0.0
    %1290 = vmatpush.msra.mxu0 0.0
    %1291 = vmatpush.msra.mxu0 0.0
    %1292 = vmatpush.msra.mxu0 0.0
    %1293 = vmatpush.msra.mxu0 0.0
    %1294 = vmatpush.msra.mxu0 0.0
    %1295 = vmatpush.msra.mxu0 0.0
    %1296 = vmatpush.msra.mxu0 0.0
    %1297 = vmatpush.msra.mxu0 0.0
    %1298 = vmatpush.msra.mxu0 0.0
    %v1299 = vand.u32 %v1131, 4294901760
    %1300 = vmatpush.msra.mxu0 %v1299
    %v1301 = vand.u32 %v1124, 4294901760
    %1302 = vmatmul.f32.gmra.mxu0 %v1301
    %v1303 = vpop.f32.mrf.mxu0
    %v1304 = vadd.f32 %v1278, %v1303
    %v1305 = vand.u32 %v1127, 4294901760
    %1306 = vmatmul.f32.gmra.mxu0 %v1305
    %v1307 = vpop.f32.mrf.mxu0
    %v1308 = vadd.f32 %v1282, %v1307
    %1309 = vdwg.mxu0
    %v1310 = vmul.f32 %v192, %v1304
    %v1311 = vmul.f32 %v195, %v1308
    %v1312 = vand.u32 %v213, 4294901760
    %1313 = vmatpush.msra.mxu0 %v1312
    %v1314 = vand.u32 %v212, 4294901760
    %1315 = vmatpush.msra.mxu0 %v1314
    %v1316 = vand.u32 %v211, 4294901760
    %1317 = vmatpush.msra.mxu0 %v1316
    %v1318 = vand.u32 %v210, 4294901760
    %1319 = vmatpush.msra.mxu0 %v1318
    %v1320 = vand.u32 %v209, 4294901760
    %1321 = vmatpush.msra.mxu0 %v1320
    %v1322 = vand.u32 %v208, 4294901760
    %1323 = vmatpush.msra.mxu0 %v1322
    %v1324 = vand.u32 %v207, 4294901760
    %1325 = vmatpush.msra.mxu0 %v1324
    %v1326 = vand.u32 %v206, 4294901760
    %1327 = vmatpush.msra.mxu0 %v1326
    %v1328 = vand.u32 %v205, 4294901760
    %1329 = vmatpush.msra.mxu0 %v1328
    %v1330 = vand.u32 %v204, 4294901760
    %1331 = vmatpush.msra.mxu0 %v1330
    %v1332 = vand.u32 %v203, 4294901760
    %1333 = vmatpush.msra.mxu0 %v1332
    %v1334 = vand.u32 %v202, 4294901760
    %1335 = vmatpush.msra.mxu0 %v1334
    %v1336 = vand.u32 %v201, 4294901760
    %1337 = vmatpush.msra.mxu0 %v1336
    %v1338 = vand.u32 %v200, 4294901760
    %1339 = vmatpush.msra.mxu0 %v1338
    %v1340 = vand.u32 %v199, 4294901760
    %1341 = vmatpush.msra.mxu0 %v1340
    %v1342 = vand.u32 %v198, 4294901760
    %1343 = vmatpush.msra.mxu0 %v1342
    %v1344 = vand.u32 %v1310, 4294901760
    %v1345 = vsub.f32 %v1310, %v1344
    %v1346 = vand.u32 %v1345, 4294901760
    %v1347 = vsub.f32 %v1345, %v1346
    %v1348 = vand.u32 %v1347, 4294901760
    %1349 = vmatmul.f32.gmra.mxu0 %v1348
    %v1350 = vpop.f32.mrf.mxu0
    %v1351 = vadd.f32 0.0, %v1350
    %v1352 = vand.u32 %v1311, 4294901760
    %v1353 = vsub.f32 %v1311, %v1352
    %v1354 = vand.u32 %v1353, 4294901760
    %v1355 = vsub.f32 %v1353, %v1354
    %v1356 = vand.u32 %v1355, 4294901760
    %1357 = vmatmul.f32.gmra.mxu0 %v1356
    %v1358 = vpop.f32.mrf.mxu0
    %v1359 = vadd.f32 0.0, %v1358
    %1360 = vdwg.mxu0
    %v1361 = vand.u32 %v213, 4294901760
    %v1362 = vsub.f32 %v213, %v1361
    %v1363 = vand.u32 %v1362, 4294901760
    %v1364 = vsub.f32 %v1362, %v1363
    %v1365 = vand.u32 %v1364, 4294901760
    %1366 = vmatpush.msra.mxu0 %v1365
    %v1367 = vand.u32 %v212, 4294901760
    %v1368 = vsub.f32 %v212, %v1367
    %v1369 = vand.u32 %v1368, 4294901760
    %v1370 = vsub.f32 %v1368, %v1369
    %v1371 = vand.u32 %v1370, 4294901760
    %1372 = vmatpush.msra.mxu0 %v1371
    %v1373 = vand.u32 %v211, 4294901760
    %v1374 = vsub.f32 %v211, %v1373
    %v1375 = vand.u32 %v1374, 4294901760
    %v1376 = vsub.f32 %v1374, %v1375
    %v1377 = vand.u32 %v1376, 4294901760
    %1378 = vmatpush.msra.mxu0 %v1377
    %v1379 = vand.u32 %v210, 4294901760
    %v1380 = vsub.f32 %v210, %v1379
    %v1381 = vand.u32 %v1380, 4294901760
    %v1382 = vsub.f32 %v1380, %v1381
    %v1383 = vand.u32 %v1382, 4294901760
    %1384 = vmatpush.msra.mxu0 %v1383
    %v1385 = vand.u32 %v209, 4294901760
    %v1386 = vsub.f32 %v209, %v1385
    %v1387 = vand.u32 %v1386, 4294901760
    %v1388 = vsub.f32 %v1386, %v1387
    %v1389 = vand.u32 %v1388, 4294901760
    %1390 = vmatpush.msra.mxu0 %v1389
    %v1391 = vand.u32 %v208, 4294901760
    %v1392 = vsub.f32 %v208, %v1391
    %v1393 = vand.u32 %v1392, 4294901760
    %v1394 = vsub.f32 %v1392, %v1393
    %v1395 = vand.u32 %v1394, 4294901760
    %1396 = vmatpush.msra.mxu0 %v1395
    %v1397 = vand.u32 %v207, 4294901760
    %v1398 = vsub.f32 %v207, %v1397
    %v1399 = vand.u32 %v1398, 4294901760
    %v1400 = vsub.f32 %v1398, %v1399
    %v1401 = vand.u32 %v1400, 4294901760
    %1402 = vmatpush.msra.mxu0 %v1401
    %v1403 = vand.u32 %v206, 4294901760
    %v1404 = vsub.f32 %v206, %v1403
    %v1405 = vand.u32 %v1404, 4294901760
    %v1406 = vsub.f32 %v1404, %v1405
    %v1407 = vand.u32 %v1406, 4294901760
    %1408 = vmatpush.msra.mxu0 %v1407
    %v1409 = vand.u32 %v205, 4294901760
    %v1410 = vsub.f32 %v205, %v1409
    %v1411 = vand.u32 %v1410, 4294901760
    %v1412 = vsub.f32 %v1410, %v1411
    %v1413 = vand.u32 %v1412, 4294901760
    %1414 = vmatpush.msra.mxu0 %v1413
    %v1415 = vand.u32 %v204, 4294901760
    %v1416 = vsub.f32 %v204, %v1415
    %v1417 = vand.u32 %v1416, 4294901760
    %v1418 = vsub.f32 %v1416, %v1417
    %v1419 = vand.u32 %v1418, 4294901760
    %1420 = vmatpush.msra.mxu0 %v1419
    %v1421 = vand.u32 %v203, 4294901760
    %v1422 = vsub.f32 %v203, %v1421
    %v1423 = vand.u32 %v1422, 4294901760
    %v1424 = vsub.f32 %v1422, %v1423
    %v1425 = vand.u32 %v1424, 4294901760
    %1426 = vmatpush.msra.mxu0 %v1425
    %v1427 = vand.u32 %v202, 4294901760
    %v1428 = vsub.f32 %v202, %v1427
    %v1429 = vand.u32 %v1428, 4294901760
    %v1430 = vsub.f32 %v1428, %v1429
    %v1431 = vand.u32 %v1430, 4294901760
    %1432 = vmatpush.msra.mxu0 %v1431
    %v1433 = vand.u32 %v201, 4294901760
    %v1434 = vsub.f32 %v201, %v1433
    %v1435 = vand.u32 %v1434, 4294901760
    %v1436 = vsub.f32 %v1434, %v1435
    %v1437 = vand.u32 %v1436, 4294901760
    %1438 = vmatpush.msra.mxu0 %v1437
    %v1439 = vand.u32 %v200, 4294901760
    %v1440 = vsub.f32 %v200, %v1439
    %v1441 = vand.u32 %v1440, 4294901760
    %v1442 = vsub.f32 %v1440, %v1441
    %v1443 = vand.u32 %v1442, 4294901760
    %1444 = vmatpush.msra.mxu0 %v1443
    %v1445 = vand.u32 %v199, 4294901760
    %v1446 = vsub.f32 %v199, %v1445
    %v1447 = vand.u32 %v1446, 4294901760
    %v1448 = vsub.f32 %v1446, %v1447
    %v1449 = vand.u32 %v1448, 4294901760
    %1450 = vmatpush.msra.mxu0 %v1449
    %v1451 = vand.u32 %v198, 4294901760
    %v1452 = vsub.f32 %v198, %v1451
    %v1453 = vand.u32 %v1452, 4294901760
    %v1454 = vsub.f32 %v1452, %v1453
    %v1455 = vand.u32 %v1454, 4294901760
    %1456 = vmatpush.msra.mxu0 %v1455
    %v1457 = vand.u32 %v1310, 4294901760
    %1458 = vmatmul.f32.gmra.mxu0 %v1457
    %v1459 = vpop.f32.mrf.mxu0
    %v1460 = vadd.f32 %v1351, %v1459
    %v1461 = vand.u32 %v1311, 4294901760
    %1462 = vmatmul.f32.gmra.mxu0 %v1461
    %v1463 = vpop.f32.mrf.mxu0
    %v1464 = vadd.f32 %v1359, %v1463
    %1465 = vdwg.mxu0
    %v1466 = vand.u32 %v213, 4294901760
    %v1467 = vsub.f32 %v213, %v1466
    %1468 = vmatpush.msra.mxu0 %v1467
    %v1469 = vand.u32 %v212, 4294901760
    %v1470 = vsub.f32 %v212, %v1469
    %1471 = vmatpush.msra.mxu0 %v1470
    %v1472 = vand.u32 %v211, 4294901760
    %v1473 = vsub.f32 %v211, %v1472
    %1474 = vmatpush.msra.mxu0 %v1473
    %v1475 = vand.u32 %v210, 4294901760
    %v1476 = vsub.f32 %v210, %v1475
    %1477 = vmatpush.msra.mxu0 %v1476
    %v1478 = vand.u32 %v209, 4294901760
    %v1479 = vsub.f32 %v209, %v1478
    %1480 = vmatpush.msra.mxu0 %v1479
    %v1481 = vand.u32 %v208, 4294901760
    %v1482 = vsub.f32 %v208, %v1481
    %1483 = vmatpush.msra.mxu0 %v1482
    %v1484 = vand.u32 %v207, 4294901760
    %v1485 = vsub.f32 %v207, %v1484
    %1486 = vmatpush.msra.mxu0 %v1485
    %v1487 = vand.u32 %v206, 4294901760
    %v1488 = vsub.f32 %v206, %v1487
    %1489 = vmatpush.msra.mxu0 %v1488
    %v1490 = vand.u32 %v205, 4294901760
    %v1491 = vsub.f32 %v205, %v1490
    %1492 = vmatpush.msra.mxu0 %v1491
    %v1493 = vand.u32 %v204, 4294901760
    %v1494 = vsub.f32 %v204, %v1493
    %1495 = vmatpush.msra.mxu0 %v1494
    %v1496 = vand.u32 %v203, 4294901760
    %v1497 = vsub.f32 %v203, %v1496
    %1498 = vmatpush.msra.mxu0 %v1497
    %v1499 = vand.u32 %v202, 4294901760
    %v1500 = vsub.f32 %v202, %v1499
    %1501 = vmatpush.msra.mxu0 %v1500
    %v1502 = vand.u32 %v201, 4294901760
    %v1503 = vsub.f32 %v201, %v1502
    %1504 = vmatpush.msra.mxu0 %v1503
    %v1505 = vand.u32 %v200, 4294901760
    %v1506 = vsub.f32 %v200, %v1505
    %1507 = vmatpush.msra.mxu0 %v1506
    %v1508 = vand.u32 %v199, 4294901760
    %v1509 = vsub.f32 %v199, %v1508
    %1510 = vmatpush.msra.mxu0 %v1509
    %v1511 = vand.u32 %v198, 4294901760
    %v1512 = vsub.f32 %v198, %v1511
    %1513 = vmatpush.msra.mxu0 %v1512
    %v1514 = vand.u32 %v1310, 4294901760
    %v1515 = vsub.f32 %v1310, %v1514
    %1516 = vmatmul.f32.gmra.mxu0 %v1515
    %v1517 = vpop.f32.mrf.mxu0
    %v1518 = vadd.f32 %v1460, %v1517
    %v1519 = vand.u32 %v1311, 4294901760
    %v1520 = vsub.f32 %v1311, %v1519
    %1521 = vmatmul.f32.gmra.mxu0 %v1520
    %v1522 = vpop.f32.mrf.mxu0
    %v1523 = vadd.f32 %v1464, %v1522
    %1524 = vdwg.mxu0
    %v1525 = vand.u32 %v213, 4294901760
    %1526 = vmatpush.msra.mxu0 %v1525
    %v1527 = vand.u32 %v212, 4294901760
    %1528 = vmatpush.msra.mxu0 %v1527
    %v1529 = vand.u32 %v211, 4294901760
    %1530 = vmatpush.msra.mxu0 %v1529
    %v1531 = vand.u32 %v210, 4294901760
    %1532 = vmatpush.msra.mxu0 %v1531
    %v1533 = vand.u32 %v209, 4294901760
    %1534 = vmatpush.msra.mxu0 %v1533
    %v1535 = vand.u32 %v208, 4294901760
    %1536 = vmatpush.msra.mxu0 %v1535
    %v1537 = vand.u32 %v207, 4294901760
    %1538 = vmatpush.msra.mxu0 %v1537
    %v1539 = vand.u32 %v206, 4294901760
    %1540 = vmatpush.msra.mxu0 %v1539
    %v1541 = vand.u32 %v205, 4294901760
    %1542 = vmatpush.msra.mxu0 %v1541
    %v1543 = vand.u32 %v204, 4294901760
    %1544 = vmatpush.msra.mxu0 %v1543
    %v1545 = vand.u32 %v203, 4294901760
    %1546 = vmatpush.msra.mxu0 %v1545
    %v1547 = vand.u32 %v202, 4294901760
    %1548 = vmatpush.msra.mxu0 %v1547
    %v1549 = vand.u32 %v201, 4294901760
    %1550 = vmatpush.msra.mxu0 %v1549
    %v1551 = vand.u32 %v200, 4294901760
    %1552 = vmatpush.msra.mxu0 %v1551
    %v1553 = vand.u32 %v199, 4294901760
    %1554 = vmatpush.msra.mxu0 %v1553
    %v1555 = vand.u32 %v198, 4294901760
    %1556 = vmatpush.msra.mxu0 %v1555
    %v1557 = vand.u32 %v1310, 4294901760
    %v1558 = vsub.f32 %v1310, %v1557
    %v1559 = vand.u32 %v1558, 4294901760
    %1560 = vmatmul.f32.gmra.mxu0 %v1559
    %v1561 = vpop.f32.mrf.mxu0
    %v1562 = vadd.f32 %v1518, %v1561
    %v1563 = vand.u32 %v1311, 4294901760
    %v1564 = vsub.f32 %v1311, %v1563
    %v1565 = vand.u32 %v1564, 4294901760
    %1566 = vmatmul.f32.gmra.mxu0 %v1565
    %v1567 = vpop.f32.mrf.mxu0
    %v1568 = vadd.f32 %v1523, %v1567
    %1569 = vdwg.mxu0
    %v1570 = vand.u32 %v213, 4294901760
    %v1571 = vsub.f32 %v213, %v1570
    %v1572 = vand.u32 %v1571, 4294901760
    %1573 = vmatpush.msra.mxu0 %v1572
    %v1574 = vand.u32 %v212, 4294901760
    %v1575 = vsub.f32 %v212, %v1574
    %v1576 = vand.u32 %v1575, 4294901760
    %1577 = vmatpush.msra.mxu0 %v1576
    %v1578 = vand.u32 %v211, 4294901760
    %v1579 = vsub.f32 %v211, %v1578
    %v1580 = vand.u32 %v1579, 4294901760
    %1581 = vmatpush.msra.mxu0 %v1580
    %v1582 = vand.u32 %v210, 4294901760
    %v1583 = vsub.f32 %v210, %v1582
    %v1584 = vand.u32 %v1583, 4294901760
    %1585 = vmatpush.msra.mxu0 %v1584
    %v1586 = vand.u32 %v209, 4294901760
    %v1587 = vsub.f32 %v209, %v1586
    %v1588 = vand.u32 %v1587, 4294901760
    %1589 = vmatpush.msra.mxu0 %v1588
    %v1590 = vand.u32 %v208, 4294901760
    %v1591 = vsub.f32 %v208, %v1590
    %v1592 = vand.u32 %v1591, 4294901760
    %1593 = vmatpush.msra.mxu0 %v1592
    %v1594 = vand.u32 %v207, 4294901760
    %v1595 = vsub.f32 %v207, %v1594
    %v1596 = vand.u32 %v1595, 4294901760
    %1597 = vmatpush.msra.mxu0 %v1596
    %v1598 = vand.u32 %v206, 4294901760
    %v1599 = vsub.f32 %v206, %v1598
    %v1600 = vand.u32 %v1599, 4294901760
    %1601 = vmatpush.msra.mxu0 %v1600
    %v1602 = vand.u32 %v205, 4294901760
    %v1603 = vsub.f32 %v205, %v1602
    %v1604 = vand.u32 %v1603, 4294901760
    %1605 = vmatpush.msra.mxu0 %v1604
    %v1606 = vand.u32 %v204, 4294901760
    %v1607 = vsub.f32 %v204, %v1606
    %v1608 = vand.u32 %v1607, 4294901760
    %1609 = vmatpush.msra.mxu0 %v1608
    %v1610 = vand.u32 %v203, 4294901760
    %v1611 = vsub.f32 %v203, %v1610
    %v1612 = vand.u32 %v1611, 4294901760
    %1613 = vmatpush.msra.mxu0 %v1612
    %v1614 = vand.u32 %v202, 4294901760
    %v1615 = vsub.f32 %v202, %v1614
    %v1616 = vand.u32 %v1615, 4294901760
    %1617 = vmatpush.msra.mxu0 %v1616
    %v1618 = vand.u32 %v201, 4294901760
    %v1619 = vsub.f32 %v201, %v1618
    %v1620 = vand.u32 %v1619, 4294901760
    %1621 = vmatpush.msra.mxu0 %v1620
    %v1622 = vand.u32 %v200, 4294901760
    %v1623 = vsub.f32 %v200, %v1622
    %v1624 = vand.u32 %v1623, 4294901760
    %1625 = vmatpush.msra.mxu0 %v1624
    %v1626 = vand.u32 %v199, 4294901760
    %v1627 = vsub.f32 %v199, %v1626
    %v1628 = vand.u32 %v1627, 4294901760
    %1629 = vmatpush.msra.mxu0 %v1628
    %v1630 = vand.u32 %v198, 4294901760
    %v1631 = vsub.f32 %v198, %v1630
    %v1632 = vand.u32 %v1631, 4294901760
    %1633 = vmatpush.msra.mxu0 %v1632
    %v1634 = vand.u32 %v1310, 4294901760
    %1635 = vmatmul.f32.gmra.mxu0 %v1634
    %v1636 = vpop.f32.mrf.mxu0
    %v1637 = vadd.f32 %v1562, %v1636
    %v1638 = vand.u32 %v1311, 4294901760
    %1639 = vmatmul.f32.gmra.mxu0 %v1638
    %v1640 = vpop.f32.mrf.mxu0
    %v1641 = vadd.f32 %v1568, %v1640
    %1642 = vdwg.mxu0
    %v1643 = vand.u32 %v213, 4294901760
    %1644 = vmatpush.msra.mxu0 %v1643
    %v1645 = vand.u32 %v212, 4294901760
    %1646 = vmatpush.msra.mxu0 %v1645
    %v1647 = vand.u32 %v211, 4294901760
    %1648 = vmatpush.msra.mxu0 %v1647
    %v1649 = vand.u32 %v210, 4294901760
    %1650 = vmatpush.msra.mxu0 %v1649
    %v1651 = vand.u32 %v209, 4294901760
    %1652 = vmatpush.msra.mxu0 %v1651
    %v1653 = vand.u32 %v208, 4294901760
    %1654 = vmatpush.msra.mxu0 %v1653
    %v1655 = vand.u32 %v207, 4294901760
    %1656 = vmatpush.msra.mxu0 %v1655
    %v1657 = vand.u32 %v206, 4294901760
    %1658 = vmatpush.msra.mxu0 %v1657
    %v1659 = vand.u32 %v205, 4294901760
    %1660 = vmatpush.msra.mxu0 %v1659
    %v1661 = vand.u32 %v204, 4294901760
    %1662 = vmatpush.msra.mxu0 %v1661
    %v1663 = vand.u32 %v203, 4294901760
    %1664 = vmatpush.msra.mxu0 %v1663
    %v1665 = vand.u32 %v202, 4294901760
    %1666 = vmatpush.msra.mxu0 %v1665
    %v1667 = vand.u32 %v201, 4294901760
    %1668 = vmatpush.msra.mxu0 %v1667
    %v1669 = vand.u32 %v200, 4294901760
    %1670 = vmatpush.msra.mxu0 %v1669
    %v1671 = vand.u32 %v199, 4294901760
    %1672 = vmatpush.msra.mxu0 %v1671
    %v1673 = vand.u32 %v198, 4294901760
    %1674 = vmatpush.msra.mxu0 %v1673
    %v1675 = vand.u32 %v1310, 4294901760
    %1676 = vmatmul.f32.gmra.mxu0 %v1675
    %v1677 = vpop.f32.mrf.mxu0
    %v1678 = vadd.f32 %v1637, %v1677
    %v1679 = vand.u32 %v1311, 4294901760
    %1680 = vmatmul.f32.gmra.mxu0 %v1679
    %v1681 = vpop.f32.mrf.mxu0
    %v1682 = vadd.f32 %v1641, %v1681
    %1683 = vdwg.mxu0
    %v1684 = vsel %vm229, %v1678, -inf
    %1685 = vmax.xlane.f32.xlu0 %v1684
    %v1686 = vpop.xlane.xlu0 %1685
    %v1687 = vsel %vm229, %v1682, -inf
    %1688 = vmax.xlane.f32.xlu0 %v1687
    %v1689 = vpop.xlane.xlu0 %1688
    %v1690 = vsub.f32 %v1678, %v1686
    %v1691 = vsub.f32 %v1682, %v1689
    %v1692 = vmul.f32 %v1690, 1.442695
    %v1693 = vpow.pop %v1692
    %v1694 = vmul.f32 %v1691, 1.442695
    %v1695 = vpow.pop %v1694
    %v1696 = vsel %vm229, %v1693, 0.0
    %1697 = vadd.xlane.f32.xlu0 %v1696
    %v1698 = vpop.xlane.xlu0 %1697
    %v1699 = vsel %vm229, %v1695, 0.0
    %1700 = vadd.xlane.f32.xlu0 %v1699
    %v1701 = vpop.xlane.xlu0 %1700
    %v1702 = vrcp.pop %v1698
    %v1703 = vmul.f32 %v1698, %v1702
    %v1704 = vsub.f32 1.0, %v1703
    %v1705 = vmul.f32 %v1702, %v1704
    %v1706 = vadd.f32 %v1702, %v1705
    %vm1707 = vweird.f32 %v1698
    %vm1708 = vweird.f32 %v1702
    %vm1709 = vmor %vm1707, %vm1708
    %v1710 = vsel %vm1709, %v1702, %v1706
    %v1711 = vand.u32 2147483647, %v1698
    %vm1712 = vcmp.eq.f32.partialorder %v1711, 8.507059e+37
    %v1713 = vand.u32 %v1698, 2147483648
    %v1714 = vor.u32 1.1754944e-38, %v1713
    %v1715 = vsel %vm1712, %v1714, %v1710
    %v1716 = vmul.f32 %v1693, %v1715
    %v1717 = vrcp.pop %v1701
    %v1718 = vmul.f32 %v1701, %v1717
    %v1719 = vsub.f32 1.0, %v1718
    %v1720 = vmul.f32 %v1717, %v1719
    %v1721 = vadd.f32 %v1717, %v1720
    %vm1722 = vweird.f32 %v1701
    %vm1723 = vweird.f32 %v1717
    %vm1724 = vmor %vm1722, %vm1723
    %v1725 = vsel %vm1724, %v1717, %v1721
    %v1726 = vand.u32 2147483647, %v1701
    %vm1727 = vcmp.eq.f32.partialorder %v1726, 8.507059e+37
    %v1728 = vand.u32 %v1701, 2147483648
    %v1729 = vor.u32 1.1754944e-38, %v1728
    %v1730 = vsel %vm1727, %v1729, %v1725
    %v1731 = vmul.f32 %v1695, %v1730
    %v1732 = vmul.f32 %v1716, %v222
    %v1733 = vmul.f32 %v1731, %v227
    %v1735 = vsel %vm229, %v1732, 0
    %v1738 = vsel %vm229, %v1733, 0
    %1740 = vmatpush.msra.mxu0 0.0
    %1741 = vmatpush.msra.mxu0 0.0
    %1742 = vmatpush.msra.mxu0 0.0
    %1743 = vmatpush.msra.mxu0 0.0
    %1744 = vmatpush.msra.mxu0 0.0
    %1745 = vmatpush.msra.mxu0 0.0
    %1746 = vmatpush.msra.mxu0 0.0
    %1747 = vmatpush.msra.mxu0 0.0
    %1748 = vmatpush.msra.mxu0 0.0
    %1749 = vmatpush.msra.mxu0 0.0
    %1750 = vmatpush.msra.mxu0 0.0
    %1751 = vmatpush.msra.mxu0 0.0
    %1752 = vmatpush.msra.mxu0 0.0
    %1753 = vmatpush.msra.mxu0 0.0
    %1754 = vmatpush.msra.mxu0 0.0
    %v1755 = vand.u32 %v258, 4294901760
    %1756 = vmatpush.msra.mxu0 %v1755
    %v1757 = vand.u32 %v1735, 4294901760
    %v1758 = vsub.f32 %v1735, %v1757
    %v1759 = vand.u32 %v1758, 4294901760
    %v1760 = vsub.f32 %v1758, %v1759
    %v1761 = vand.u32 %v1760, 4294901760
    %1762 = vmatmul.f32.gmra.mxu0 %v1761
    %v1763 = vpop.f32.mrf.mxu0
    %v1764 = vadd.f32 0.0, %v1763
    %v1765 = vand.u32 %v1738, 4294901760
    %v1766 = vsub.f32 %v1738, %v1765
    %v1767 = vand.u32 %v1766, 4294901760
    %v1768 = vsub.f32 %v1766, %v1767
    %v1769 = vand.u32 %v1768, 4294901760
    %1770 = vmatmul.f32.gmra.mxu0 %v1769
    %v1771 = vpop.f32.mrf.mxu0
    %v1772 = vadd.f32 0.0, %v1771
    %1773 = vdwg.mxu0
    %1774 = vmatpush.msra.mxu0 0.0
    %1775 = vmatpush.msra.mxu0 0.0
    %1776 = vmatpush.msra.mxu0 0.0
    %1777 = vmatpush.msra.mxu0 0.0
    %1778 = vmatpush.msra.mxu0 0.0
    %1779 = vmatpush.msra.mxu0 0.0
    %1780 = vmatpush.msra.mxu0 0.0
    %1781 = vmatpush.msra.mxu0 0.0
    %1782 = vmatpush.msra.mxu0 0.0
    %1783 = vmatpush.msra.mxu0 0.0
    %1784 = vmatpush.msra.mxu0 0.0
    %1785 = vmatpush.msra.mxu0 0.0
    %1786 = vmatpush.msra.mxu0 0.0
    %1787 = vmatpush.msra.mxu0 0.0
    %1788 = vmatpush.msra.mxu0 0.0
    %v1789 = vand.u32 %v258, 4294901760
    %v1790 = vsub.f32 %v258, %v1789
    %v1791 = vand.u32 %v1790, 4294901760
    %v1792 = vsub.f32 %v1790, %v1791
    %v1793 = vand.u32 %v1792, 4294901760
    %1794 = vmatpush.msra.mxu0 %v1793
    %v1795 = vand.u32 %v1735, 4294901760
    %1796 = vmatmul.f32.gmra.mxu0 %v1795
    %v1797 = vpop.f32.mrf.mxu0
    %v1798 = vadd.f32 %v1764, %v1797
    %v1799 = vand.u32 %v1738, 4294901760
    %1800 = vmatmul.f32.gmra.mxu0 %v1799
    %v1801 = vpop.f32.mrf.mxu0
    %v1802 = vadd.f32 %v1772, %v1801
    %1803 = vdwg.mxu0
    %1804 = vmatpush.msra.mxu0 0.0
    %1805 = vmatpush.msra.mxu0 0.0
    %1806 = vmatpush.msra.mxu0 0.0
    %1807 = vmatpush.msra.mxu0 0.0
    %1808 = vmatpush.msra.mxu0 0.0
    %1809 = vmatpush.msra.mxu0 0.0
    %1810 = vmatpush.msra.mxu0 0.0
    %1811 = vmatpush.msra.mxu0 0.0
    %1812 = vmatpush.msra.mxu0 0.0
    %1813 = vmatpush.msra.mxu0 0.0
    %1814 = vmatpush.msra.mxu0 0.0
    %1815 = vmatpush.msra.mxu0 0.0
    %1816 = vmatpush.msra.mxu0 0.0
    %1817 = vmatpush.msra.mxu0 0.0
    %1818 = vmatpush.msra.mxu0 0.0
    %v1819 = vand.u32 %v258, 4294901760
    %v1820 = vsub.f32 %v258, %v1819
    %1821 = vmatpush.msra.mxu0 %v1820
    %v1822 = vand.u32 %v1735, 4294901760
    %v1823 = vsub.f32 %v1735, %v1822
    %1824 = vmatmul.f32.gmra.mxu0 %v1823
    %v1825 = vpop.f32.mrf.mxu0
    %v1826 = vadd.f32 %v1798, %v1825
    %v1827 = vand.u32 %v1738, 4294901760
    %v1828 = vsub.f32 %v1738, %v1827
    %1829 = vmatmul.f32.gmra.mxu0 %v1828
    %v1830 = vpop.f32.mrf.mxu0
    %v1831 = vadd.f32 %v1802, %v1830
    %1832 = vdwg.mxu0
    %1833 = vmatpush.msra.mxu0 0.0
    %1834 = vmatpush.msra.mxu0 0.0
    %1835 = vmatpush.msra.mxu0 0.0
    %1836 = vmatpush.msra.mxu0 0.0
    %1837 = vmatpush.msra.mxu0 0.0
    %1838 = vmatpush.msra.mxu0 0.0
    %1839 = vmatpush.msra.mxu0 0.0
    %1840 = vmatpush.msra.mxu0 0.0
    %1841 = vmatpush.msra.mxu0 0.0
    %1842 = vmatpush.msra.mxu0 0.0
    %1843 = vmatpush.msra.mxu0 0.0
    %1844 = vmatpush.msra.mxu0 0.0
    %1845 = vmatpush.msra.mxu0 0.0
    %1846 = vmatpush.msra.mxu0 0.0
    %1847 = vmatpush.msra.mxu0 0.0
    %v1848 = vand.u32 %v258, 4294901760
    %1849 = vmatpush.msra.mxu0 %v1848
    %v1850 = vand.u32 %v1735, 4294901760
    %v1851 = vsub.f32 %v1735, %v1850
    %v1852 = vand.u32 %v1851, 4294901760
    %1853 = vmatmul.f32.gmra.mxu0 %v1852
    %v1854 = vpop.f32.mrf.mxu0
    %v1855 = vadd.f32 %v1826, %v1854
    %v1856 = vand.u32 %v1738, 4294901760
    %v1857 = vsub.f32 %v1738, %v1856
    %v1858 = vand.u32 %v1857, 4294901760
    %1859 = vmatmul.f32.gmra.mxu0 %v1858
    %v1860 = vpop.f32.mrf.mxu0
    %v1861 = vadd.f32 %v1831, %v1860
    %1862 = vdwg.mxu0
    %1863 = vmatpush.msra.mxu0 0.0
    %1864 = vmatpush.msra.mxu0 0.0
    %1865 = vmatpush.msra.mxu0 0.0
    %1866 = vmatpush.msra.mxu0 0.0
    %1867 = vmatpush.msra.mxu0 0.0
    %1868 = vmatpush.msra.mxu0 0.0
    %1869 = vmatpush.msra.mxu0 0.0
    %1870 = vmatpush.msra.mxu0 0.0
    %1871 = vmatpush.msra.mxu0 0.0
    %1872 = vmatpush.msra.mxu0 0.0
    %1873 = vmatpush.msra.mxu0 0.0
    %1874 = vmatpush.msra.mxu0 0.0
    %1875 = vmatpush.msra.mxu0 0.0
    %1876 = vmatpush.msra.mxu0 0.0
    %1877 = vmatpush.msra.mxu0 0.0
    %v1878 = vand.u32 %v258, 4294901760
    %v1879 = vsub.f32 %v258, %v1878
    %v1880 = vand.u32 %v1879, 4294901760
    %1881 = vmatpush.msra.mxu0 %v1880
    %v1882 = vand.u32 %v1735, 4294901760
    %1883 = vmatmul.f32.gmra.mxu0 %v1882
    %v1884 = vpop.f32.mrf.mxu0
    %v1885 = vadd.f32 %v1855, %v1884
    %v1886 = vand.u32 %v1738, 4294901760
    %1887 = vmatmul.f32.gmra.mxu0 %v1886
    %v1888 = vpop.f32.mrf.mxu0
    %v1889 = vadd.f32 %v1861, %v1888
    %1890 = vdwg.mxu0
    %1891 = vmatpush.msra.mxu0 0.0
    %1892 = vmatpush.msra.mxu0 0.0
    %1893 = vmatpush.msra.mxu0 0.0
    %1894 = vmatpush.msra.mxu0 0.0
    %1895 = vmatpush.msra.mxu0 0.0
    %1896 = vmatpush.msra.mxu0 0.0
    %1897 = vmatpush.msra.mxu0 0.0
    %1898 = vmatpush.msra.mxu0 0.0
    %1899 = vmatpush.msra.mxu0 0.0
    %1900 = vmatpush.msra.mxu0 0.0
    %1901 = vmatpush.msra.mxu0 0.0
    %1902 = vmatpush.msra.mxu0 0.0
    %1903 = vmatpush.msra.mxu0 0.0
    %1904 = vmatpush.msra.mxu0 0.0
    %1905 = vmatpush.msra.mxu0 0.0
    %v1906 = vand.u32 %v258, 4294901760
    %1907 = vmatpush.msra.mxu0 %v1906
    %v1908 = vand.u32 %v1735, 4294901760
    %1909 = vmatmul.f32.gmra.mxu0 %v1908
    %v1910 = vpop.f32.mrf.mxu0
    %v1911 = vadd.f32 %v1885, %v1910
    %v1912 = vand.u32 %v1738, 4294901760
    %1913 = vmatmul.f32.gmra.mxu0 %v1912
    %v1914 = vpop.f32.mrf.mxu0
    %v1915 = vadd.f32 %v1889, %v1914
    %1916 = vdwg.mxu0
    %v1917 = vmul.f32 %v192, %v1911
    %v1918 = vmul.f32 %v195, %v1915
    %1919 = vmatpush.msra.mxu0 0.0
    %1920 = vmatpush.msra.mxu0 0.0
    %1921 = vmatpush.msra.mxu0 0.0
    %1922 = vmatpush.msra.mxu0 0.0
    %1923 = vmatpush.msra.mxu0 0.0
    %1924 = vmatpush.msra.mxu0 0.0
    %1925 = vmatpush.msra.mxu0 0.0
    %1926 = vmatpush.msra.mxu0 0.0
    %1927 = vmatpush.msra.mxu0 0.0
    %1928 = vmatpush.msra.mxu0 0.0
    %1929 = vmatpush.msra.mxu0 0.0
    %1930 = vmatpush.msra.mxu0 0.0
    %1931 = vmatpush.msra.mxu0 0.0
    %1932 = vmatpush.msra.mxu0 0.0
    %v1933 = vand.u32 %v1918, 4294901760
    %1934 = vmatpush.msra.mxu0 %v1933
    %v1935 = vand.u32 %v1917, 4294901760
    %1936 = vmatpush.msra.mxu0 %v1935
    %v1937 = vand.u32 %v441, 4294901760
    %v1938 = vsub.f32 %v441, %v1937
    %v1939 = vand.u32 %v1938, 4294901760
    %v1940 = vsub.f32 %v1938, %v1939
    %v1941 = vand.u32 %v1940, 4294901760
    %1942 = vmatmul.f32.gmra.mxu0 %v1941
    %v1943 = vpop.f32.mrf.mxu0
    %v1944 = vadd.f32 0.0, %v1943
    %1945 = vdwg.mxu0
    %1946 = vmatpush.msra.mxu0 0.0
    %1947 = vmatpush.msra.mxu0 0.0
    %1948 = vmatpush.msra.mxu0 0.0
    %1949 = vmatpush.msra.mxu0 0.0
    %1950 = vmatpush.msra.mxu0 0.0
    %1951 = vmatpush.msra.mxu0 0.0
    %1952 = vmatpush.msra.mxu0 0.0
    %1953 = vmatpush.msra.mxu0 0.0
    %1954 = vmatpush.msra.mxu0 0.0
    %1955 = vmatpush.msra.mxu0 0.0
    %1956 = vmatpush.msra.mxu0 0.0
    %1957 = vmatpush.msra.mxu0 0.0
    %1958 = vmatpush.msra.mxu0 0.0
    %1959 = vmatpush.msra.mxu0 0.0
    %v1960 = vand.u32 %v1918, 4294901760
    %v1961 = vsub.f32 %v1918, %v1960
    %v1962 = vand.u32 %v1961, 4294901760
    %v1963 = vsub.f32 %v1961, %v1962
    %v1964 = vand.u32 %v1963, 4294901760
    %1965 = vmatpush.msra.mxu0 %v1964
    %v1966 = vand.u32 %v1917, 4294901760
    %v1967 = vsub.f32 %v1917, %v1966
    %v1968 = vand.u32 %v1967, 4294901760
    %v1969 = vsub.f32 %v1967, %v1968
    %v1970 = vand.u32 %v1969, 4294901760
    %1971 = vmatpush.msra.mxu0 %v1970
    %v1972 = vand.u32 %v441, 4294901760
    %1973 = vmatmul.f32.gmra.mxu0 %v1972
    %v1974 = vpop.f32.mrf.mxu0
    %v1975 = vadd.f32 %v1944, %v1974
    %1976 = vdwg.mxu0
    %1977 = vmatpush.msra.mxu0 0.0
    %1978 = vmatpush.msra.mxu0 0.0
    %1979 = vmatpush.msra.mxu0 0.0
    %1980 = vmatpush.msra.mxu0 0.0
    %1981 = vmatpush.msra.mxu0 0.0
    %1982 = vmatpush.msra.mxu0 0.0
    %1983 = vmatpush.msra.mxu0 0.0
    %1984 = vmatpush.msra.mxu0 0.0
    %1985 = vmatpush.msra.mxu0 0.0
    %1986 = vmatpush.msra.mxu0 0.0
    %1987 = vmatpush.msra.mxu0 0.0
    %1988 = vmatpush.msra.mxu0 0.0
    %1989 = vmatpush.msra.mxu0 0.0
    %1990 = vmatpush.msra.mxu0 0.0
    %v1991 = vand.u32 %v1918, 4294901760
    %v1992 = vsub.f32 %v1918, %v1991
    %1993 = vmatpush.msra.mxu0 %v1992
    %v1994 = vand.u32 %v1917, 4294901760
    %v1995 = vsub.f32 %v1917, %v1994
    %1996 = vmatpush.msra.mxu0 %v1995
    %v1997 = vand.u32 %v441, 4294901760
    %v1998 = vsub.f32 %v441, %v1997
    %1999 = vmatmul.f32.gmra.mxu0 %v1998
    %v2000 = vpop.f32.mrf.mxu0
    %v2001 = vadd.f32 %v1975, %v2000
    %2002 = vdwg.mxu0
    %2003 = vmatpush.msra.mxu0 0.0
    %2004 = vmatpush.msra.mxu0 0.0
    %2005 = vmatpush.msra.mxu0 0.0
    %2006 = vmatpush.msra.mxu0 0.0
    %2007 = vmatpush.msra.mxu0 0.0
    %2008 = vmatpush.msra.mxu0 0.0
    %2009 = vmatpush.msra.mxu0 0.0
    %2010 = vmatpush.msra.mxu0 0.0
    %2011 = vmatpush.msra.mxu0 0.0
    %2012 = vmatpush.msra.mxu0 0.0
    %2013 = vmatpush.msra.mxu0 0.0
    %2014 = vmatpush.msra.mxu0 0.0
    %2015 = vmatpush.msra.mxu0 0.0
    %2016 = vmatpush.msra.mxu0 0.0
    %v2017 = vand.u32 %v1918, 4294901760
    %2018 = vmatpush.msra.mxu0 %v2017
    %v2019 = vand.u32 %v1917, 4294901760
    %2020 = vmatpush.msra.mxu0 %v2019
    %v2021 = vand.u32 %v441, 4294901760
    %v2022 = vsub.f32 %v441, %v2021
    %v2023 = vand.u32 %v2022, 4294901760
    %2024 = vmatmul.f32.gmra.mxu0 %v2023
    %v2025 = vpop.f32.mrf.mxu0
    %v2026 = vadd.f32 %v2001, %v2025
    %2027 = vdwg.mxu0
    %2028 = vmatpush.msra.mxu0 0.0
    %2029 = vmatpush.msra.mxu0 0.0
    %2030 = vmatpush.msra.mxu0 0.0
    %2031 = vmatpush.msra.mxu0 0.0
    %2032 = vmatpush.msra.mxu0 0.0
    %2033 = vmatpush.msra.mxu0 0.0
    %2034 = vmatpush.msra.mxu0 0.0
    %2035 = vmatpush.msra.mxu0 0.0
    %2036 = vmatpush.msra.mxu0 0.0
    %2037 = vmatpush.msra.mxu0 0.0
    %2038 = vmatpush.msra.mxu0 0.0
    %2039 = vmatpush.msra.mxu0 0.0
    %2040 = vmatpush.msra.mxu0 0.0
    %2041 = vmatpush.msra.mxu0 0.0
    %v2042 = vand.u32 %v1918, 4294901760
    %v2043 = vsub.f32 %v1918, %v2042
    %v2044 = vand.u32 %v2043, 4294901760
    %2045 = vmatpush.msra.mxu0 %v2044
    %v2046 = vand.u32 %v1917, 4294901760
    %v2047 = vsub.f32 %v1917, %v2046
    %v2048 = vand.u32 %v2047, 4294901760
    %2049 = vmatpush.msra.mxu0 %v2048
    %v2050 = vand.u32 %v441, 4294901760
    %2051 = vmatmul.f32.gmra.mxu0 %v2050
    %v2052 = vpop.f32.mrf.mxu0
    %v2053 = vadd.f32 %v2026, %v2052
    %2054 = vdwg.mxu0
    %2055 = vmatpush.msra.mxu0 0.0
    %2056 = vmatpush.msra.mxu0 0.0
    %2057 = vmatpush.msra.mxu0 0.0
    %2058 = vmatpush.msra.mxu0 0.0
    %2059 = vmatpush.msra.mxu0 0.0
    %2060 = vmatpush.msra.mxu0 0.0
    %2061 = vmatpush.msra.mxu0 0.0
    %2062 = vmatpush.msra.mxu0 0.0
    %2063 = vmatpush.msra.mxu0 0.0
    %2064 = vmatpush.msra.mxu0 0.0
    %2065 = vmatpush.msra.mxu0 0.0
    %2066 = vmatpush.msra.mxu0 0.0
    %2067 = vmatpush.msra.mxu0 0.0
    %2068 = vmatpush.msra.mxu0 0.0
    %v2069 = vand.u32 %v1918, 4294901760
    %2070 = vmatpush.msra.mxu0 %v2069
    %v2071 = vand.u32 %v1917, 4294901760
    %2072 = vmatpush.msra.mxu0 %v2071
    %v2073 = vand.u32 %v441, 4294901760
    %2074 = vmatmul.f32.gmra.mxu0 %v2073
    %v2075 = vpop.f32.mrf.mxu0
    %v2076 = vadd.f32 %v2053, %v2075
    %2077 = vdwg.mxu0
    %v2078 = vmul.f32 %v2076, %v2076
    %v2079 = vand.u32 %v213, 4294901760
    %2080 = vmatpush.msra.mxu0 %v2079
    %v2081 = vand.u32 %v212, 4294901760
    %2082 = vmatpush.msra.mxu0 %v2081
    %v2083 = vand.u32 %v211, 4294901760
    %2084 = vmatpush.msra.mxu0 %v2083
    %v2085 = vand.u32 %v210, 4294901760
    %2086 = vmatpush.msra.mxu0 %v2085
    %v2087 = vand.u32 %v209, 4294901760
    %2088 = vmatpush.msra.mxu0 %v2087
    %v2089 = vand.u32 %v208, 4294901760
    %2090 = vmatpush.msra.mxu0 %v2089
    %v2091 = vand.u32 %v207, 4294901760
    %2092 = vmatpush.msra.mxu0 %v2091
    %v2093 = vand.u32 %v206, 4294901760
    %2094 = vmatpush.msra.mxu0 %v2093
    %v2095 = vand.u32 %v205, 4294901760
    %2096 = vmatpush.msra.mxu0 %v2095
    %v2097 = vand.u32 %v204, 4294901760
    %2098 = vmatpush.msra.mxu0 %v2097
    %v2099 = vand.u32 %v203, 4294901760
    %2100 = vmatpush.msra.mxu0 %v2099
    %v2101 = vand.u32 %v202, 4294901760
    %2102 = vmatpush.msra.mxu0 %v2101
    %v2103 = vand.u32 %v201, 4294901760
    %2104 = vmatpush.msra.mxu0 %v2103
    %v2105 = vand.u32 %v200, 4294901760
    %2106 = vmatpush.msra.mxu0 %v2105
    %v2107 = vand.u32 %v199, 4294901760
    %2108 = vmatpush.msra.mxu0 %v2107
    %v2109 = vand.u32 %v198, 4294901760
    %2110 = vmatpush.msra.mxu0 %v2109
    %v2111 = vand.u32 %v2078, 4294901760
    %v2112 = vsub.f32 %v2078, %v2111
    %v2113 = vand.u32 %v2112, 4294901760
    %v2114 = vsub.f32 %v2112, %v2113
    %v2115 = vand.u32 %v2114, 4294901760
    %2116 = vmatmul.f32.gmra.mxu0 %v2115
    %v2117 = vpop.f32.mrf.mxu0
    %v2118 = vadd.f32 0.0, %v2117
    %2119 = vdwg.mxu0
    %v2120 = vand.u32 %v213, 4294901760
    %v2121 = vsub.f32 %v213, %v2120
    %v2122 = vand.u32 %v2121, 4294901760
    %v2123 = vsub.f32 %v2121, %v2122
    %v2124 = vand.u32 %v2123, 4294901760
    %2125 = vmatpush.msra.mxu0 %v2124
    %v2126 = vand.u32 %v212, 4294901760
    %v2127 = vsub.f32 %v212, %v2126
    %v2128 = vand.u32 %v2127, 4294901760
    %v2129 = vsub.f32 %v2127, %v2128
    %v2130 = vand.u32 %v2129, 4294901760
    %2131 = vmatpush.msra.mxu0 %v2130
    %v2132 = vand.u32 %v211, 4294901760
    %v2133 = vsub.f32 %v211, %v2132
    %v2134 = vand.u32 %v2133, 4294901760
    %v2135 = vsub.f32 %v2133, %v2134
    %v2136 = vand.u32 %v2135, 4294901760
    %2137 = vmatpush.msra.mxu0 %v2136
    %v2138 = vand.u32 %v210, 4294901760
    %v2139 = vsub.f32 %v210, %v2138
    %v2140 = vand.u32 %v2139, 4294901760
    %v2141 = vsub.f32 %v2139, %v2140
    %v2142 = vand.u32 %v2141, 4294901760
    %2143 = vmatpush.msra.mxu0 %v2142
    %v2144 = vand.u32 %v209, 4294901760
    %v2145 = vsub.f32 %v209, %v2144
    %v2146 = vand.u32 %v2145, 4294901760
    %v2147 = vsub.f32 %v2145, %v2146
    %v2148 = vand.u32 %v2147, 4294901760
    %2149 = vmatpush.msra.mxu0 %v2148
    %v2150 = vand.u32 %v208, 4294901760
    %v2151 = vsub.f32 %v208, %v2150
    %v2152 = vand.u32 %v2151, 4294901760
    %v2153 = vsub.f32 %v2151, %v2152
    %v2154 = vand.u32 %v2153, 4294901760
    %2155 = vmatpush.msra.mxu0 %v2154
    %v2156 = vand.u32 %v207, 4294901760
    %v2157 = vsub.f32 %v207, %v2156
    %v2158 = vand.u32 %v2157, 4294901760
    %v2159 = vsub.f32 %v2157, %v2158
    %v2160 = vand.u32 %v2159, 4294901760
    %2161 = vmatpush.msra.mxu0 %v2160
    %v2162 = vand.u32 %v206, 4294901760
    %v2163 = vsub.f32 %v206, %v2162
    %v2164 = vand.u32 %v2163, 4294901760
    %v2165 = vsub.f32 %v2163, %v2164
    %v2166 = vand.u32 %v2165, 4294901760
    %2167 = vmatpush.msra.mxu0 %v2166
    %v2168 = vand.u32 %v205, 4294901760
    %v2169 = vsub.f32 %v205, %v2168
    %v2170 = vand.u32 %v2169, 4294901760
    %v2171 = vsub.f32 %v2169, %v2170
    %v2172 = vand.u32 %v2171, 4294901760
    %2173 = vmatpush.msra.mxu0 %v2172
    %v2174 = vand.u32 %v204, 4294901760
    %v2175 = vsub.f32 %v204, %v2174
    %v2176 = vand.u32 %v2175, 4294901760
    %v2177 = vsub.f32 %v2175, %v2176
    %v2178 = vand.u32 %v2177, 4294901760
    %2179 = vmatpush.msra.mxu0 %v2178
    %v2180 = vand.u32 %v203, 4294901760
    %v2181 = vsub.f32 %v203, %v2180
    %v2182 = vand.u32 %v2181, 4294901760
    %v2183 = vsub.f32 %v2181, %v2182
    %v2184 = vand.u32 %v2183, 4294901760
    %2185 = vmatpush.msra.mxu0 %v2184
    %v2186 = vand.u32 %v202, 4294901760
    %v2187 = vsub.f32 %v202, %v2186
    %v2188 = vand.u32 %v2187, 4294901760
    %v2189 = vsub.f32 %v2187, %v2188
    %v2190 = vand.u32 %v2189, 4294901760
    %2191 = vmatpush.msra.mxu0 %v2190
    %v2192 = vand.u32 %v201, 4294901760
    %v2193 = vsub.f32 %v201, %v2192
    %v2194 = vand.u32 %v2193, 4294901760
    %v2195 = vsub.f32 %v2193, %v2194
    %v2196 = vand.u32 %v2195, 4294901760
    %2197 = vmatpush.msra.mxu0 %v2196
    %v2198 = vand.u32 %v200, 4294901760
    %v2199 = vsub.f32 %v200, %v2198
    %v2200 = vand.u32 %v2199, 4294901760
    %v2201 = vsub.f32 %v2199, %v2200
    %v2202 = vand.u32 %v2201, 4294901760
    %2203 = vmatpush.msra.mxu0 %v2202
    %v2204 = vand.u32 %v199, 4294901760
    %v2205 = vsub.f32 %v199, %v2204
    %v2206 = vand.u32 %v2205, 4294901760
    %v2207 = vsub.f32 %v2205, %v2206
    %v2208 = vand.u32 %v2207, 4294901760
    %2209 = vmatpush.msra.mxu0 %v2208
    %v2210 = vand.u32 %v198, 4294901760
    %v2211 = vsub.f32 %v198, %v2210
    %v2212 = vand.u32 %v2211, 4294901760
    %v2213 = vsub.f32 %v2211, %v2212
    %v2214 = vand.u32 %v2213, 4294901760
    %2215 = vmatpush.msra.mxu0 %v2214
    %v2216 = vand.u32 %v2078, 4294901760
    %2217 = vmatmul.f32.gmra.mxu0 %v2216
    %v2218 = vpop.f32.mrf.mxu0
    %v2219 = vadd.f32 %v2118, %v2218
    %2220 = vdwg.mxu0
    %v2221 = vand.u32 %v213, 4294901760
    %v2222 = vsub.f32 %v213, %v2221
    %2223 = vmatpush.msra.mxu0 %v2222
    %v2224 = vand.u32 %v212, 4294901760
    %v2225 = vsub.f32 %v212, %v2224
    %2226 = vmatpush.msra.mxu0 %v2225
    %v2227 = vand.u32 %v211, 4294901760
    %v2228 = vsub.f32 %v211, %v2227
    %2229 = vmatpush.msra.mxu0 %v2228
    %v2230 = vand.u32 %v210, 4294901760
    %v2231 = vsub.f32 %v210, %v2230
    %2232 = vmatpush.msra.mxu0 %v2231
    %v2233 = vand.u32 %v209, 4294901760
    %v2234 = vsub.f32 %v209, %v2233
    %2235 = vmatpush.msra.mxu0 %v2234
    %v2236 = vand.u32 %v208, 4294901760
    %v2237 = vsub.f32 %v208, %v2236
    %2238 = vmatpush.msra.mxu0 %v2237
    %v2239 = vand.u32 %v207, 4294901760
    %v2240 = vsub.f32 %v207, %v2239
    %2241 = vmatpush.msra.mxu0 %v2240
    %v2242 = vand.u32 %v206, 4294901760
    %v2243 = vsub.f32 %v206, %v2242
    %2244 = vmatpush.msra.mxu0 %v2243
    %v2245 = vand.u32 %v205, 4294901760
    %v2246 = vsub.f32 %v205, %v2245
    %2247 = vmatpush.msra.mxu0 %v2246
    %v2248 = vand.u32 %v204, 4294901760
    %v2249 = vsub.f32 %v204, %v2248
    %2250 = vmatpush.msra.mxu0 %v2249
    %v2251 = vand.u32 %v203, 4294901760
    %v2252 = vsub.f32 %v203, %v2251
    %2253 = vmatpush.msra.mxu0 %v2252
    %v2254 = vand.u32 %v202, 4294901760
    %v2255 = vsub.f32 %v202, %v2254
    %2256 = vmatpush.msra.mxu0 %v2255
    %v2257 = vand.u32 %v201, 4294901760
    %v2258 = vsub.f32 %v201, %v2257
    %2259 = vmatpush.msra.mxu0 %v2258
    %v2260 = vand.u32 %v200, 4294901760
    %v2261 = vsub.f32 %v200, %v2260
    %2262 = vmatpush.msra.mxu0 %v2261
    %v2263 = vand.u32 %v199, 4294901760
    %v2264 = vsub.f32 %v199, %v2263
    %2265 = vmatpush.msra.mxu0 %v2264
    %v2266 = vand.u32 %v198, 4294901760
    %v2267 = vsub.f32 %v198, %v2266
    %2268 = vmatpush.msra.mxu0 %v2267
    %v2269 = vand.u32 %v2078, 4294901760
    %v2270 = vsub.f32 %v2078, %v2269
    %2271 = vmatmul.f32.gmra.mxu0 %v2270
    %v2272 = vpop.f32.mrf.mxu0
    %v2273 = vadd.f32 %v2219, %v2272
    %2274 = vdwg.mxu0
    %v2275 = vand.u32 %v213, 4294901760
    %2276 = vmatpush.msra.mxu0 %v2275
    %v2277 = vand.u32 %v212, 4294901760
    %2278 = vmatpush.msra.mxu0 %v2277
    %v2279 = vand.u32 %v211, 4294901760
    %2280 = vmatpush.msra.mxu0 %v2279
    %v2281 = vand.u32 %v210, 4294901760
    %2282 = vmatpush.msra.mxu0 %v2281
    %v2283 = vand.u32 %v209, 4294901760
    %2284 = vmatpush.msra.mxu0 %v2283
    %v2285 = vand.u32 %v208, 4294901760
    %2286 = vmatpush.msra.mxu0 %v2285
    %v2287 = vand.u32 %v207, 4294901760
    %2288 = vmatpush.msra.mxu0 %v2287
    %v2289 = vand.u32 %v206, 4294901760
    %2290 = vmatpush.msra.mxu0 %v2289
    %v2291 = vand.u32 %v205, 4294901760
    %2292 = vmatpush.msra.mxu0 %v2291
    %v2293 = vand.u32 %v204, 4294901760
    %2294 = vmatpush.msra.mxu0 %v2293
    %v2295 = vand.u32 %v203, 4294901760
    %2296 = vmatpush.msra.mxu0 %v2295
    %v2297 = vand.u32 %v202, 4294901760
    %2298 = vmatpush.msra.mxu0 %v2297
    %v2299 = vand.u32 %v201, 4294901760
    %2300 = vmatpush.msra.mxu0 %v2299
    %v2301 = vand.u32 %v200, 4294901760
    %2302 = vmatpush.msra.mxu0 %v2301
    %v2303 = vand.u32 %v199, 4294901760
    %2304 = vmatpush.msra.mxu0 %v2303
    %v2305 = vand.u32 %v198, 4294901760
    %2306 = vmatpush.msra.mxu0 %v2305
    %v2307 = vand.u32 %v2078, 4294901760
    %v2308 = vsub.f32 %v2078, %v2307
    %v2309 = vand.u32 %v2308, 4294901760
    %2310 = vmatmul.f32.gmra.mxu0 %v2309
    %v2311 = vpop.f32.mrf.mxu0
    %v2312 = vadd.f32 %v2273, %v2311
    %2313 = vdwg.mxu0
    %v2314 = vand.u32 %v213, 4294901760
    %v2315 = vsub.f32 %v213, %v2314
    %v2316 = vand.u32 %v2315, 4294901760
    %2317 = vmatpush.msra.mxu0 %v2316
    %v2318 = vand.u32 %v212, 4294901760
    %v2319 = vsub.f32 %v212, %v2318
    %v2320 = vand.u32 %v2319, 4294901760
    %2321 = vmatpush.msra.mxu0 %v2320
    %v2322 = vand.u32 %v211, 4294901760
    %v2323 = vsub.f32 %v211, %v2322
    %v2324 = vand.u32 %v2323, 4294901760
    %2325 = vmatpush.msra.mxu0 %v2324
    %v2326 = vand.u32 %v210, 4294901760
    %v2327 = vsub.f32 %v210, %v2326
    %v2328 = vand.u32 %v2327, 4294901760
    %2329 = vmatpush.msra.mxu0 %v2328
    %v2330 = vand.u32 %v209, 4294901760
    %v2331 = vsub.f32 %v209, %v2330
    %v2332 = vand.u32 %v2331, 4294901760
    %2333 = vmatpush.msra.mxu0 %v2332
    %v2334 = vand.u32 %v208, 4294901760
    %v2335 = vsub.f32 %v208, %v2334
    %v2336 = vand.u32 %v2335, 4294901760
    %2337 = vmatpush.msra.mxu0 %v2336
    %v2338 = vand.u32 %v207, 4294901760
    %v2339 = vsub.f32 %v207, %v2338
    %v2340 = vand.u32 %v2339, 4294901760
    %2341 = vmatpush.msra.mxu0 %v2340
    %v2342 = vand.u32 %v206, 4294901760
    %v2343 = vsub.f32 %v206, %v2342
    %v2344 = vand.u32 %v2343, 4294901760
    %2345 = vmatpush.msra.mxu0 %v2344
    %v2346 = vand.u32 %v205, 4294901760
    %v2347 = vsub.f32 %v205, %v2346
    %v2348 = vand.u32 %v2347, 4294901760
    %2349 = vmatpush.msra.mxu0 %v2348
    %v2350 = vand.u32 %v204, 4294901760
    %v2351 = vsub.f32 %v204, %v2350
    %v2352 = vand.u32 %v2351, 4294901760
    %2353 = vmatpush.msra.mxu0 %v2352
    %v2354 = vand.u32 %v203, 4294901760
    %v2355 = vsub.f32 %v203, %v2354
    %v2356 = vand.u32 %v2355, 4294901760
    %2357 = vmatpush.msra.mxu0 %v2356
    %v2358 = vand.u32 %v202, 4294901760
    %v2359 = vsub.f32 %v202, %v2358
    %v2360 = vand.u32 %v2359, 4294901760
    %2361 = vmatpush.msra.mxu0 %v2360
    %v2362 = vand.u32 %v201, 4294901760
    %v2363 = vsub.f32 %v201, %v2362
    %v2364 = vand.u32 %v2363, 4294901760
    %2365 = vmatpush.msra.mxu0 %v2364
    %v2366 = vand.u32 %v200, 4294901760
    %v2367 = vsub.f32 %v200, %v2366
    %v2368 = vand.u32 %v2367, 4294901760
    %2369 = vmatpush.msra.mxu0 %v2368
    %v2370 = vand.u32 %v199, 4294901760
    %v2371 = vsub.f32 %v199, %v2370
    %v2372 = vand.u32 %v2371, 4294901760
    %2373 = vmatpush.msra.mxu0 %v2372
    %v2374 = vand.u32 %v198, 4294901760
    %v2375 = vsub.f32 %v198, %v2374
    %v2376 = vand.u32 %v2375, 4294901760
    %2377 = vmatpush.msra.mxu0 %v2376
    %v2378 = vand.u32 %v2078, 4294901760
    %2379 = vmatmul.f32.gmra.mxu0 %v2378
    %v2380 = vpop.f32.mrf.mxu0
    %v2381 = vadd.f32 %v2312, %v2380
    %2382 = vdwg.mxu0
    %v2383 = vand.u32 %v213, 4294901760
    %2384 = vmatpush.msra.mxu0 %v2383
    %v2385 = vand.u32 %v212, 4294901760
    %2386 = vmatpush.msra.mxu0 %v2385
    %v2387 = vand.u32 %v211, 4294901760
    %2388 = vmatpush.msra.mxu0 %v2387
    %v2389 = vand.u32 %v210, 4294901760
    %2390 = vmatpush.msra.mxu0 %v2389
    %v2391 = vand.u32 %v209, 4294901760
    %2392 = vmatpush.msra.mxu0 %v2391
    %v2393 = vand.u32 %v208, 4294901760
    %2394 = vmatpush.msra.mxu0 %v2393
    %v2395 = vand.u32 %v207, 4294901760
    %2396 = vmatpush.msra.mxu0 %v2395
    %v2397 = vand.u32 %v206, 4294901760
    %2398 = vmatpush.msra.mxu0 %v2397
    %v2399 = vand.u32 %v205, 4294901760
    %2400 = vmatpush.msra.mxu0 %v2399
    %v2401 = vand.u32 %v204, 4294901760
    %2402 = vmatpush.msra.mxu0 %v2401
    %v2403 = vand.u32 %v203, 4294901760
    %2404 = vmatpush.msra.mxu0 %v2403
    %v2405 = vand.u32 %v202, 4294901760
    %2406 = vmatpush.msra.mxu0 %v2405
    %v2407 = vand.u32 %v201, 4294901760
    %2408 = vmatpush.msra.mxu0 %v2407
    %v2409 = vand.u32 %v200, 4294901760
    %2410 = vmatpush.msra.mxu0 %v2409
    %v2411 = vand.u32 %v199, 4294901760
    %2412 = vmatpush.msra.mxu0 %v2411
    %v2413 = vand.u32 %v198, 4294901760
    %2414 = vmatpush.msra.mxu0 %v2413
    %v2415 = vand.u32 %v2078, 4294901760
    %2416 = vmatmul.f32.gmra.mxu0 %v2415
    %v2417 = vpop.f32.mrf.mxu0
    %v2418 = vadd.f32 %v2381, %v2417
    %2419 = vdwg.mxu0
    %v2420 = vadd.f32 %v2418, 1e-08
    %v2421 = vrsqrt.pop %v2420
    %v2422 = vmul.f32 %v2421, %v2420
    %v2423 = vmul.f32 %v2422, %v2421
    %v2424 = vmul.f32 0.5, %v2423
    %v2425 = vsub.f32 1.5, %v2424
    %v2426 = vmul.f32 %v2421, %v2425
    %vm2427 = vweird.f32 %v2420
    %vm2428 = vweird.f32 %v2421
    %vm2429 = vmor %vm2427, %vm2428
    %v2430 = vsel %vm2429, %v2421, %v2426
    %v2431 = vmul.f32 %v2418, %v2430
    %v2432 = vadd.f32 %v2418, 1.0
    %v2433 = vrcp.pop %v2432
    %v2434 = vmul.f32 %v2432, %v2433
    %v2435 = vsub.f32 1.0, %v2434
    %v2436 = vmul.f32 %v2433, %v2435
    %v2437 = vadd.f32 %v2433, %v2436
    %vm2438 = vweird.f32 %v2432
    %vm2439 = vweird.f32 %v2433
    %vm2440 = vmor %vm2438, %vm2439
    %v2441 = vsel %vm2440, %v2433, %v2437
    %v2442 = vand.u32 2147483647, %v2432
    %vm2443 = vcmp.eq.f32.partialorder %v2442, 8.507059e+37
    %v2444 = vand.u32 %v2432, 2147483648
    %v2445 = vor.u32 1.1754944e-38, %v2444
    %v2446 = vsel %vm2443, %v2445, %v2441
    %v2447 = vmul.f32 %v2431, %v2446
    %v2449 = vsel %vm229, %v2447, 0
    %2451 = vmatpush.msra.mxu0 0.0
    %2452 = vmatpush.msra.mxu0 0.0
    %2453 = vmatpush.msra.mxu0 0.0
    %2454 = vmatpush.msra.mxu0 0.0
    %2455 = vmatpush.msra.mxu0 0.0
    %2456 = vmatpush.msra.mxu0 0.0
    %2457 = vmatpush.msra.mxu0 0.0
    %2458 = vmatpush.msra.mxu0 0.0
    %2459 = vmatpush.msra.mxu0 0.0
    %2460 = vmatpush.msra.mxu0 0.0
    %2461 = vmatpush.msra.mxu0 0.0
    %2462 = vmatpush.msra.mxu0 0.0
    %2463 = vmatpush.msra.mxu0 0.0
    %2464 = vmatpush.msra.mxu0 0.0
    %2465 = vmatpush.msra.mxu0 0.0
    %v2466 = vand.u32 %v258, 4294901760
    %2467 = vmatpush.msra.mxu0 %v2466
    %v2468 = vand.u32 %v2449, 4294901760
    %v2469 = vsub.f32 %v2449, %v2468
    %v2470 = vand.u32 %v2469, 4294901760
    %v2471 = vsub.f32 %v2469, %v2470
    %v2472 = vand.u32 %v2471, 4294901760
    %2473 = vmatmul.f32.gmra.mxu0 %v2472
    %v2474 = vpop.f32.mrf.mxu0
    %v2475 = vadd.f32 0.0, %v2474
    %2476 = vdwg.mxu0
    %2477 = vmatpush.msra.mxu0 0.0
    %2478 = vmatpush.msra.mxu0 0.0
    %2479 = vmatpush.msra.mxu0 0.0
    %2480 = vmatpush.msra.mxu0 0.0
    %2481 = vmatpush.msra.mxu0 0.0
    %2482 = vmatpush.msra.mxu0 0.0
    %2483 = vmatpush.msra.mxu0 0.0
    %2484 = vmatpush.msra.mxu0 0.0
    %2485 = vmatpush.msra.mxu0 0.0
    %2486 = vmatpush.msra.mxu0 0.0
    %2487 = vmatpush.msra.mxu0 0.0
    %2488 = vmatpush.msra.mxu0 0.0
    %2489 = vmatpush.msra.mxu0 0.0
    %2490 = vmatpush.msra.mxu0 0.0
    %2491 = vmatpush.msra.mxu0 0.0
    %v2492 = vand.u32 %v258, 4294901760
    %v2493 = vsub.f32 %v258, %v2492
    %v2494 = vand.u32 %v2493, 4294901760
    %v2495 = vsub.f32 %v2493, %v2494
    %v2496 = vand.u32 %v2495, 4294901760
    %2497 = vmatpush.msra.mxu0 %v2496
    %v2498 = vand.u32 %v2449, 4294901760
    %2499 = vmatmul.f32.gmra.mxu0 %v2498
    %v2500 = vpop.f32.mrf.mxu0
    %v2501 = vadd.f32 %v2475, %v2500
    %2502 = vdwg.mxu0
    %2503 = vmatpush.msra.mxu0 0.0
    %2504 = vmatpush.msra.mxu0 0.0
    %2505 = vmatpush.msra.mxu0 0.0
    %2506 = vmatpush.msra.mxu0 0.0
    %2507 = vmatpush.msra.mxu0 0.0
    %2508 = vmatpush.msra.mxu0 0.0
    %2509 = vmatpush.msra.mxu0 0.0
    %2510 = vmatpush.msra.mxu0 0.0
    %2511 = vmatpush.msra.mxu0 0.0
    %2512 = vmatpush.msra.mxu0 0.0
    %2513 = vmatpush.msra.mxu0 0.0
    %2514 = vmatpush.msra.mxu0 0.0
    %2515 = vmatpush.msra.mxu0 0.0
    %2516 = vmatpush.msra.mxu0 0.0
    %2517 = vmatpush.msra.mxu0 0.0
    %v2518 = vand.u32 %v258, 4294901760
    %v2519 = vsub.f32 %v258, %v2518
    %2520 = vmatpush.msra.mxu0 %v2519
    %v2521 = vand.u32 %v2449, 4294901760
    %v2522 = vsub.f32 %v2449, %v2521
    %2523 = vmatmul.f32.gmra.mxu0 %v2522
    %v2524 = vpop.f32.mrf.mxu0
    %v2525 = vadd.f32 %v2501, %v2524
    %2526 = vdwg.mxu0
    %2527 = vmatpush.msra.mxu0 0.0
    %2528 = vmatpush.msra.mxu0 0.0
    %2529 = vmatpush.msra.mxu0 0.0
    %2530 = vmatpush.msra.mxu0 0.0
    %2531 = vmatpush.msra.mxu0 0.0
    %2532 = vmatpush.msra.mxu0 0.0
    %2533 = vmatpush.msra.mxu0 0.0
    %2534 = vmatpush.msra.mxu0 0.0
    %2535 = vmatpush.msra.mxu0 0.0
    %2536 = vmatpush.msra.mxu0 0.0
    %2537 = vmatpush.msra.mxu0 0.0
    %2538 = vmatpush.msra.mxu0 0.0
    %2539 = vmatpush.msra.mxu0 0.0
    %2540 = vmatpush.msra.mxu0 0.0
    %2541 = vmatpush.msra.mxu0 0.0
    %v2542 = vand.u32 %v258, 4294901760
    %2543 = vmatpush.msra.mxu0 %v2542
    %v2544 = vand.u32 %v2449, 4294901760
    %v2545 = vsub.f32 %v2449, %v2544
    %v2546 = vand.u32 %v2545, 4294901760
    %2547 = vmatmul.f32.gmra.mxu0 %v2546
    %v2548 = vpop.f32.mrf.mxu0
    %v2549 = vadd.f32 %v2525, %v2548
    %2550 = vdwg.mxu0
    %2551 = vmatpush.msra.mxu0 0.0
    %2552 = vmatpush.msra.mxu0 0.0
    %2553 = vmatpush.msra.mxu0 0.0
    %2554 = vmatpush.msra.mxu0 0.0
    %2555 = vmatpush.msra.mxu0 0.0
    %2556 = vmatpush.msra.mxu0 0.0
    %2557 = vmatpush.msra.mxu0 0.0
    %2558 = vmatpush.msra.mxu0 0.0
    %2559 = vmatpush.msra.mxu0 0.0
    %2560 = vmatpush.msra.mxu0 0.0
    %2561 = vmatpush.msra.mxu0 0.0
    %2562 = vmatpush.msra.mxu0 0.0
    %2563 = vmatpush.msra.mxu0 0.0
    %2564 = vmatpush.msra.mxu0 0.0
    %2565 = vmatpush.msra.mxu0 0.0
    %v2566 = vand.u32 %v258, 4294901760
    %v2567 = vsub.f32 %v258, %v2566
    %v2568 = vand.u32 %v2567, 4294901760
    %2569 = vmatpush.msra.mxu0 %v2568
    %v2570 = vand.u32 %v2449, 4294901760
    %2571 = vmatmul.f32.gmra.mxu0 %v2570
    %v2572 = vpop.f32.mrf.mxu0
    %v2573 = vadd.f32 %v2549, %v2572
    %2574 = vdwg.mxu0
    %2575 = vmatpush.msra.mxu0 0.0
    %2576 = vmatpush.msra.mxu0 0.0
    %2577 = vmatpush.msra.mxu0 0.0
    %2578 = vmatpush.msra.mxu0 0.0
    %2579 = vmatpush.msra.mxu0 0.0
    %2580 = vmatpush.msra.mxu0 0.0
    %2581 = vmatpush.msra.mxu0 0.0
    %2582 = vmatpush.msra.mxu0 0.0
    %2583 = vmatpush.msra.mxu0 0.0
    %2584 = vmatpush.msra.mxu0 0.0
    %2585 = vmatpush.msra.mxu0 0.0
    %2586 = vmatpush.msra.mxu0 0.0
    %2587 = vmatpush.msra.mxu0 0.0
    %2588 = vmatpush.msra.mxu0 0.0
    %2589 = vmatpush.msra.mxu0 0.0
    %v2590 = vand.u32 %v258, 4294901760
    %2591 = vmatpush.msra.mxu0 %v2590
    %v2592 = vand.u32 %v2449, 4294901760
    %2593 = vmatmul.f32.gmra.mxu0 %v2592
    %v2594 = vpop.f32.mrf.mxu0
    %v2595 = vadd.f32 %v2573, %v2594
    %2596 = vdwg.mxu0
    %v2597 = vmul.f32 %v2076, %v2595
    %v2599 = vsel %vm1129, %v2597, 0
    %2601 = vmatpush.msra.mxu0 0.0
    %2602 = vmatpush.msra.mxu0 0.0
    %2603 = vmatpush.msra.mxu0 0.0
    %2604 = vmatpush.msra.mxu0 0.0
    %2605 = vmatpush.msra.mxu0 0.0
    %2606 = vmatpush.msra.mxu0 0.0
    %2607 = vmatpush.msra.mxu0 0.0
    %2608 = vmatpush.msra.mxu0 0.0
    %2609 = vmatpush.msra.mxu0 0.0
    %2610 = vmatpush.msra.mxu0 0.0
    %2611 = vmatpush.msra.mxu0 0.0
    %2612 = vmatpush.msra.mxu0 0.0
    %2613 = vmatpush.msra.mxu0 0.0
    %2614 = vmatpush.msra.mxu0 0.0
    %2615 = vmatpush.msra.mxu0 0.0
    %v2616 = vand.u32 %v2599, 4294901760
    %2617 = vmatpush.msra.mxu0 %v2616
    %v2618 = vand.u32 %v1124, 4294901760
    %v2619 = vsub.f32 %v1124, %v2618
    %v2620 = vand.u32 %v2619, 4294901760
    %v2621 = vsub.f32 %v2619, %v2620
    %v2622 = vand.u32 %v2621, 4294901760
    %2623 = vmatmul.f32.gmra.mxu0 %v2622
    %v2624 = vpop.f32.mrf.mxu0
    %v2625 = vadd.f32 0.0, %v2624
    %v2626 = vand.u32 %v1127, 4294901760
    %v2627 = vsub.f32 %v1127, %v2626
    %v2628 = vand.u32 %v2627, 4294901760
    %v2629 = vsub.f32 %v2627, %v2628
    %v2630 = vand.u32 %v2629, 4294901760
    %2631 = vmatmul.f32.gmra.mxu0 %v2630
    %v2632 = vpop.f32.mrf.mxu0
    %v2633 = vadd.f32 0.0, %v2632
    %2634 = vdwg.mxu0
    %2635 = vmatpush.msra.mxu0 0.0
    %2636 = vmatpush.msra.mxu0 0.0
    %2637 = vmatpush.msra.mxu0 0.0
    %2638 = vmatpush.msra.mxu0 0.0
    %2639 = vmatpush.msra.mxu0 0.0
    %2640 = vmatpush.msra.mxu0 0.0
    %2641 = vmatpush.msra.mxu0 0.0
    %2642 = vmatpush.msra.mxu0 0.0
    %2643 = vmatpush.msra.mxu0 0.0
    %2644 = vmatpush.msra.mxu0 0.0
    %2645 = vmatpush.msra.mxu0 0.0
    %2646 = vmatpush.msra.mxu0 0.0
    %2647 = vmatpush.msra.mxu0 0.0
    %2648 = vmatpush.msra.mxu0 0.0
    %2649 = vmatpush.msra.mxu0 0.0
    %v2650 = vand.u32 %v2599, 4294901760
    %v2651 = vsub.f32 %v2599, %v2650
    %v2652 = vand.u32 %v2651, 4294901760
    %v2653 = vsub.f32 %v2651, %v2652
    %v2654 = vand.u32 %v2653, 4294901760
    %2655 = vmatpush.msra.mxu0 %v2654
    %v2656 = vand.u32 %v1124, 4294901760
    %2657 = vmatmul.f32.gmra.mxu0 %v2656
    %v2658 = vpop.f32.mrf.mxu0
    %v2659 = vadd.f32 %v2625, %v2658
    %v2660 = vand.u32 %v1127, 4294901760
    %2661 = vmatmul.f32.gmra.mxu0 %v2660
    %v2662 = vpop.f32.mrf.mxu0
    %v2663 = vadd.f32 %v2633, %v2662
    %2664 = vdwg.mxu0
    %2665 = vmatpush.msra.mxu0 0.0
    %2666 = vmatpush.msra.mxu0 0.0
    %2667 = vmatpush.msra.mxu0 0.0
    %2668 = vmatpush.msra.mxu0 0.0
    %2669 = vmatpush.msra.mxu0 0.0
    %2670 = vmatpush.msra.mxu0 0.0
    %2671 = vmatpush.msra.mxu0 0.0
    %2672 = vmatpush.msra.mxu0 0.0
    %2673 = vmatpush.msra.mxu0 0.0
    %2674 = vmatpush.msra.mxu0 0.0
    %2675 = vmatpush.msra.mxu0 0.0
    %2676 = vmatpush.msra.mxu0 0.0
    %2677 = vmatpush.msra.mxu0 0.0
    %2678 = vmatpush.msra.mxu0 0.0
    %2679 = vmatpush.msra.mxu0 0.0
    %v2680 = vand.u32 %v2599, 4294901760
    %v2681 = vsub.f32 %v2599, %v2680
    %2682 = vmatpush.msra.mxu0 %v2681
    %v2683 = vand.u32 %v1124, 4294901760
    %v2684 = vsub.f32 %v1124, %v2683
    %2685 = vmatmul.f32.gmra.mxu0 %v2684
    %v2686 = vpop.f32.mrf.mxu0
    %v2687 = vadd.f32 %v2659, %v2686
    %v2688 = vand.u32 %v1127, 4294901760
    %v2689 = vsub.f32 %v1127, %v2688
    %2690 = vmatmul.f32.gmra.mxu0 %v2689
    %v2691 = vpop.f32.mrf.mxu0
    %v2692 = vadd.f32 %v2663, %v2691
    %2693 = vdwg.mxu0
    %2694 = vmatpush.msra.mxu0 0.0
    %2695 = vmatpush.msra.mxu0 0.0
    %2696 = vmatpush.msra.mxu0 0.0
    %2697 = vmatpush.msra.mxu0 0.0
    %2698 = vmatpush.msra.mxu0 0.0
    %2699 = vmatpush.msra.mxu0 0.0
    %2700 = vmatpush.msra.mxu0 0.0
    %2701 = vmatpush.msra.mxu0 0.0
    %2702 = vmatpush.msra.mxu0 0.0
    %2703 = vmatpush.msra.mxu0 0.0
    %2704 = vmatpush.msra.mxu0 0.0
    %2705 = vmatpush.msra.mxu0 0.0
    %2706 = vmatpush.msra.mxu0 0.0
    %2707 = vmatpush.msra.mxu0 0.0
    %2708 = vmatpush.msra.mxu0 0.0
    %v2709 = vand.u32 %v2599, 4294901760
    %2710 = vmatpush.msra.mxu0 %v2709
    %v2711 = vand.u32 %v1124, 4294901760
    %v2712 = vsub.f32 %v1124, %v2711
    %v2713 = vand.u32 %v2712, 4294901760
    %2714 = vmatmul.f32.gmra.mxu0 %v2713
    %v2715 = vpop.f32.mrf.mxu0
    %v2716 = vadd.f32 %v2687, %v2715
    %v2717 = vand.u32 %v1127, 4294901760
    %v2718 = vsub.f32 %v1127, %v2717
    %v2719 = vand.u32 %v2718, 4294901760
    %2720 = vmatmul.f32.gmra.mxu0 %v2719
    %v2721 = vpop.f32.mrf.mxu0
    %v2722 = vadd.f32 %v2692, %v2721
    %2723 = vdwg.mxu0
    %2724 = vmatpush.msra.mxu0 0.0
    %2725 = vmatpush.msra.mxu0 0.0
    %2726 = vmatpush.msra.mxu0 0.0
    %2727 = vmatpush.msra.mxu0 0.0
    %2728 = vmatpush.msra.mxu0 0.0
    %2729 = vmatpush.msra.mxu0 0.0
    %2730 = vmatpush.msra.mxu0 0.0
    %2731 = vmatpush.msra.mxu0 0.0
    %2732 = vmatpush.msra.mxu0 0.0
    %2733 = vmatpush.msra.mxu0 0.0
    %2734 = vmatpush.msra.mxu0 0.0
    %2735 = vmatpush.msra.mxu0 0.0
    %2736 = vmatpush.msra.mxu0 0.0
    %2737 = vmatpush.msra.mxu0 0.0
    %2738 = vmatpush.msra.mxu0 0.0
    %v2739 = vand.u32 %v2599, 4294901760
    %v2740 = vsub.f32 %v2599, %v2739
    %v2741 = vand.u32 %v2740, 4294901760
    %2742 = vmatpush.msra.mxu0 %v2741
    %v2743 = vand.u32 %v1124, 4294901760
    %2744 = vmatmul.f32.gmra.mxu0 %v2743
    %v2745 = vpop.f32.mrf.mxu0
    %v2746 = vadd.f32 %v2716, %v2745
    %v2747 = vand.u32 %v1127, 4294901760
    %2748 = vmatmul.f32.gmra.mxu0 %v2747
    %v2749 = vpop.f32.mrf.mxu0
    %v2750 = vadd.f32 %v2722, %v2749
    %2751 = vdwg.mxu0
    %2752 = vmatpush.msra.mxu0 0.0
    %2753 = vmatpush.msra.mxu0 0.0
    %2754 = vmatpush.msra.mxu0 0.0
    %2755 = vmatpush.msra.mxu0 0.0
    %2756 = vmatpush.msra.mxu0 0.0
    %2757 = vmatpush.msra.mxu0 0.0
    %2758 = vmatpush.msra.mxu0 0.0
    %2759 = vmatpush.msra.mxu0 0.0
    %2760 = vmatpush.msra.mxu0 0.0
    %2761 = vmatpush.msra.mxu0 0.0
    %2762 = vmatpush.msra.mxu0 0.0
    %2763 = vmatpush.msra.mxu0 0.0
    %2764 = vmatpush.msra.mxu0 0.0
    %2765 = vmatpush.msra.mxu0 0.0
    %2766 = vmatpush.msra.mxu0 0.0
    %v2767 = vand.u32 %v2599, 4294901760
    %2768 = vmatpush.msra.mxu0 %v2767
    %v2769 = vand.u32 %v1124, 4294901760
    %2770 = vmatmul.f32.gmra.mxu0 %v2769
    %v2771 = vpop.f32.mrf.mxu0
    %v2772 = vadd.f32 %v2746, %v2771
    %v2773 = vand.u32 %v1127, 4294901760
    %2774 = vmatmul.f32.gmra.mxu0 %v2773
    %v2775 = vpop.f32.mrf.mxu0
    %v2776 = vadd.f32 %v2750, %v2775
    %2777 = vdwg.mxu0
    %v2778 = vmul.f32 %v192, %v2772
    %v2779 = vmul.f32 %v195, %v2776
    %v2780 = vand.u32 %v213, 4294901760
    %2781 = vmatpush.msra.mxu0 %v2780
    %v2782 = vand.u32 %v212, 4294901760
    %2783 = vmatpush.msra.mxu0 %v2782
    %v2784 = vand.u32 %v211, 4294901760
    %2785 = vmatpush.msra.mxu0 %v2784
    %v2786 = vand.u32 %v210, 4294901760
    %2787 = vmatpush.msra.mxu0 %v2786
    %v2788 = vand.u32 %v209, 4294901760
    %2789 = vmatpush.msra.mxu0 %v2788
    %v2790 = vand.u32 %v208, 4294901760
    %2791 = vmatpush.msra.mxu0 %v2790
    %v2792 = vand.u32 %v207, 4294901760
    %2793 = vmatpush.msra.mxu0 %v2792
    %v2794 = vand.u32 %v206, 4294901760
    %2795 = vmatpush.msra.mxu0 %v2794
    %v2796 = vand.u32 %v205, 4294901760
    %2797 = vmatpush.msra.mxu0 %v2796
    %v2798 = vand.u32 %v204, 4294901760
    %2799 = vmatpush.msra.mxu0 %v2798
    %v2800 = vand.u32 %v203, 4294901760
    %2801 = vmatpush.msra.mxu0 %v2800
    %v2802 = vand.u32 %v202, 4294901760
    %2803 = vmatpush.msra.mxu0 %v2802
    %v2804 = vand.u32 %v201, 4294901760
    %2805 = vmatpush.msra.mxu0 %v2804
    %v2806 = vand.u32 %v200, 4294901760
    %2807 = vmatpush.msra.mxu0 %v2806
    %v2808 = vand.u32 %v199, 4294901760
    %2809 = vmatpush.msra.mxu0 %v2808
    %v2810 = vand.u32 %v198, 4294901760
    %2811 = vmatpush.msra.mxu0 %v2810
    %v2812 = vand.u32 %v2778, 4294901760
    %v2813 = vsub.f32 %v2778, %v2812
    %v2814 = vand.u32 %v2813, 4294901760
    %v2815 = vsub.f32 %v2813, %v2814
    %v2816 = vand.u32 %v2815, 4294901760
    %2817 = vmatmul.f32.gmra.mxu0 %v2816
    %v2818 = vpop.f32.mrf.mxu0
    %v2819 = vadd.f32 0.0, %v2818
    %v2820 = vand.u32 %v2779, 4294901760
    %v2821 = vsub.f32 %v2779, %v2820
    %v2822 = vand.u32 %v2821, 4294901760
    %v2823 = vsub.f32 %v2821, %v2822
    %v2824 = vand.u32 %v2823, 4294901760
    %2825 = vmatmul.f32.gmra.mxu0 %v2824
    %v2826 = vpop.f32.mrf.mxu0
    %v2827 = vadd.f32 0.0, %v2826
    %2828 = vdwg.mxu0
    %v2829 = vand.u32 %v213, 4294901760
    %v2830 = vsub.f32 %v213, %v2829
    %v2831 = vand.u32 %v2830, 4294901760
    %v2832 = vsub.f32 %v2830, %v2831
    %v2833 = vand.u32 %v2832, 4294901760
    %2834 = vmatpush.msra.mxu0 %v2833
    %v2835 = vand.u32 %v212, 4294901760
    %v2836 = vsub.f32 %v212, %v2835
    %v2837 = vand.u32 %v2836, 4294901760
    %v2838 = vsub.f32 %v2836, %v2837
    %v2839 = vand.u32 %v2838, 4294901760
    %2840 = vmatpush.msra.mxu0 %v2839
    %v2841 = vand.u32 %v211, 4294901760
    %v2842 = vsub.f32 %v211, %v2841
    %v2843 = vand.u32 %v2842, 4294901760
    %v2844 = vsub.f32 %v2842, %v2843
    %v2845 = vand.u32 %v2844, 4294901760
    %2846 = vmatpush.msra.mxu0 %v2845
    %v2847 = vand.u32 %v210, 4294901760
    %v2848 = vsub.f32 %v210, %v2847
    %v2849 = vand.u32 %v2848, 4294901760
    %v2850 = vsub.f32 %v2848, %v2849
    %v2851 = vand.u32 %v2850, 4294901760
    %2852 = vmatpush.msra.mxu0 %v2851
    %v2853 = vand.u32 %v209, 4294901760
    %v2854 = vsub.f32 %v209, %v2853
    %v2855 = vand.u32 %v2854, 4294901760
    %v2856 = vsub.f32 %v2854, %v2855
    %v2857 = vand.u32 %v2856, 4294901760
    %2858 = vmatpush.msra.mxu0 %v2857
    %v2859 = vand.u32 %v208, 4294901760
    %v2860 = vsub.f32 %v208, %v2859
    %v2861 = vand.u32 %v2860, 4294901760
    %v2862 = vsub.f32 %v2860, %v2861
    %v2863 = vand.u32 %v2862, 4294901760
    %2864 = vmatpush.msra.mxu0 %v2863
    %v2865 = vand.u32 %v207, 4294901760
    %v2866 = vsub.f32 %v207, %v2865
    %v2867 = vand.u32 %v2866, 4294901760
    %v2868 = vsub.f32 %v2866, %v2867
    %v2869 = vand.u32 %v2868, 4294901760
    %2870 = vmatpush.msra.mxu0 %v2869
    %v2871 = vand.u32 %v206, 4294901760
    %v2872 = vsub.f32 %v206, %v2871
    %v2873 = vand.u32 %v2872, 4294901760
    %v2874 = vsub.f32 %v2872, %v2873
    %v2875 = vand.u32 %v2874, 4294901760
    %2876 = vmatpush.msra.mxu0 %v2875
    %v2877 = vand.u32 %v205, 4294901760
    %v2878 = vsub.f32 %v205, %v2877
    %v2879 = vand.u32 %v2878, 4294901760
    %v2880 = vsub.f32 %v2878, %v2879
    %v2881 = vand.u32 %v2880, 4294901760
    %2882 = vmatpush.msra.mxu0 %v2881
    %v2883 = vand.u32 %v204, 4294901760
    %v2884 = vsub.f32 %v204, %v2883
    %v2885 = vand.u32 %v2884, 4294901760
    %v2886 = vsub.f32 %v2884, %v2885
    %v2887 = vand.u32 %v2886, 4294901760
    %2888 = vmatpush.msra.mxu0 %v2887
    %v2889 = vand.u32 %v203, 4294901760
    %v2890 = vsub.f32 %v203, %v2889
    %v2891 = vand.u32 %v2890, 4294901760
    %v2892 = vsub.f32 %v2890, %v2891
    %v2893 = vand.u32 %v2892, 4294901760
    %2894 = vmatpush.msra.mxu0 %v2893
    %v2895 = vand.u32 %v202, 4294901760
    %v2896 = vsub.f32 %v202, %v2895
    %v2897 = vand.u32 %v2896, 4294901760
    %v2898 = vsub.f32 %v2896, %v2897
    %v2899 = vand.u32 %v2898, 4294901760
    %2900 = vmatpush.msra.mxu0 %v2899
    %v2901 = vand.u32 %v201, 4294901760
    %v2902 = vsub.f32 %v201, %v2901
    %v2903 = vand.u32 %v2902, 4294901760
    %v2904 = vsub.f32 %v2902, %v2903
    %v2905 = vand.u32 %v2904, 4294901760
    %2906 = vmatpush.msra.mxu0 %v2905
    %v2907 = vand.u32 %v200, 4294901760
    %v2908 = vsub.f32 %v200, %v2907
    %v2909 = vand.u32 %v2908, 4294901760
    %v2910 = vsub.f32 %v2908, %v2909
    %v2911 = vand.u32 %v2910, 4294901760
    %2912 = vmatpush.msra.mxu0 %v2911
    %v2913 = vand.u32 %v199, 4294901760
    %v2914 = vsub.f32 %v199, %v2913
    %v2915 = vand.u32 %v2914, 4294901760
    %v2916 = vsub.f32 %v2914, %v2915
    %v2917 = vand.u32 %v2916, 4294901760
    %2918 = vmatpush.msra.mxu0 %v2917
    %v2919 = vand.u32 %v198, 4294901760
    %v2920 = vsub.f32 %v198, %v2919
    %v2921 = vand.u32 %v2920, 4294901760
    %v2922 = vsub.f32 %v2920, %v2921
    %v2923 = vand.u32 %v2922, 4294901760
    %2924 = vmatpush.msra.mxu0 %v2923
    %v2925 = vand.u32 %v2778, 4294901760
    %2926 = vmatmul.f32.gmra.mxu0 %v2925
    %v2927 = vpop.f32.mrf.mxu0
    %v2928 = vadd.f32 %v2819, %v2927
    %v2929 = vand.u32 %v2779, 4294901760
    %2930 = vmatmul.f32.gmra.mxu0 %v2929
    %v2931 = vpop.f32.mrf.mxu0
    %v2932 = vadd.f32 %v2827, %v2931
    %2933 = vdwg.mxu0
    %v2934 = vand.u32 %v213, 4294901760
    %v2935 = vsub.f32 %v213, %v2934
    %2936 = vmatpush.msra.mxu0 %v2935
    %v2937 = vand.u32 %v212, 4294901760
    %v2938 = vsub.f32 %v212, %v2937
    %2939 = vmatpush.msra.mxu0 %v2938
    %v2940 = vand.u32 %v211, 4294901760
    %v2941 = vsub.f32 %v211, %v2940
    %2942 = vmatpush.msra.mxu0 %v2941
    %v2943 = vand.u32 %v210, 4294901760
    %v2944 = vsub.f32 %v210, %v2943
    %2945 = vmatpush.msra.mxu0 %v2944
    %v2946 = vand.u32 %v209, 4294901760
    %v2947 = vsub.f32 %v209, %v2946
    %2948 = vmatpush.msra.mxu0 %v2947
    %v2949 = vand.u32 %v208, 4294901760
    %v2950 = vsub.f32 %v208, %v2949
    %2951 = vmatpush.msra.mxu0 %v2950
    %v2952 = vand.u32 %v207, 4294901760
    %v2953 = vsub.f32 %v207, %v2952
    %2954 = vmatpush.msra.mxu0 %v2953
    %v2955 = vand.u32 %v206, 4294901760
    %v2956 = vsub.f32 %v206, %v2955
    %2957 = vmatpush.msra.mxu0 %v2956
    %v2958 = vand.u32 %v205, 4294901760
    %v2959 = vsub.f32 %v205, %v2958
    %2960 = vmatpush.msra.mxu0 %v2959
    %v2961 = vand.u32 %v204, 4294901760
    %v2962 = vsub.f32 %v204, %v2961
    %2963 = vmatpush.msra.mxu0 %v2962
    %v2964 = vand.u32 %v203, 4294901760
    %v2965 = vsub.f32 %v203, %v2964
    %2966 = vmatpush.msra.mxu0 %v2965
    %v2967 = vand.u32 %v202, 4294901760
    %v2968 = vsub.f32 %v202, %v2967
    %2969 = vmatpush.msra.mxu0 %v2968
    %v2970 = vand.u32 %v201, 4294901760
    %v2971 = vsub.f32 %v201, %v2970
    %2972 = vmatpush.msra.mxu0 %v2971
    %v2973 = vand.u32 %v200, 4294901760
    %v2974 = vsub.f32 %v200, %v2973
    %2975 = vmatpush.msra.mxu0 %v2974
    %v2976 = vand.u32 %v199, 4294901760
    %v2977 = vsub.f32 %v199, %v2976
    %2978 = vmatpush.msra.mxu0 %v2977
    %v2979 = vand.u32 %v198, 4294901760
    %v2980 = vsub.f32 %v198, %v2979
    %2981 = vmatpush.msra.mxu0 %v2980
    %v2982 = vand.u32 %v2778, 4294901760
    %v2983 = vsub.f32 %v2778, %v2982
    %2984 = vmatmul.f32.gmra.mxu0 %v2983
    %v2985 = vpop.f32.mrf.mxu0
    %v2986 = vadd.f32 %v2928, %v2985
    %v2987 = vand.u32 %v2779, 4294901760
    %v2988 = vsub.f32 %v2779, %v2987
    %2989 = vmatmul.f32.gmra.mxu0 %v2988
    %v2990 = vpop.f32.mrf.mxu0
    %v2991 = vadd.f32 %v2932, %v2990
    %2992 = vdwg.mxu0
    %v2993 = vand.u32 %v213, 4294901760
    %2994 = vmatpush.msra.mxu0 %v2993
    %v2995 = vand.u32 %v212, 4294901760
    %2996 = vmatpush.msra.mxu0 %v2995
    %v2997 = vand.u32 %v211, 4294901760
    %2998 = vmatpush.msra.mxu0 %v2997
    %v2999 = vand.u32 %v210, 4294901760
    %3000 = vmatpush.msra.mxu0 %v2999
    %v3001 = vand.u32 %v209, 4294901760
    %3002 = vmatpush.msra.mxu0 %v3001
    %v3003 = vand.u32 %v208, 4294901760
    %3004 = vmatpush.msra.mxu0 %v3003
    %v3005 = vand.u32 %v207, 4294901760
    %3006 = vmatpush.msra.mxu0 %v3005
    %v3007 = vand.u32 %v206, 4294901760
    %3008 = vmatpush.msra.mxu0 %v3007
    %v3009 = vand.u32 %v205, 4294901760
    %3010 = vmatpush.msra.mxu0 %v3009
    %v3011 = vand.u32 %v204, 4294901760
    %3012 = vmatpush.msra.mxu0 %v3011
    %v3013 = vand.u32 %v203, 4294901760
    %3014 = vmatpush.msra.mxu0 %v3013
    %v3015 = vand.u32 %v202, 4294901760
    %3016 = vmatpush.msra.mxu0 %v3015
    %v3017 = vand.u32 %v201, 4294901760
    %3018 = vmatpush.msra.mxu0 %v3017
    %v3019 = vand.u32 %v200, 4294901760
    %3020 = vmatpush.msra.mxu0 %v3019
    %v3021 = vand.u32 %v199, 4294901760
    %3022 = vmatpush.msra.mxu0 %v3021
    %v3023 = vand.u32 %v198, 4294901760
    %3024 = vmatpush.msra.mxu0 %v3023
    %v3025 = vand.u32 %v2778, 4294901760
    %v3026 = vsub.f32 %v2778, %v3025
    %v3027 = vand.u32 %v3026, 4294901760
    %3028 = vmatmul.f32.gmra.mxu0 %v3027
    %v3029 = vpop.f32.mrf.mxu0
    %v3030 = vadd.f32 %v2986, %v3029
    %v3031 = vand.u32 %v2779, 4294901760
    %v3032 = vsub.f32 %v2779, %v3031
    %v3033 = vand.u32 %v3032, 4294901760
    %3034 = vmatmul.f32.gmra.mxu0 %v3033
    %v3035 = vpop.f32.mrf.mxu0
    %v3036 = vadd.f32 %v2991, %v3035
    %3037 = vdwg.mxu0
    %v3038 = vand.u32 %v213, 4294901760
    %v3039 = vsub.f32 %v213, %v3038
    %v3040 = vand.u32 %v3039, 4294901760
    %3041 = vmatpush.msra.mxu0 %v3040
    %v3042 = vand.u32 %v212, 4294901760
    %v3043 = vsub.f32 %v212, %v3042
    %v3044 = vand.u32 %v3043, 4294901760
    %3045 = vmatpush.msra.mxu0 %v3044
    %v3046 = vand.u32 %v211, 4294901760
    %v3047 = vsub.f32 %v211, %v3046
    %v3048 = vand.u32 %v3047, 4294901760
    %3049 = vmatpush.msra.mxu0 %v3048
    %v3050 = vand.u32 %v210, 4294901760
    %v3051 = vsub.f32 %v210, %v3050
    %v3052 = vand.u32 %v3051, 4294901760
    %3053 = vmatpush.msra.mxu0 %v3052
    %v3054 = vand.u32 %v209, 4294901760
    %v3055 = vsub.f32 %v209, %v3054
    %v3056 = vand.u32 %v3055, 4294901760
    %3057 = vmatpush.msra.mxu0 %v3056
    %v3058 = vand.u32 %v208, 4294901760
    %v3059 = vsub.f32 %v208, %v3058
    %v3060 = vand.u32 %v3059, 4294901760
    %3061 = vmatpush.msra.mxu0 %v3060
    %v3062 = vand.u32 %v207, 4294901760
    %v3063 = vsub.f32 %v207, %v3062
    %v3064 = vand.u32 %v3063, 4294901760
    %3065 = vmatpush.msra.mxu0 %v3064
    %v3066 = vand.u32 %v206, 4294901760
    %v3067 = vsub.f32 %v206, %v3066
    %v3068 = vand.u32 %v3067, 4294901760
    %3069 = vmatpush.msra.mxu0 %v3068
    %v3070 = vand.u32 %v205, 4294901760
    %v3071 = vsub.f32 %v205, %v3070
    %v3072 = vand.u32 %v3071, 4294901760
    %3073 = vmatpush.msra.mxu0 %v3072
    %v3074 = vand.u32 %v204, 4294901760
    %v3075 = vsub.f32 %v204, %v3074
    %v3076 = vand.u32 %v3075, 4294901760
    %3077 = vmatpush.msra.mxu0 %v3076
    %v3078 = vand.u32 %v203, 4294901760
    %v3079 = vsub.f32 %v203, %v3078
    %v3080 = vand.u32 %v3079, 4294901760
    %3081 = vmatpush.msra.mxu0 %v3080
    %v3082 = vand.u32 %v202, 4294901760
    %v3083 = vsub.f32 %v202, %v3082
    %v3084 = vand.u32 %v3083, 4294901760
    %3085 = vmatpush.msra.mxu0 %v3084
    %v3086 = vand.u32 %v201, 4294901760
    %v3087 = vsub.f32 %v201, %v3086
    %v3088 = vand.u32 %v3087, 4294901760
    %3089 = vmatpush.msra.mxu0 %v3088
    %v3090 = vand.u32 %v200, 4294901760
    %v3091 = vsub.f32 %v200, %v3090
    %v3092 = vand.u32 %v3091, 4294901760
    %3093 = vmatpush.msra.mxu0 %v3092
    %v3094 = vand.u32 %v199, 4294901760
    %v3095 = vsub.f32 %v199, %v3094
    %v3096 = vand.u32 %v3095, 4294901760
    %3097 = vmatpush.msra.mxu0 %v3096
    %v3098 = vand.u32 %v198, 4294901760
    %v3099 = vsub.f32 %v198, %v3098
    %v3100 = vand.u32 %v3099, 4294901760
    %3101 = vmatpush.msra.mxu0 %v3100
    %v3102 = vand.u32 %v2778, 4294901760
    %3103 = vmatmul.f32.gmra.mxu0 %v3102
    %v3104 = vpop.f32.mrf.mxu0
    %v3105 = vadd.f32 %v3030, %v3104
    %v3106 = vand.u32 %v2779, 4294901760
    %3107 = vmatmul.f32.gmra.mxu0 %v3106
    %v3108 = vpop.f32.mrf.mxu0
    %v3109 = vadd.f32 %v3036, %v3108
    %3110 = vdwg.mxu0
    %v3111 = vand.u32 %v213, 4294901760
    %3112 = vmatpush.msra.mxu0 %v3111
    %v3113 = vand.u32 %v212, 4294901760
    %3114 = vmatpush.msra.mxu0 %v3113
    %v3115 = vand.u32 %v211, 4294901760
    %3116 = vmatpush.msra.mxu0 %v3115
    %v3117 = vand.u32 %v210, 4294901760
    %3118 = vmatpush.msra.mxu0 %v3117
    %v3119 = vand.u32 %v209, 4294901760
    %3120 = vmatpush.msra.mxu0 %v3119
    %v3121 = vand.u32 %v208, 4294901760
    %3122 = vmatpush.msra.mxu0 %v3121
    %v3123 = vand.u32 %v207, 4294901760
    %3124 = vmatpush.msra.mxu0 %v3123
    %v3125 = vand.u32 %v206, 4294901760
    %3126 = vmatpush.msra.mxu0 %v3125
    %v3127 = vand.u32 %v205, 4294901760
    %3128 = vmatpush.msra.mxu0 %v3127
    %v3129 = vand.u32 %v204, 4294901760
    %3130 = vmatpush.msra.mxu0 %v3129
    %v3131 = vand.u32 %v203, 4294901760
    %3132 = vmatpush.msra.mxu0 %v3131
    %v3133 = vand.u32 %v202, 4294901760
    %3134 = vmatpush.msra.mxu0 %v3133
    %v3135 = vand.u32 %v201, 4294901760
    %3136 = vmatpush.msra.mxu0 %v3135
    %v3137 = vand.u32 %v200, 4294901760
    %3138 = vmatpush.msra.mxu0 %v3137
    %v3139 = vand.u32 %v199, 4294901760
    %3140 = vmatpush.msra.mxu0 %v3139
    %v3141 = vand.u32 %v198, 4294901760
    %3142 = vmatpush.msra.mxu0 %v3141
    %v3143 = vand.u32 %v2778, 4294901760
    %3144 = vmatmul.f32.gmra.mxu0 %v3143
    %v3145 = vpop.f32.mrf.mxu0
    %v3146 = vadd.f32 %v3105, %v3145
    %v3147 = vand.u32 %v2779, 4294901760
    %3148 = vmatmul.f32.gmra.mxu0 %v3147
    %v3149 = vpop.f32.mrf.mxu0
    %v3150 = vadd.f32 %v3109, %v3149
    %3151 = vdwg.mxu0
    %v3152 = vadd.f32 %v1678, %v3146
    %v3153 = vadd.f32 %v1682, %v3150
    %3154 = vst [vmem:[#allocation7] sm:$0x3] %v2597
    %3155 = vst.msk [vmem:[%s12] sm:$0xff] %vm229, %v1732
    %3156 = vst.msk [vmem:[%s12 + $0x8] sm:$0xff] %vm229, %v1733
    %3159 = vrot.lane.b32.xlu0 %v3152, 4
    %v3160 = vpop.permute.xlu0 %3159
    %3161 = vrot.lane.b32.xlu0 %v3153, 4
    %v3162 = vpop.permute.xlu0 %3161
    %vm3165 = vcmask 64544
    %3166 = vst.msk [vmem:[%s12] sm:$0xff] %vm3165, %v3160
    %3167 = vst.msk [vmem:[%s12 + $0x8] sm:$0xff] %vm3165, %v3162
    // Predicated region
    $region54: #{tpu_custom_call.1} parent=1 // pred_check
      _
    $region55: #{tpu_custom_call.1} parent=1 // pred_check_branch
      %3169 = sbr.rel (0) target = $region57
    $region56: #{tpu_custom_call.1} parent=1 // pred_region
      %3171 = vsyncadd [#allocation4], 0
      %s3173 = sshll.u32 [#allocation7], 4
      %s3174 = int_to_ptr.vmem [resolvable:$true] %s3173
      %s3175 = sshll.u32 %s11, 4
      %s3176 = int_to_ptr.hbm [resolvable:$true] %s3175
      %3178 = dma.vmem_to_hbm [thread:$0]  %s3174, 32, %s3176, [#allocation4]
    $region57: #{tpu_custom_call.1} parent=1 // pred_fallthru
      _
    // Predicated region
    $region58: #{tpu_custom_call.1} parent=1 // pred_check
      _
    $region59: #{tpu_custom_call.1} parent=1 // pred_check_branch
      %3180 = sbr.rel (0) target = $region61
    $region60: #{tpu_custom_call.1} parent=1 // pred_region
      _
    $region61: #{tpu_custom_call.1} parent=1 // pred_fallthru
      _
    // Predicated region
    $region62: #{tpu_custom_call.1} parent=1 // pred_check
      _
    $region63: #{tpu_custom_call.1} parent=1 // pred_check_branch
      %3182 = sbr.rel (0) target = $region65
    $region64: #{tpu_custom_call.1} parent=1 // pred_region
      %3184 = dma.done [#allocation4], 32
    $region65: #{tpu_custom_call.1} parent=1 // pred_fallthru
      _
    // Predicated region
    $region66: #{tpu_custom_call.1} parent=1 // pred_check
      _
    $region67: #{tpu_custom_call.1} parent=1 // pred_check_branch
      %3186 = sbr.rel (0) target = $region69
    $region68: #{tpu_custom_call.1} parent=1 // pred_region
      _
    $region69: #{tpu_custom_call.1} parent=1 // pred_fallthru
      _
    %3187 = vsyncpa [#allocation3], 1
    %3188 = vsyncpa [#allocation6], 1
    %3189 = vsyncpa [#allocation4], 1

</llo_original>
